<compile_context>
chip_gen: v7x
topology: tpu7x:2x2x1
jax: 0.10.0
libtpu: 0.0.40
codegen_flags: <defaults>
</compile_context>

<pallas_src>
import functools

import numpy as np
import jax
import jax.numpy as jnp
from jax import lax
from jax.experimental import pallas as pl
from jax.experimental.pallas import tpu as pltpu  # noqa: F401  (kept for TPU-specific tuning hooks)

_EPS = 1e-5


# ---------------------------------------------------------------------------
# In-kernel helpers (operands are VMEM-resident values)
# ---------------------------------------------------------------------------
def _mm(w, x):
    """MXU matmul, bf16 operands, f32 accumulation."""
    return jnp.dot(w.astype(jnp.bfloat16), x.astype(jnp.bfloat16),
                   preferred_element_type=jnp.float32)


def _bn(x, g, b):
    """BatchNorm1d (training-mode batch statistics) over the folded N*T lanes."""
    mean = jnp.mean(x, axis=-1, keepdims=True)
    var = jnp.mean(jnp.square(x - mean), axis=-1, keepdims=True)
    return (x - mean) * lax.rsqrt(var + _EPS) * g + b


def _im2col(x, N, T, K, reflect=False):
    """x: (C, N*T) folded.  Returns the (C*K, N*T) shifted stack for a 'same'
    width-K 1-D conv (zero or reflection padding); batch segments independent."""
    C = x.shape[0]
    pad = (K - 1) // 2
    segs = []
    for n in range(N):
        s = x[:, n * T:(n + 1) * T]
        if pad > 0:
            if reflect:
                left = [s[:, j:j + 1] for j in range(pad, 0, -1)]
                right = [s[:, T - 1 - j:T - j] for j in range(1, pad + 1)]
                sp = jnp.concatenate(left + [s] + right, axis=-1)
            else:
                z = jnp.zeros((C, pad), x.dtype)
                sp = jnp.concatenate([z, s, z], axis=-1)
        else:
            sp = s
        segs.append(sp)
    rows = [jnp.concatenate([sp[:, k:k + T] for sp in segs], axis=-1)
            for k in range(K)]
    return rows[0] if K == 1 else jnp.concatenate(rows, axis=0)


def _conv(x, w_col, b, N, T, K, relu_in=False, reflect=False):
    """'same' 1-D conv as ONE im2col MXU matmul: (Cout, Cin*K) @ (Cin*K, N*T)."""
    if relu_in:
        x = jnp.maximum(x, 0.0)
    return _mm(w_col, _im2col(x, N, T, K, reflect=reflect)) + b


def _mean_filter5(x, N, T):
    """ReflectionPad1d(2) + AvgPool1d(kernel=5, stride=1), per batch segment."""
    K, pad = 5, 2
    segs = []
    for n in range(N):
        s = x[:, n * T:(n + 1) * T]
        left = [s[:, j:j + 1] for j in range(pad, 0, -1)]
        right = [s[:, T - 1 - j:T - j] for j in range(1, pad + 1)]
        sp = jnp.concatenate(left + [s] + right, axis=-1)
        acc = sp[:, 0:T]
        for k in range(1, K):
            acc = acc + sp[:, k:k + T]
        segs.append(acc * (1.0 / K))
    return jnp.concatenate(segs, axis=-1)


# ---------------------------------------------------------------------------
# Fused Pallas kernels (one call per network block, whole batch per call)
# ---------------------------------------------------------------------------
def _res_block_kernel(*refs, N, T, use_norm, has_pe):
    it = iter(refs)
    x_ref = next(it)
    pe_ref = next(it) if has_pe else None
    if use_norm:
        g1, b1n, g2, b2n = next(it), next(it), next(it), next(it)
    w1, b1, w2, b2, ws, bs = (next(it), next(it), next(it),
                              next(it), next(it), next(it))
    o_ref = next(it)

    x = x_ref[...]
    if has_pe:
        x = x + pe_ref[...]
    h = _bn(x, g1[...], b1n[...]) if use_norm else x
    h = _conv(h, w1[...], b1[...], N, T, 3, relu_in=True)
    if use_norm:
        h = _bn(h, g2[...], b2n[...])
    h = _conv(h, w2[...], b2[...], N, T, 3, relu_in=True)
    sc = _mm(ws[...], x) + bs[...]                     # 1x1 shortcut conv
    o_ref[...] = (h + sc).astype(o_ref.dtype)


def _decoder_block_kernel(*refs, N, T, has_pe):
    it = iter(refs)
    x_ref = next(it)
    pe_ref = next(it) if has_pe else None
    u_ref = next(it)
    g1, b1n, g2, b2n = next(it), next(it), next(it), next(it)
    w1, b1, w2, b2, ws, bs = (next(it), next(it), next(it),
                              next(it), next(it), next(it))
    o_ref = next(it)

    x = x_ref[...]
    if has_pe:
        x = x + pe_ref[...]
    h = _bn(x, g1[...], b1n[...])
    h = _conv(h, w1[...], b1[...], N, T, 3, relu_in=True)
    h = _bn(h, g2[...], b2n[...])
    h = jnp.maximum(h, 0.0)
    # TODO(synk): original ResBlockDecoder uses ConvTranspose1d(stride=2);
    # approximated (as before) by nearest x2 upsample + same-conv, with the
    # upsample expressed as one MXU matmul against a 0/1 permutation matrix.
    U = u_ref[...]                                              # (N*T, N*2T)
    hu = jnp.dot(h, U, preferred_element_type=jnp.float32)
    y = _conv(hu, w2[...], b2[...], N, 2 * T, 3)
    xu = jnp.dot(x, U, preferred_element_type=jnp.float32)
    sc = _conv(xu, ws[...], bs[...], N, 2 * T, 3)
    o_ref[...] = (y + sc).astype(o_ref.dtype)


def _output_kernel(x_ref, w_ref, b_ref, o_ref, *, N, T, with_filter):
    """ReLU -> ReflectionPad1d(1) -> conv3 -> tanh [-> mean_filter], fused."""
    y = _conv(x_ref[...], w_ref[...], b_ref[...], N, T, 3,
              relu_in=True, reflect=True)
    y = jnp.tanh(y)
    if with_filter:
        y = _mean_filter5(y, N, T)
    o_ref[...] = y.astype(o_ref.dtype)


def _attn_kernel(x_ref, y_ref, wq_ref, wk_ref, wv_ref, g_ref, o_ref, *, N, Tx, Ty):
    """SAGAN-style cross attention: q from x, k/v from y, gamma-residual to x."""
    x = x_ref[...]
    y = y_ref[...]
    q = _mm(wq_ref[...], x)            # (Cq, N*Tx)
    k = _mm(wk_ref[...], y)            # (Cq, N*Ty)
    v = _mm(wv_ref[...], y)            # (C , N*Ty)
    gamma = g_ref[...]                 # (1, 1)
    segs = []
    for n in range(N):
        qs = q[:, n * Tx:(n + 1) * Tx]
        ks = k[:, n * Ty:(n + 1) * Ty]
        vs = v[:, n * Ty:(n + 1) * Ty]
        e = lax.dot_general(qs.astype(jnp.bfloat16), ks.astype(jnp.bfloat16),
                            (((0,), (0,)), ((), ())),
                            preferred_element_type=jnp.float32)   # (Tx, Ty)
        e = e - jnp.max(e, axis=-1, keepdims=True)
        p = jnp.exp(e)
        p = p * pl.reciprocal(jnp.sum(p, axis=-1, keepdims=True), approx=True)
        o = lax.dot_general(vs.astype(jnp.bfloat16), p.astype(jnp.bfloat16),
                            (((1,), (1,)), ((), ())),
                            preferred_element_type=jnp.float32)   # (C, Tx)
        segs.append(gamma * o + x[:, n * Tx:(n + 1) * Tx])
    o_ref[...] = jnp.concatenate(segs, axis=-1).astype(o_ref.dtype)


# ---------------------------------------------------------------------------
# Pallas wrappers (full-array blocks in VMEM, no grid)
# ---------------------------------------------------------------------------
def _call(kernel, out_shape, *inputs):
    return pl.pallas_call(
        kernel, out_shape=jax.ShapeDtypeStruct(out_shape, jnp.float32))(*inputs)


def res_block_fused(p, x, N, T, pe=None, use_norm=False):
    cout = p["w2"].shape[0]
    args = [x]
    if pe is not None:
        args.append(pe)
    if use_norm:
        args += [p["bn1_g"], p["bn1_b"], p["bn2_g"], p["bn2_b"]]
    args += [p["w1"], p["b1"], p["w2"], p["b2"], p["ws"], p["bs"]]
    kern = functools.partial(_res_block_kernel, N=N, T=T,
                             use_norm=use_norm, has_pe=pe is not None)
    return _call(kern, (cout, N * T), *args)


def decoder_block_fused(p, x, N, T, pe=None):
    cout = p["w2"].shape[0]
    U = _upsample_matrix(N, T)
    args = [x]
    if pe is not None:
        args.append(pe)
    args += [U, p["bn1_g"], p["bn1_b"], p["bn2_g"], p["bn2_b"],
             p["w1"], p["b1"], p["w2"], p["b2"], p["ws"], p["bs"]]
    kern = functools.partial(_decoder_block_kernel, N=N, T=T, has_pe=pe is not None)
    return _call(kern, (cout, N * 2 * T), *args)


def output_fused(p, x, N, T, out_nc, with_filter=False):
    cpad = p["w"].shape[0]             # output rows padded to a full sublane tile
    kern = functools.partial(_output_kernel, N=N, T=T, with_filter=with_filter)
    y = _call(kern, (cpad, N * T), x, p["w"], p["b"])
    return y[:out_nc]


def attn_fused(p, x, y, N, Tx, Ty):
    c = x.shape[0]
    kern = functools.partial(_attn_kernel, N=N, Tx=Tx, Ty=Ty)
    return _call(kern, (c, N * Tx), x, y, p["wq"], p["wk"], p["wv"], p["gamma"])


# ---------------------------------------------------------------------------
# Layout / constant helpers (plain JAX, outside the kernels)
# ---------------------------------------------------------------------------
def _upsample_matrix(N, T):
    """(N*T, N*2T) 0/1 matrix performing nearest x2 time-upsample per batch
    segment; applied on the MXU inside the decoder kernel."""
    U = np.zeros((N * T, N * 2 * T), np.float32)
    for n in range(N):
        for t in range(T):
            U[n * T + t, n * 2 * T + 2 * t] = 1.0
            U[n * T + t, n * 2 * T + 2 * t + 1] = 1.0
    return jnp.asarray(U)


def fold(x):
    """(N, C, T) -> batch-folded, lane-dense (C, N*T)."""
    N, C, T = x.shape
    return jnp.transpose(x, (1, 0, 2)).reshape(C, N * T)


def unfold(x, N, T):
    """(C, N*T) -> (N, C, T)."""
    C = x.shape[0]
    return jnp.transpose(x.reshape(C, N, T), (1, 0, 2))


def sinusoidal_pe(c, t, dtype=jnp.float32):
    # TODO(synk): exact positional-encoding used by the original ResBlock is not
    # available; standard sinusoidal encoding over channels x time is used.
    pos = jnp.arange(t, dtype=jnp.float32)[None, :]
    idx = jnp.arange(c, dtype=jnp.float32)[:, None]
    div = jnp.power(10000.0, (2.0 * jnp.floor(idx / 2.0)) / float(c))
    angle = pos / div
    pe = jnp.where((jnp.arange(c)[:, None] % 2) == 0, jnp.sin(angle), jnp.cos(angle))
    return pe.astype(dtype)


def folded_pe(c, t, n):
    return jnp.tile(sinusoidal_pe(c, t), (1, n))


# ---------------------------------------------------------------------------
# Parameter init (deterministic, synthetic, kernel-ready im2col layouts)
# ---------------------------------------------------------------------------
CFG = dict(output_nc=3, ngf=8, z_nc=16, img_f=64, L=1, layers=3,
           output_scale=1, use_attn=True)


def _conv_col_init(key, cout, cin, k, pad_rows_to=None):
    kw, kb = jax.random.split(key)
    scale = (1.0 / (cin * k)) ** 0.5
    w = scale * jax.random.normal(kw, (cout, cin, k), jnp.float32)
    b = 0.01 * jax.random.normal(kb, (cout,), jnp.float32)
    w_col = jnp.transpose(w, (0, 2, 1)).reshape(cout, k * cin)   # im2col layout
    b = b.reshape(cout, 1)
    if pad_rows_to is not None and pad_rows_to > cout:
        w_col = jnp.pad(w_col, ((0, pad_rows_to - cout), (0, 0)))
        b = jnp.pad(b, ((0, pad_rows_to - cout), (0, 0)))
    return w_col, b


def _init_resblock(key, cin, chid, cout, norm):
    k1, k2, k3 = jax.random.split(key, 3)
    p = {}
    p["w1"], p["b1"] = _conv_col_init(k1, chid, cin, 3)
    p["w2"], p["b2"] = _conv_col_init(k2, cout, chid, 3)
    p["ws"], p["bs"] = _conv_col_init(k3, cout, cin, 1)
    if norm:
        p["bn1_g"] = jnp.ones((cin, 1), jnp.float32)
        p["bn1_b"] = jnp.zeros((cin, 1), jnp.float32)
        p["bn2_g"] = jnp.ones((chid, 1), jnp.float32)
        p["bn2_b"] = jnp.zeros((chid, 1), jnp.float32)
    return p


def _init_decoder(key, cin, chid, cout):
    k1, k2, k3 = jax.random.split(key, 3)
    p = {}
    p["w1"], p["b1"] = _conv_col_init(k1, chid, cin, 3)
    p["w2"], p["b2"] = _conv_col_init(k2, cout, chid, 3)
    p["ws"], p["bs"] = _conv_col_init(k3, cout, cin, 3)
    p["bn1_g"] = jnp.ones((cin, 1), jnp.float32)
    p["bn1_b"] = jnp.zeros((cin, 1), jnp.float32)
    p["bn2_g"] = jnp.ones((chid, 1), jnp.float32)
    p["bn2_b"] = jnp.zeros((chid, 1), jnp.float32)
    return p


def _init_attn(key, c):
    kq, kk, kv = jax.random.split(key, 3)
    cq = max(c // 8, 1)
    s = (1.0 / c) ** 0.5
    return {"wq": s * jax.random.normal(kq, (cq, c), jnp.float32),
            "wk": s * jax.random.normal(kk, (cq, c), jnp.float32),
            "wv": s * jax.random.normal(kv, (c, c), jnp.float32),
            "gamma": jnp.full((1, 1), 0.1, jnp.float32)}


def _init_output(key, cin, cout):
    # Cout (=3) zero-padded up to 8 sublanes for unmasked stores; the wrapper
    # slices the valid rows back out.
    w, b = _conv_col_init(key, cout, cin, 3, pad_rows_to=8)
    return {"w": w, "b": b}


def init_params(key):
    cfg = CFG
    ngf, img_f, layers, onc = cfg["ngf"], cfg["img_f"], cfg["layers"], cfg["output_nc"]
    mult = min(2 ** (layers - 1), img_f // ngf)
    ch = ngf * mult
    keys = iter(jax.random.split(key, 64))
    p = {}
    # TODO(synk): spectral norm (use_spect=True) only re-normalizes weights;
    # omitted for this synthetic parameterization.
    p["generator"] = _init_resblock(next(keys), cfg["z_nc"], ch, ch, norm=True)
    p["attn_g"] = _init_attn(next(keys), ch)
    p["outconv_g"] = _init_output(next(keys), ch, onc)
    for i in range(cfg["L"]):
        p[f"generator{i}"] = _init_resblock(next(keys), ch, ch, ch, norm=False)
    cin = ch + onc          # decoder in-channels follow the actual forward concats
    for i in range(layers):
        mult_cur = int(max(min(2 ** (layers - i - 2), img_f // ngf), 1))
        cout = ngf * mult_cur
        p[f"decoder{i}"] = _init_decoder(next(keys), cin, cout, cout)
        if i > layers - cfg["output_scale"] - 1:
            p[f"out{i}"] = _init_output(next(keys), cout, onc)
        if i < layers - 1 and cfg["use_attn"]:
            p[f"attn{i}"] = _init_attn(next(keys), cout)
        cin = cout + onc if i > layers - cfg["output_scale"] - 1 else cout
    return p


# ---------------------------------------------------------------------------
# ResGenerator1.forward
# ---------------------------------------------------------------------------
def res_generator1_forward(params, z, f_m, f_e, if_pos_enc=True):
    cfg = CFG
    layers, output_scale, L = cfg["layers"], cfg["output_scale"], cfg["L"]
    onc = cfg["output_nc"]
    N, _, T = z.shape
    results = []

    x = fold(z)
    fm = fold(f_m)
    fe = [fold(t) for t in f_e]
    fe_T = [t.shape[-1] for t in f_e]

    pe = folded_pe(x.shape[0], T, N) if if_pos_enc else None
    f = res_block_fused(params["generator"], x, N, T, pe=pe, use_norm=True)
    for i in range(L):
        f = res_block_fused(params[f"generator{i}"], f, N, T, use_norm=False)

    out = f + fm
    output = output_fused(params["outconv_g"], out, N, T, onc)
    results.append(unfold(output, N, T))
    if cfg["use_attn"]:
        out1 = attn_fused(params["attn_g"], out, fe[-1], N, T, fe_T[-1])
        out = jnp.concatenate([out1, output], axis=0)
    else:
        out = jnp.concatenate([out, output], axis=0)

    attn = 0
    for i in range(layers):
        pe = folded_pe(out.shape[0], T, N) if if_pos_enc else None
        out = decoder_block_fused(params[f"decoder{i}"], out, N, T, pe=pe)
        T = T * 2
        use_attn_i = (i < layers - 1) and cfg["use_attn"]
        if use_attn_i:
            out1 = attn_fused(params[f"attn{i}"], out, fe[-2 - i], N, T, fe_T[-2 - i])
        if i > layers - output_scale - 1:
            output = output_fused(params[f"out{i}"], out, N, T, onc,
                                  with_filter=(i == layers - 1))
            results.append(unfold(output, N, T))
            if use_attn_i:
                out = jnp.concatenate([out1, output], axis=0)
            else:
                out = jnp.concatenate([out, output], axis=0)
    return results, attn


# ---------------------------------------------------------------------------
if __name__ == "__main__":
    key = jax.random.PRNGKey(0)
    kp, kz, km, k1, k2, k3 = jax.random.split(key, 6)

    params = init_params(kp)

    N, T = 2, 8
    ch = CFG["ngf"] * min(2 ** (CFG["layers"] - 1), CFG["img_f"] // CFG["ngf"])  # 32
    z = jax.random.normal(kz, (N, CFG["z_nc"], T), jnp.float32)
    f_m = jax.random.normal(km, (N, ch, T), jnp.float32)
    # encoder features (coarsest last): f_e[-1] matches the bottleneck resolution,
    # f_e[-2-i] matches decoder i's output (channels / time) for attention layers.
    f_e = [jax.random.normal(k1, (N, 8, 32), jnp.float32),
           jax.random.normal(k2, (N, 16, 16), jnp.float32),
           jax.random.normal(k3, (N, 32, 8), jnp.float32)]

    fwd = jax.jit(functools.partial(res_generator1_forward, if_pos_enc=True))
    results, attn = fwd(params, z, f_m, f_e)
    results = [jax.block_until_ready(r) for r in results]

    assert results[0].shape == (N, CFG["output_nc"], T)
    assert results[-1].shape == (N, CFG["output_nc"], T * 2 ** CFG["layers"])
    assert int(attn) == 0
    print("KERNEL_OK")
</pallas_src>

<mosaic_0001>
module attributes {stable_mosaic.version = 11 : i64} {
  func.func @_res_block_kernel(%arg0: memref<16x16xf32, #tpu.memory_space<vmem>>, %arg1: memref<16x16xf32, #tpu.memory_space<vmem>>, %arg2: memref<16x1xf32, #tpu.memory_space<vmem>>, %arg3: memref<16x1xf32, #tpu.memory_space<vmem>>, %arg4: memref<32x1xf32, #tpu.memory_space<vmem>>, %arg5: memref<32x1xf32, #tpu.memory_space<vmem>>, %arg6: memref<32x48xf32, #tpu.memory_space<vmem>>, %arg7: memref<32x1xf32, #tpu.memory_space<vmem>>, %arg8: memref<32x96xf32, #tpu.memory_space<vmem>>, %arg9: memref<32x1xf32, #tpu.memory_space<vmem>>, %arg10: memref<32x16xf32, #tpu.memory_space<vmem>>, %arg11: memref<32x1xf32, #tpu.memory_space<vmem>>, %arg12: memref<32x16xf32, #tpu.memory_space<vmem>>) attributes {dimension_semantics = [], scalar_prefetch = 0 : i64, scratch_operands = 0 : i64, tpu.core_type = #tpu.core_type<tc>} {
    %c0 = arith.constant 0 : index
    %c0_0 = arith.constant 0 : index
    %0 = vector.load %arg0[%c0, %c0_0] : memref<16x16xf32, #tpu.memory_space<vmem>>, vector<16x16xf32>
    %c0_1 = arith.constant 0 : index
    %c0_2 = arith.constant 0 : index
    %1 = vector.load %arg1[%c0_1, %c0_2] : memref<16x16xf32, #tpu.memory_space<vmem>>, vector<16x16xf32>
    %2 = arith.addf %0, %1 : vector<16x16xf32>
    %c0_3 = arith.constant 0 : index
    %c0_4 = arith.constant 0 : index
    %3 = vector.load %arg2[%c0_3, %c0_4] : memref<16x1xf32, #tpu.memory_space<vmem>>, vector<16x1xf32>
    %c0_5 = arith.constant 0 : index
    %c0_6 = arith.constant 0 : index
    %4 = vector.load %arg3[%c0_5, %c0_6] : memref<16x1xf32, #tpu.memory_space<vmem>>, vector<16x1xf32>
    %cst = arith.constant dense<0.000000e+00> : vector<16xf32>
    %5 = vector.multi_reduction <add>, %2, %cst [1] : vector<16x16xf32> to vector<16xf32>
    %6 = vector.shape_cast %5 : vector<16xf32> to vector<16x1xf32>
    %cst_7 = arith.constant 1.600000e+01 : f32
    %7 = vector.broadcast %cst_7 : f32 to vector<16x1xf32>
    %8 = arith.divf %6, %7 : vector<16x1xf32>
    %9 = vector.broadcast %8 : vector<16x1xf32> to vector<16x16xf32>
    %10 = arith.subf %2, %9 : vector<16x16xf32>
    %11 = arith.mulf %10, %10 : vector<16x16xf32>
    %cst_8 = arith.constant dense<0.000000e+00> : vector<16xf32>
    %12 = vector.multi_reduction <add>, %11, %cst_8 [1] : vector<16x16xf32> to vector<16xf32>
    %13 = vector.shape_cast %12 : vector<16xf32> to vector<16x1xf32>
    %cst_9 = arith.constant 1.600000e+01 : f32
    %14 = vector.broadcast %cst_9 : f32 to vector<16x1xf32>
    %15 = arith.divf %13, %14 : vector<16x1xf32>
    %16 = vector.broadcast %8 : vector<16x1xf32> to vector<16x16xf32>
    %17 = arith.subf %2, %16 : vector<16x16xf32>
    %cst_10 = arith.constant 9.99999974E-6 : f32
    %18 = vector.broadcast %cst_10 : f32 to vector<16x1xf32>
    %19 = arith.addf %15, %18 : vector<16x1xf32>
    %20 = math.rsqrt %19 : vector<16x1xf32>
    %21 = vector.broadcast %20 : vector<16x1xf32> to vector<16x16xf32>
    %22 = arith.mulf %17, %21 : vector<16x16xf32>
    %23 = vector.broadcast %3 : vector<16x1xf32> to vector<16x16xf32>
    %24 = arith.mulf %22, %23 : vector<16x16xf32>
    %25 = vector.broadcast %4 : vector<16x1xf32> to vector<16x16xf32>
    %26 = arith.addf %24, %25 : vector<16x16xf32>
    %c0_11 = arith.constant 0 : index
    %c0_12 = arith.constant 0 : index
    %27 = vector.load %arg6[%c0_11, %c0_12] : memref<32x48xf32, #tpu.memory_space<vmem>>, vector<32x48xf32>
    %c0_13 = arith.constant 0 : index
    %c0_14 = arith.constant 0 : index
    %28 = vector.load %arg7[%c0_13, %c0_14] : memref<32x1xf32, #tpu.memory_space<vmem>>, vector<32x1xf32>
    %cst_15 = arith.constant 0.000000e+00 : f32
    %29 = vector.broadcast %cst_15 : f32 to vector<16x16xf32>
    %30 = arith.maximumf %26, %29 : vector<16x16xf32>
    %31 = vector.extract_strided_slice %30 {offsets = [0, 0], sizes = [16, 8], strides = [1, 1]} : vector<16x16xf32> to vector<16x8xf32>
    %cst_16 = arith.constant 0.000000e+00 : f32
    %32 = vector.broadcast %cst_16 : f32 to vector<16x1xf32>
    %33 = tpu.concatenate %32, %31, %32 in 1 : vector<16x1xf32>, vector<16x8xf32>, vector<16x1xf32> -> vector<16x10xf32>
    %34 = vector.extract_strided_slice %30 {offsets = [0, 8], sizes = [16, 8], strides = [1, 1]} : vector<16x16xf32> to vector<16x8xf32>
    %cst_17 = arith.constant 0.000000e+00 : f32
    %35 = vector.broadcast %cst_17 : f32 to vector<16x1xf32>
    %36 = tpu.concatenate %35, %34, %35 in 1 : vector<16x1xf32>, vector<16x8xf32>, vector<16x1xf32> -> vector<16x10xf32>
    %37 = vector.extract_strided_slice %33 {offsets = [0, 0], sizes = [16, 8], strides = [1, 1]} : vector<16x10xf32> to vector<16x8xf32>
    %38 = vector.extract_strided_slice %36 {offsets = [0, 0], sizes = [16, 8], strides = [1, 1]} : vector<16x10xf32> to vector<16x8xf32>
    %39 = tpu.concatenate %37, %38 in 1 : vector<16x8xf32>, vector<16x8xf32> -> vector<16x16xf32>
    %40 = vector.extract_strided_slice %33 {offsets = [0, 1], sizes = [16, 8], strides = [1, 1]} : vector<16x10xf32> to vector<16x8xf32>
    %41 = vector.extract_strided_slice %36 {offsets = [0, 1], sizes = [16, 8], strides = [1, 1]} : vector<16x10xf32> to vector<16x8xf32>
    %42 = tpu.concatenate %40, %41 in 1 : vector<16x8xf32>, vector<16x8xf32> -> vector<16x16xf32>
    %43 = vector.extract_strided_slice %33 {offsets = [0, 2], sizes = [16, 8], strides = [1, 1]} : vector<16x10xf32> to vector<16x8xf32>
    %44 = vector.extract_strided_slice %36 {offsets = [0, 2], sizes = [16, 8], strides = [1, 1]} : vector<16x10xf32> to vector<16x8xf32>
    %45 = tpu.concatenate %43, %44 in 1 : vector<16x8xf32>, vector<16x8xf32> -> vector<16x16xf32>
    %46 = tpu.concatenate %39, %42, %45 in 0 : vector<16x16xf32>, vector<16x16xf32>, vector<16x16xf32> -> vector<48x16xf32>
    %47 = arith.truncf %27 : vector<32x48xf32> to vector<32x48xbf16>
    %48 = arith.truncf %46 : vector<48x16xf32> to vector<48x16xbf16>
    %cst_18 = arith.constant dense<0.000000e+00> : vector<32x16xf32>
    %49 = tpu.matmul %47, %48, %cst_18 {dimension_numbers = #tpu.dot_dimension_numbers<[1], [0], [0], [1], [0, 0, 1, 1], [], []>} : vector<32x48xbf16>, vector<48x16xbf16>, vector<32x16xf32> -> vector<32x16xf32>
    %50 = vector.broadcast %28 : vector<32x1xf32> to vector<32x16xf32>
    %51 = arith.addf %49, %50 : vector<32x16xf32>
    %c0_19 = arith.constant 0 : index
    %c0_20 = arith.constant 0 : index
    %52 = vector.load %arg4[%c0_19, %c0_20] : memref<32x1xf32, #tpu.memory_space<vmem>>, vector<32x1xf32>
    %c0_21 = arith.constant 0 : index
    %c0_22 = arith.constant 0 : index
    %53 = vector.load %arg5[%c0_21, %c0_22] : memref<32x1xf32, #tpu.memory_space<vmem>>, vector<32x1xf32>
    %cst_23 = arith.constant dense<0.000000e+00> : vector<32xf32>
    %54 = vector.multi_reduction <add>, %51, %cst_23 [1] : vector<32x16xf32> to vector<32xf32>
    %55 = vector.shape_cast %54 : vector<32xf32> to vector<32x1xf32>
    %cst_24 = arith.constant 1.600000e+01 : f32
    %56 = vector.broadcast %cst_24 : f32 to vector<32x1xf32>
    %57 = arith.divf %55, %56 : vector<32x1xf32>
    %58 = vector.broadcast %57 : vector<32x1xf32> to vector<32x16xf32>
    %59 = arith.subf %51, %58 : vector<32x16xf32>
    %60 = arith.mulf %59, %59 : vector<32x16xf32>
    %cst_25 = arith.constant dense<0.000000e+00> : vector<32xf32>
    %61 = vector.multi_reduction <add>, %60, %cst_25 [1] : vector<32x16xf32> to vector<32xf32>
    %62 = vector.shape_cast %61 : vector<32xf32> to vector<32x1xf32>
    %cst_26 = arith.constant 1.600000e+01 : f32
    %63 = vector.broadcast %cst_26 : f32 to vector<32x1xf32>
    %64 = arith.divf %62, %63 : vector<32x1xf32>
    %65 = vector.broadcast %57 : vector<32x1xf32> to vector<32x16xf32>
    %66 = arith.subf %51, %65 : vector<32x16xf32>
    %cst_27 = arith.constant 9.99999974E-6 : f32
    %67 = vector.broadcast %cst_27 : f32 to vector<32x1xf32>
    %68 = arith.addf %64, %67 : vector<32x1xf32>
    %69 = math.rsqrt %68 : vector<32x1xf32>
    %70 = vector.broadcast %69 : vector<32x1xf32> to vector<32x16xf32>
    %71 = arith.mulf %66, %70 : vector<32x16xf32>
    %72 = vector.broadcast %52 : vector<32x1xf32> to vector<32x16xf32>
    %73 = arith.mulf %71, %72 : vector<32x16xf32>
    %74 = vector.broadcast %53 : vector<32x1xf32> to vector<32x16xf32>
    %75 = arith.addf %73, %74 : vector<32x16xf32>
    %c0_28 = arith.constant 0 : index
    %c0_29 = arith.constant 0 : index
    %76 = vector.load %arg8[%c0_28, %c0_29] : memref<32x96xf32, #tpu.memory_space<vmem>>, vector<32x96xf32>
    %c0_30 = arith.constant 0 : index
    %c0_31 = arith.constant 0 : index
    %77 = vector.load %arg9[%c0_30, %c0_31] : memref<32x1xf32, #tpu.memory_space<vmem>>, vector<32x1xf32>
    %cst_32 = arith.constant 0.000000e+00 : f32
    %78 = vector.broadcast %cst_32 : f32 to vector<32x16xf32>
    %79 = arith.maximumf %75, %78 : vector<32x16xf32>
    %80 = vector.extract_strided_slice %79 {offsets = [0, 0], sizes = [32, 8], strides = [1, 1]} : vector<32x16xf32> to vector<32x8xf32>
    %cst_33 = arith.constant 0.000000e+00 : f32
    %81 = vector.broadcast %cst_33 : f32 to vector<32x1xf32>
    %82 = tpu.concatenate %81, %80, %81 in 1 : vector<32x1xf32>, vector<32x8xf32>, vector<32x1xf32> -> vector<32x10xf32>
    %83 = vector.extract_strided_slice %79 {offsets = [0, 8], sizes = [32, 8], strides = [1, 1]} : vector<32x16xf32> to vector<32x8xf32>
    %cst_34 = arith.constant 0.000000e+00 : f32
    %84 = vector.broadcast %cst_34 : f32 to vector<32x1xf32>
    %85 = tpu.concatenate %84, %83, %84 in 1 : vector<32x1xf32>, vector<32x8xf32>, vector<32x1xf32> -> vector<32x10xf32>
    %86 = vector.extract_strided_slice %82 {offsets = [0, 0], sizes = [32, 8], strides = [1, 1]} : vector<32x10xf32> to vector<32x8xf32>
    %87 = vector.extract_strided_slice %85 {offsets = [0, 0], sizes = [32, 8], strides = [1, 1]} : vector<32x10xf32> to vector<32x8xf32>
    %88 = tpu.concatenate %86, %87 in 1 : vector<32x8xf32>, vector<32x8xf32> -> vector<32x16xf32>
    %89 = vector.extract_strided_slice %82 {offsets = [0, 1], sizes = [32, 8], strides = [1, 1]} : vector<32x10xf32> to vector<32x8xf32>
    %90 = vector.extract_strided_slice %85 {offsets = [0, 1], sizes = [32, 8], strides = [1, 1]} : vector<32x10xf32> to vector<32x8xf32>
    %91 = tpu.concatenate %89, %90 in 1 : vector<32x8xf32>, vector<32x8xf32> -> vector<32x16xf32>
    %92 = vector.extract_strided_slice %82 {offsets = [0, 2], sizes = [32, 8], strides = [1, 1]} : vector<32x10xf32> to vector<32x8xf32>
    %93 = vector.extract_strided_slice %85 {offsets = [0, 2], sizes = [32, 8], strides = [1, 1]} : vector<32x10xf32> to vector<32x8xf32>
    %94 = tpu.concatenate %92, %93 in 1 : vector<32x8xf32>, vector<32x8xf32> -> vector<32x16xf32>
    %95 = tpu.concatenate %88, %91, %94 in 0 : vector<32x16xf32>, vector<32x16xf32>, vector<32x16xf32> -> vector<96x16xf32>
    %96 = arith.truncf %76 : vector<32x96xf32> to vector<32x96xbf16>
    %97 = arith.truncf %95 : vector<96x16xf32> to vector<96x16xbf16>
    %cst_35 = arith.constant dense<0.000000e+00> : vector<32x16xf32>
    %98 = tpu.matmul %96, %97, %cst_35 {dimension_numbers = #tpu.dot_dimension_numbers<[1], [0], [0], [1], [0, 0, 1, 1], [], []>} : vector<32x96xbf16>, vector<96x16xbf16>, vector<32x16xf32> -> vector<32x16xf32>
    %99 = vector.broadcast %77 : vector<32x1xf32> to vector<32x16xf32>
    %100 = arith.addf %98, %99 : vector<32x16xf32>
    %c0_36 = arith.constant 0 : index
    %c0_37 = arith.constant 0 : index
    %101 = vector.load %arg10[%c0_36, %c0_37] : memref<32x16xf32, #tpu.memory_space<vmem>>, vector<32x16xf32>
    %102 = arith.truncf %101 : vector<32x16xf32> to vector<32x16xbf16>
    %103 = arith.truncf %2 : vector<16x16xf32> to vector<16x16xbf16>
    %cst_38 = arith.constant dense<0.000000e+00> : vector<32x16xf32>
    %104 = tpu.matmul %102, %103, %cst_38 {dimension_numbers = #tpu.dot_dimension_numbers<[1], [0], [0], [1], [0, 0, 1, 1], [], []>} : vector<32x16xbf16>, vector<16x16xbf16>, vector<32x16xf32> -> vector<32x16xf32>
    %c0_39 = arith.constant 0 : index
    %c0_40 = arith.constant 0 : index
    %105 = vector.load %arg11[%c0_39, %c0_40] : memref<32x1xf32, #tpu.memory_space<vmem>>, vector<32x1xf32>
    %106 = vector.broadcast %105 : vector<32x1xf32> to vector<32x16xf32>
    %107 = arith.addf %104, %106 : vector<32x16xf32>
    %108 = arith.addf %100, %107 : vector<32x16xf32>
    %c0_41 = arith.constant 0 : index
    %c0_42 = arith.constant 0 : index
    %109 = vector.load %arg12[%c0_41, %c0_42] : memref<32x16xf32, #tpu.memory_space<vmem>>, vector<32x16xf32>
    tpu.vector_store %arg12[%c0_41, %c0_42], %108 {strides = array<i32>} : memref<32x16xf32, #tpu.memory_space<vmem>>, vector<32x16xf32>,
    return
  }
}

module attributes {stable_mosaic.version = 11 : i64} {
  func.func @_output_kernel(%arg0: memref<32x16xf32, #tpu.memory_space<vmem>>, %arg1: memref<8x96xf32, #tpu.memory_space<vmem>>, %arg2: memref<8x1xf32, #tpu.memory_space<vmem>>, %arg3: memref<8x16xf32, #tpu.memory_space<vmem>>) attributes {dimension_semantics = [], scalar_prefetch = 0 : i64, scratch_operands = 0 : i64, tpu.core_type = #tpu.core_type<tc>} {
    %c0 = arith.constant 0 : index
    %c0_0 = arith.constant 0 : index
    %0 = vector.load %arg0[%c0, %c0_0] : memref<32x16xf32, #tpu.memory_space<vmem>>, vector<32x16xf32>
    %c0_1 = arith.constant 0 : index
    %c0_2 = arith.constant 0 : index
    %1 = vector.load %arg1[%c0_1, %c0_2] : memref<8x96xf32, #tpu.memory_space<vmem>>, vector<8x96xf32>
    %c0_3 = arith.constant 0 : index
    %c0_4 = arith.constant 0 : index
    %2 = vector.load %arg2[%c0_3, %c0_4] : memref<8x1xf32, #tpu.memory_space<vmem>>, vector<8x1xf32>
    %cst = arith.constant 0.000000e+00 : f32
    %3 = vector.broadcast %cst : f32 to vector<32x16xf32>
    %4 = arith.maximumf %0, %3 : vector<32x16xf32>
    %5 = vector.extract_strided_slice %4 {offsets = [0, 0], sizes = [32, 8], strides = [1, 1]} : vector<32x16xf32> to vector<32x8xf32>
    %6 = vector.extract_strided_slice %5 {offsets = [0, 1], sizes = [32, 1], strides = [1, 1]} : vector<32x8xf32> to vector<32x1xf32>
    %7 = vector.extract_strided_slice %5 {offsets = [0, 6], sizes = [32, 1], strides = [1, 1]} : vector<32x8xf32> to vector<32x1xf32>
    %8 = tpu.concatenate %6, %5, %7 in 1 : vector<32x1xf32>, vector<32x8xf32>, vector<32x1xf32> -> vector<32x10xf32>
    %9 = vector.extract_strided_slice %4 {offsets = [0, 8], sizes = [32, 8], strides = [1, 1]} : vector<32x16xf32> to vector<32x8xf32>
    %10 = vector.extract_strided_slice %9 {offsets = [0, 1], sizes = [32, 1], strides = [1, 1]} : vector<32x8xf32> to vector<32x1xf32>
    %11 = vector.extract_strided_slice %9 {offsets = [0, 6], sizes = [32, 1], strides = [1, 1]} : vector<32x8xf32> to vector<32x1xf32>
    %12 = tpu.concatenate %10, %9, %11 in 1 : vector<32x1xf32>, vector<32x8xf32>, vector<32x1xf32> -> vector<32x10xf32>
    %13 = vector.extract_strided_slice %8 {offsets = [0, 0], sizes = [32, 8], strides = [1, 1]} : vector<32x10xf32> to vector<32x8xf32>
    %14 = vector.extract_strided_slice %12 {offsets = [0, 0], sizes = [32, 8], strides = [1, 1]} : vector<32x10xf32> to vector<32x8xf32>
    %15 = tpu.concatenate %13, %14 in 1 : vector<32x8xf32>, vector<32x8xf32> -> vector<32x16xf32>
    %16 = vector.extract_strided_slice %8 {offsets = [0, 1], sizes = [32, 8], strides = [1, 1]} : vector<32x10xf32> to vector<32x8xf32>
    %17 = vector.extract_strided_slice %12 {offsets = [0, 1], sizes = [32, 8], strides = [1, 1]} : vector<32x10xf32> to vector<32x8xf32>
    %18 = tpu.concatenate %16, %17 in 1 : vector<32x8xf32>, vector<32x8xf32> -> vector<32x16xf32>
    %19 = vector.extract_strided_slice %8 {offsets = [0, 2], sizes = [32, 8], strides = [1, 1]} : vector<32x10xf32> to vector<32x8xf32>
    %20 = vector.extract_strided_slice %12 {offsets = [0, 2], sizes = [32, 8], strides = [1, 1]} : vector<32x10xf32> to vector<32x8xf32>
    %21 = tpu.concatenate %19, %20 in 1 : vector<32x8xf32>, vector<32x8xf32> -> vector<32x16xf32>
    %22 = tpu.concatenate %15, %18, %21 in 0 : vector<32x16xf32>, vector<32x16xf32>, vector<32x16xf32> -> vector<96x16xf32>
    %23 = arith.truncf %1 : vector<8x96xf32> to vector<8x96xbf16>
    %24 = arith.truncf %22 : vector<96x16xf32> to vector<96x16xbf16>
    %cst_5 = arith.constant dense<0.000000e+00> : vector<8x16xf32>
    %25 = tpu.matmul %23, %24, %cst_5 {dimension_numbers = #tpu.dot_dimension_numbers<[1], [0], [0], [1], [0, 0, 1, 1], [], []>} : vector<8x96xbf16>, vector<96x16xbf16>, vector<8x16xf32> -> vector<8x16xf32>
    %26 = vector.broadcast %2 : vector<8x1xf32> to vector<8x16xf32>
    %27 = arith.addf %25, %26 : vector<8x16xf32>
    %28 = math.tanh %27 : vector<8x16xf32>
    %c0_6 = arith.constant 0 : index
    %c0_7 = arith.constant 0 : index
    %29 = vector.load %arg3[%c0_6, %c0_7] : memref<8x16xf32, #tpu.memory_space<vmem>>, vector<8x16xf32>
    tpu.vector_store %arg3[%c0_6, %c0_7], %28 {strides = array<i32>} : memref<8x16xf32, #tpu.memory_space<vmem>>, vector<8x16xf32>,
    return
  }
}

module attributes {stable_mosaic.version = 11 : i64} {
  func.func @_res_block_kernel(%arg0: memref<32x16xf32, #tpu.memory_space<vmem>>, %arg1: memref<32x96xf32, #tpu.memory_space<vmem>>, %arg2: memref<32x1xf32, #tpu.memory_space<vmem>>, %arg3: memref<32x96xf32, #tpu.memory_space<vmem>>, %arg4: memref<32x1xf32, #tpu.memory_space<vmem>>, %arg5: memref<32x32xf32, #tpu.memory_space<vmem>>, %arg6: memref<32x1xf32, #tpu.memory_space<vmem>>, %arg7: memref<32x16xf32, #tpu.memory_space<vmem>>) attributes {dimension_semantics = [], scalar_prefetch = 0 : i64, scratch_operands = 0 : i64, tpu.core_type = #tpu.core_type<tc>} {
    %c0 = arith.constant 0 : index
    %c0_0 = arith.constant 0 : index
    %0 = vector.load %arg0[%c0, %c0_0] : memref<32x16xf32, #tpu.memory_space<vmem>>, vector<32x16xf32>
    %c0_1 = arith.constant 0 : index
    %c0_2 = arith.constant 0 : index
    %1 = vector.load %arg1[%c0_1, %c0_2] : memref<32x96xf32, #tpu.memory_space<vmem>>, vector<32x96xf32>
    %c0_3 = arith.constant 0 : index
    %c0_4 = arith.constant 0 : index
    %2 = vector.load %arg2[%c0_3, %c0_4] : memref<32x1xf32, #tpu.memory_space<vmem>>, vector<32x1xf32>
    %cst = arith.constant 0.000000e+00 : f32
    %3 = vector.broadcast %cst : f32 to vector<32x16xf32>
    %4 = arith.maximumf %0, %3 : vector<32x16xf32>
    %5 = vector.extract_strided_slice %4 {offsets = [0, 0], sizes = [32, 8], strides = [1, 1]} : vector<32x16xf32> to vector<32x8xf32>
    %cst_5 = arith.constant 0.000000e+00 : f32
    %6 = vector.broadcast %cst_5 : f32 to vector<32x1xf32>
    %7 = tpu.concatenate %6, %5, %6 in 1 : vector<32x1xf32>, vector<32x8xf32>, vector<32x1xf32> -> vector<32x10xf32>
    %8 = vector.extract_strided_slice %4 {offsets = [0, 8], sizes = [32, 8], strides = [1, 1]} : vector<32x16xf32> to vector<32x8xf32>
    %cst_6 = arith.constant 0.000000e+00 : f32
    %9 = vector.broadcast %cst_6 : f32 to vector<32x1xf32>
    %10 = tpu.concatenate %9, %8, %9 in 1 : vector<32x1xf32>, vector<32x8xf32>, vector<32x1xf32> -> vector<32x10xf32>
    %11 = vector.extract_strided_slice %7 {offsets = [0, 0], sizes = [32, 8], strides = [1, 1]} : vector<32x10xf32> to vector<32x8xf32>
    %12 = vector.extract_strided_slice %10 {offsets = [0, 0], sizes = [32, 8], strides = [1, 1]} : vector<32x10xf32> to vector<32x8xf32>
    %13 = tpu.concatenate %11, %12 in 1 : vector<32x8xf32>, vector<32x8xf32> -> vector<32x16xf32>
    %14 = vector.extract_strided_slice %7 {offsets = [0, 1], sizes = [32, 8], strides = [1, 1]} : vector<32x10xf32> to vector<32x8xf32>
    %15 = vector.extract_strided_slice %10 {offsets = [0, 1], sizes = [32, 8], strides = [1, 1]} : vector<32x10xf32> to vector<32x8xf32>
    %16 = tpu.concatenate %14, %15 in 1 : vector<32x8xf32>, vector<32x8xf32> -> vector<32x16xf32>
    %17 = vector.extract_strided_slice %7 {offsets = [0, 2], sizes = [32, 8], strides = [1, 1]} : vector<32x10xf32> to vector<32x8xf32>
    %18 = vector.extract_strided_slice %10 {offsets = [0, 2], sizes = [32, 8], strides = [1, 1]} : vector<32x10xf32> to vector<32x8xf32>
    %19 = tpu.concatenate %17, %18 in 1 : vector<32x8xf32>, vector<32x8xf32> -> vector<32x16xf32>
    %20 = tpu.concatenate %13, %16, %19 in 0 : vector<32x16xf32>, vector<32x16xf32>, vector<32x16xf32> -> vector<96x16xf32>
    %21 = arith.truncf %1 : vector<32x96xf32> to vector<32x96xbf16>
    %22 = arith.truncf %20 : vector<96x16xf32> to vector<96x16xbf16>
    %cst_7 = arith.constant dense<0.000000e+00> : vector<32x16xf32>
    %23 = tpu.matmul %21, %22, %cst_7 {dimension_numbers = #tpu.dot_dimension_numbers<[1], [0], [0], [1], [0, 0, 1, 1], [], []>} : vector<32x96xbf16>, vector<96x16xbf16>, vector<32x16xf32> -> vector<32x16xf32>
    %24 = vector.broadcast %2 : vector<32x1xf32> to vector<32x16xf32>
    %25 = arith.addf %23, %24 : vector<32x16xf32>
    %c0_8 = arith.constant 0 : index
    %c0_9 = arith.constant 0 : index
    %26 = vector.load %arg3[%c0_8, %c0_9] : memref<32x96xf32, #tpu.memory_space<vmem>>, vector<32x96xf32>
    %c0_10 = arith.constant 0 : index
    %c0_11 = arith.constant 0 : index
    %27 = vector.load %arg4[%c0_10, %c0_11] : memref<32x1xf32, #tpu.memory_space<vmem>>, vector<32x1xf32>
    %cst_12 = arith.constant 0.000000e+00 : f32
    %28 = vector.broadcast %cst_12 : f32 to vector<32x16xf32>
    %29 = arith.maximumf %25, %28 : vector<32x16xf32>
    %30 = vector.extract_strided_slice %29 {offsets = [0, 0], sizes = [32, 8], strides = [1, 1]} : vector<32x16xf32> to vector<32x8xf32>
    %cst_13 = arith.constant 0.000000e+00 : f32
    %31 = vector.broadcast %cst_13 : f32 to vector<32x1xf32>
    %32 = tpu.concatenate %31, %30, %31 in 1 : vector<32x1xf32>, vector<32x8xf32>, vector<32x1xf32> -> vector<32x10xf32>
    %33 = vector.extract_strided_slice %29 {offsets = [0, 8], sizes = [32, 8], strides = [1, 1]} : vector<32x16xf32> to vector<32x8xf32>
    %cst_14 = arith.constant 0.000000e+00 : f32
    %34 = vector.broadcast %cst_14 : f32 to vector<32x1xf32>
    %35 = tpu.concatenate %34, %33, %34 in 1 : vector<32x1xf32>, vector<32x8xf32>, vector<32x1xf32> -> vector<32x10xf32>
    %36 = vector.extract_strided_slice %32 {offsets = [0, 0], sizes = [32, 8], strides = [1, 1]} : vector<32x10xf32> to vector<32x8xf32>
    %37 = vector.extract_strided_slice %35 {offsets = [0, 0], sizes = [32, 8], strides = [1, 1]} : vector<32x10xf32> to vector<32x8xf32>
    %38 = tpu.concatenate %36, %37 in 1 : vector<32x8xf32>, vector<32x8xf32> -> vector<32x16xf32>
    %39 = vector.extract_strided_slice %32 {offsets = [0, 1], sizes = [32, 8], strides = [1, 1]} : vector<32x10xf32> to vector<32x8xf32>
    %40 = vector.extract_strided_slice %35 {offsets = [0, 1], sizes = [32, 8], strides = [1, 1]} : vector<32x10xf32> to vector<32x8xf32>
    %41 = tpu.concatenate %39, %40 in 1 : vector<32x8xf32>, vector<32x8xf32> -> vector<32x16xf32>
    %42 = vector.extract_strided_slice %32 {offsets = [0, 2], sizes = [32, 8], strides = [1, 1]} : vector<32x10xf32> to vector<32x8xf32>
    %43 = vector.extract_strided_slice %35 {offsets = [0, 2], sizes = [32, 8], strides = [1, 1]} : vector<32x10xf32> to vector<32x8xf32>
    %44 = tpu.concatenate %42, %43 in 1 : vector<32x8xf32>, vector<32x8xf32> -> vector<32x16xf32>
    %45 = tpu.concatenate %38, %41, %44 in 0 : vector<32x16xf32>, vector<32x16xf32>, vector<32x16xf32> -> vector<96x16xf32>
    %46 = arith.truncf %26 : vector<32x96xf32> to vector<32x96xbf16>
    %47 = arith.truncf %45 : vector<96x16xf32> to vector<96x16xbf16>
    %cst_15 = arith.constant dense<0.000000e+00> : vector<32x16xf32>
    %48 = tpu.matmul %46, %47, %cst_15 {dimension_numbers = #tpu.dot_dimension_numbers<[1], [0], [0], [1], [0, 0, 1, 1], [], []>} : vector<32x96xbf16>, vector<96x16xbf16>, vector<32x16xf32> -> vector<32x16xf32>
    %49 = vector.broadcast %27 : vector<32x1xf32> to vector<32x16xf32>
    %50 = arith.addf %48, %49 : vector<32x16xf32>
    %c0_16 = arith.constant 0 : index
    %c0_17 = arith.constant 0 : index
    %51 = vector.load %arg5[%c0_16, %c0_17] : memref<32x32xf32, #tpu.memory_space<vmem>>, vector<32x32xf32>
    %52 = arith.truncf %51 : vector<32x32xf32> to vector<32x32xbf16>
    %53 = arith.truncf %0 : vector<32x16xf32> to vector<32x16xbf16>
    %cst_18 = arith.constant dense<0.000000e+00> : vector<32x16xf32>
    %54 = tpu.matmul %52, %53, %cst_18 {dimension_numbers = #tpu.dot_dimension_numbers<[1], [0], [0], [1], [0, 0, 1, 1], [], []>} : vector<32x32xbf16>, vector<32x16xbf16>, vector<32x16xf32> -> vector<32x16xf32>
    %c0_19 = arith.constant 0 : index
    %c0_20 = arith.constant 0 : index
    %55 = vector.load %arg6[%c0_19, %c0_20] : memref<32x1xf32, #tpu.memory_space<vmem>>, vector<32x1xf32>
    %56 = vector.broadcast %55 : vector<32x1xf32> to vector<32x16xf32>
    %57 = arith.addf %54, %56 : vector<32x16xf32>
    %58 = arith.addf %50, %57 : vector<32x16xf32>
    %c0_21 = arith.constant 0 : index
    %c0_22 = arith.constant 0 : index
    %59 = vector.load %arg7[%c0_21, %c0_22] : memref<32x16xf32, #tpu.memory_space<vmem>>, vector<32x16xf32>
    tpu.vector_store %arg7[%c0_21, %c0_22], %58 {strides = array<i32>} : memref<32x16xf32, #tpu.memory_space<vmem>>, vector<32x16xf32>,
    return
  }
}

module attributes {stable_mosaic.version = 11 : i64} {
  func.func @_attn_kernel(%arg0: memref<32x16xf32, #tpu.memory_space<vmem>>, %arg1: memref<32x16xf32, #tpu.memory_space<vmem>>, %arg2: memref<4x32xf32, #tpu.memory_space<vmem>>, %arg3: memref<4x32xf32, #tpu.memory_space<vmem>>, %arg4: memref<32x32xf32, #tpu.memory_space<vmem>>, %arg5: memref<1x1xf32, #tpu.memory_space<vmem>>, %arg6: memref<32x16xf32, #tpu.memory_space<vmem>>) attributes {dimension_semantics = [], scalar_prefetch = 0 : i64, scratch_operands = 0 : i64, tpu.core_type = #tpu.core_type<tc>} {
    %c0 = arith.constant 0 : index
    %c0_0 = arith.constant 0 : index
    %0 = vector.load %arg0[%c0, %c0_0] : memref<32x16xf32, #tpu.memory_space<vmem>>, vector<32x16xf32>
    %c0_1 = arith.constant 0 : index
    %c0_2 = arith.constant 0 : index
    %1 = vector.load %arg1[%c0_1, %c0_2] : memref<32x16xf32, #tpu.memory_space<vmem>>, vector<32x16xf32>
    %c0_3 = arith.constant 0 : index
    %c0_4 = arith.constant 0 : index
    %2 = vector.load %arg2[%c0_3, %c0_4] : memref<4x32xf32, #tpu.memory_space<vmem>>, vector<4x32xf32>
    %3 = arith.truncf %2 : vector<4x32xf32> to vector<4x32xbf16>
    %4 = arith.truncf %0 : vector<32x16xf32> to vector<32x16xbf16>
    %cst = arith.constant dense<0.000000e+00> : vector<4x16xf32>
    %5 = tpu.matmul %3, %4, %cst {dimension_numbers = #tpu.dot_dimension_numbers<[1], [0], [0], [1], [0, 0, 1, 1], [], []>} : vector<4x32xbf16>, vector<32x16xbf16>, vector<4x16xf32> -> vector<4x16xf32>
    %c0_5 = arith.constant 0 : index
    %c0_6 = arith.constant 0 : index
    %6 = vector.load %arg3[%c0_5, %c0_6] : memref<4x32xf32, #tpu.memory_space<vmem>>, vector<4x32xf32>
    %7 = arith.truncf %6 : vector<4x32xf32> to vector<4x32xbf16>
    %8 = arith.truncf %1 : vector<32x16xf32> to vector<32x16xbf16>
    %cst_7 = arith.constant dense<0.000000e+00> : vector<4x16xf32>
    %9 = tpu.matmul %7, %8, %cst_7 {dimension_numbers = #tpu.dot_dimension_numbers<[1], [0], [0], [1], [0, 0, 1, 1], [], []>} : vector<4x32xbf16>, vector<32x16xbf16>, vector<4x16xf32> -> vector<4x16xf32>
    %c0_8 = arith.constant 0 : index
    %c0_9 = arith.constant 0 : index
    %10 = vector.load %arg4[%c0_8, %c0_9] : memref<32x32xf32, #tpu.memory_space<vmem>>, vector<32x32xf32>
    %11 = arith.truncf %10 : vector<32x32xf32> to vector<32x32xbf16>
    %12 = arith.truncf %1 : vector<32x16xf32> to vector<32x16xbf16>
    %cst_10 = arith.constant dense<0.000000e+00> : vector<32x16xf32>
    %13 = tpu.matmul %11, %12, %cst_10 {dimension_numbers = #tpu.dot_dimension_numbers<[1], [0], [0], [1], [0, 0, 1, 1], [], []>} : vector<32x32xbf16>, vector<32x16xbf16>, vector<32x16xf32> -> vector<32x16xf32>
    %c0_11 = arith.constant 0 : index
    %c0_12 = arith.constant 0 : index
    %14 = vector.load %arg5[%c0_11, %c0_12] : memref<1x1xf32, #tpu.memory_space<vmem>>, vector<1x1xf32>
    %15 = vector.extract_strided_slice %5 {offsets = [0, 0], sizes = [4, 8], strides = [1, 1]} : vector<4x16xf32> to vector<4x8xf32>
    %16 = vector.extract_strided_slice %9 {offsets = [0, 0], sizes = [4, 8], strides = [1, 1]} : vector<4x16xf32> to vector<4x8xf32>
    %17 = vector.extract_strided_slice %13 {offsets = [0, 0], sizes = [32, 8], strides = [1, 1]} : vector<32x16xf32> to vector<32x8xf32>
    %18 = arith.truncf %15 : vector<4x8xf32> to vector<4x8xbf16>
    %19 = arith.truncf %16 : vector<4x8xf32> to vector<4x8xbf16>
    %cst_13 = arith.constant dense<0.000000e+00> : vector<8x8xf32>
    %20 = tpu.matmul %18, %19, %cst_13 {dimension_numbers = #tpu.dot_dimension_numbers<[0], [0], [1], [1], [0, 1, 1, 1], [], []>} : vector<4x8xbf16>, vector<4x8xbf16>, vector<8x8xf32> -> vector<8x8xf32>
    %cst_14 = arith.constant dense<0xFF800000> : vector<8xf32>
    %21 = vector.multi_reduction <maximumf>, %20, %cst_14 [1] : vector<8x8xf32> to vector<8xf32>
    %22 = vector.shape_cast %21 : vector<8xf32> to vector<8x1xf32>
    %23 = vector.broadcast %22 : vector<8x1xf32> to vector<8x8xf32>
    %24 = arith.subf %20, %23 : vector<8x8xf32>
    %25 = math.exp %24 : vector<8x8xf32>
    %cst_15 = arith.constant dense<0.000000e+00> : vector<8xf32>
    %26 = vector.multi_reduction <add>, %25, %cst_15 [1] : vector<8x8xf32> to vector<8xf32>
    %27 = vector.shape_cast %26 : vector<8xf32> to vector<8x1xf32>
    %28 = tpu.reciprocal %27 {approx = true} : vector<8x1xf32> -> vector<8x1xf32>
    %29 = vector.broadcast %28 : vector<8x1xf32> to vector<8x8xf32>
    %30 = arith.mulf %25, %29 : vector<8x8xf32>
    %31 = arith.truncf %17 : vector<32x8xf32> to vector<32x8xbf16>
    %32 = arith.truncf %30 : vector<8x8xf32> to vector<8x8xbf16>
    %cst_16 = arith.constant dense<0.000000e+00> : vector<32x8xf32>
    %33 = tpu.matmul %31, %32, %cst_16 {dimension_numbers = #tpu.dot_dimension_numbers<[1], [1], [0], [0], [0, 0, 1, 0], [], []>} : vector<32x8xbf16>, vector<8x8xbf16>, vector<32x8xf32> -> vector<32x8xf32>
    %34 = vector.broadcast %14 : vector<1x1xf32> to vector<32x8xf32>
    %35 = arith.mulf %34, %33 : vector<32x8xf32>
    %36 = vector.extract_strided_slice %0 {offsets = [0, 0], sizes = [32, 8], strides = [1, 1]} : vector<32x16xf32> to vector<32x8xf32>
    %37 = arith.addf %35, %36 : vector<32x8xf32>
    %38 = vector.extract_strided_slice %5 {offsets = [0, 8], sizes = [4, 8], strides = [1, 1]} : vector<4x16xf32> to vector<4x8xf32>
    %39 = vector.extract_strided_slice %9 {offsets = [0, 8], sizes = [4, 8], strides = [1, 1]} : vector<4x16xf32> to vector<4x8xf32>
    %40 = vector.extract_strided_slice %13 {offsets = [0, 8], sizes = [32, 8], strides = [1, 1]} : vector<32x16xf32> to vector<32x8xf32>
    %41 = arith.truncf %38 : vector<4x8xf32> to vector<4x8xbf16>
    %42 = arith.truncf %39 : vector<4x8xf32> to vector<4x8xbf16>
    %cst_17 = arith.constant dense<0.000000e+00> : vector<8x8xf32>
    %43 = tpu.matmul %41, %42, %cst_17 {dimension_numbers = #tpu.dot_dimension_numbers<[0], [0], [1], [1], [0, 1, 1, 1], [], []>} : vector<4x8xbf16>, vector<4x8xbf16>, vector<8x8xf32> -> vector<8x8xf32>
    %cst_18 = arith.constant dense<0xFF800000> : vector<8xf32>
    %44 = vector.multi_reduction <maximumf>, %43, %cst_18 [1] : vector<8x8xf32> to vector<8xf32>
    %45 = vector.shape_cast %44 : vector<8xf32> to vector<8x1xf32>
    %46 = vector.broadcast %45 : vector<8x1xf32> to vector<8x8xf32>
    %47 = arith.subf %43, %46 : vector<8x8xf32>
    %48 = math.exp %47 : vector<8x8xf32>
    %cst_19 = arith.constant dense<0.000000e+00> : vector<8xf32>
    %49 = vector.multi_reduction <add>, %48, %cst_19 [1] : vector<8x8xf32> to vector<8xf32>
    %50 = vector.shape_cast %49 : vector<8xf32> to vector<8x1xf32>
    %51 = tpu.reciprocal %50 {approx = true} : vector<8x1xf32> -> vector<8x1xf32>
    %52 = vector.broadcast %51 : vector<8x1xf32> to vector<8x8xf32>
    %53 = arith.mulf %48, %52 : vector<8x8xf32>
    %54 = arith.truncf %40 : vector<32x8xf32> to vector<32x8xbf16>
    %55 = arith.truncf %53 : vector<8x8xf32> to vector<8x8xbf16>
    %cst_20 = arith.constant dense<0.000000e+00> : vector<32x8xf32>
    %56 = tpu.matmul %54, %55, %cst_20 {dimension_numbers = #tpu.dot_dimension_numbers<[1], [1], [0], [0], [0, 0, 1, 0], [], []>} : vector<32x8xbf16>, vector<8x8xbf16>, vector<32x8xf32> -> vector<32x8xf32>
    %57 = vector.broadcast %14 : vector<1x1xf32> to vector<32x8xf32>
    %58 = arith.mulf %57, %56 : vector<32x8xf32>
    %59 = vector.extract_strided_slice %0 {offsets = [0, 8], sizes = [32, 8], strides = [1, 1]} : vector<32x16xf32> to vector<32x8xf32>
    %60 = arith.addf %58, %59 : vector<32x8xf32>
    %61 = tpu.concatenate %37, %60 in 1 : vector<32x8xf32>, vector<32x8xf32> -> vector<32x16xf32>
    %c0_21 = arith.constant 0 : index
    %c0_22 = arith.constant 0 : index
    %62 = vector.load %arg6[%c0_21, %c0_22] : memref<32x16xf32, #tpu.memory_space<vmem>>, vector<32x16xf32>
    tpu.vector_store %arg6[%c0_21, %c0_22], %61 {strides = array<i32>} : memref<32x16xf32, #tpu.memory_space<vmem>>, vector<32x16xf32>,
    return
  }
}

module attributes {stable_mosaic.version = 11 : i64} {
  func.func @_decoder_block_kernel(%arg0: memref<16x32xf32, #tpu.memory_space<vmem>>, %arg1: memref<16x32xf32, #tpu.memory_space<vmem>>, %arg2: memref<32x64xf32, #tpu.memory_space<vmem>>, %arg3: memref<16x1xf32, #tpu.memory_space<vmem>>, %arg4: memref<16x1xf32, #tpu.memory_space<vmem>>, %arg5: memref<8x1xf32, #tpu.memory_space<vmem>>, %arg6: memref<8x1xf32, #tpu.memory_space<vmem>>, %arg7: memref<8x48xf32, #tpu.memory_space<vmem>>, %arg8: memref<8x1xf32, #tpu.memory_space<vmem>>, %arg9: memref<8x24xf32, #tpu.memory_space<vmem>>, %arg10: memref<8x1xf32, #tpu.memory_space<vmem>>, %arg11: memref<8x48xf32, #tpu.memory_space<vmem>>, %arg12: memref<8x1xf32, #tpu.memory_space<vmem>>, %arg13: memref<8x64xf32, #tpu.memory_space<vmem>>) attributes {dimension_semantics = [], scalar_prefetch = 0 : i64, scratch_operands = 0 : i64, tpu.core_type = #tpu.core_type<tc>} {
    %c0 = arith.constant 0 : index
    %c0_0 = arith.constant 0 : index
    %0 = vector.load %arg0[%c0, %c0_0] : memref<16x32xf32, #tpu.memory_space<vmem>>, vector<16x32xf32>
    %c0_1 = arith.constant 0 : index
    %c0_2 = arith.constant 0 : index
    %1 = vector.load %arg1[%c0_1, %c0_2] : memref<16x32xf32, #tpu.memory_space<vmem>>, vector<16x32xf32>
    %2 = arith.addf %0, %1 : vector<16x32xf32>
    %c0_3 = arith.constant 0 : index
    %c0_4 = arith.constant 0 : index
    %3 = vector.load %arg3[%c0_3, %c0_4] : memref<16x1xf32, #tpu.memory_space<vmem>>, vector<16x1xf32>
    %c0_5 = arith.constant 0 : index
    %c0_6 = arith.constant 0 : index
    %4 = vector.load %arg4[%c0_5, %c0_6] : memref<16x1xf32, #tpu.memory_space<vmem>>, vector<16x1xf32>
    %cst = arith.constant dense<0.000000e+00> : vector<16xf32>
    %5 = vector.multi_reduction <add>, %2, %cst [1] : vector<16x32xf32> to vector<16xf32>
    %6 = vector.shape_cast %5 : vector<16xf32> to vector<16x1xf32>
    %cst_7 = arith.constant 3.200000e+01 : f32
    %7 = vector.broadcast %cst_7 : f32 to vector<16x1xf32>
    %8 = arith.divf %6, %7 : vector<16x1xf32>
    %9 = vector.broadcast %8 : vector<16x1xf32> to vector<16x32xf32>
    %10 = arith.subf %2, %9 : vector<16x32xf32>
    %11 = arith.mulf %10, %10 : vector<16x32xf32>
    %cst_8 = arith.constant dense<0.000000e+00> : vector<16xf32>
    %12 = vector.multi_reduction <add>, %11, %cst_8 [1] : vector<16x32xf32> to vector<16xf32>
    %13 = vector.shape_cast %12 : vector<16xf32> to vector<16x1xf32>
    %cst_9 = arith.constant 3.200000e+01 : f32
    %14 = vector.broadcast %cst_9 : f32 to vector<16x1xf32>
    %15 = arith.divf %13, %14 : vector<16x1xf32>
    %16 = vector.broadcast %8 : vector<16x1xf32> to vector<16x32xf32>
    %17 = arith.subf %2, %16 : vector<16x32xf32>
    %cst_10 = arith.constant 9.99999974E-6 : f32
    %18 = vector.broadcast %cst_10 : f32 to vector<16x1xf32>
    %19 = arith.addf %15, %18 : vector<16x1xf32>
    %20 = math.rsqrt %19 : vector<16x1xf32>
    %21 = vector.broadcast %20 : vector<16x1xf32> to vector<16x32xf32>
    %22 = arith.mulf %17, %21 : vector<16x32xf32>
    %23 = vector.broadcast %3 : vector<16x1xf32> to vector<16x32xf32>
    %24 = arith.mulf %22, %23 : vector<16x32xf32>
    %25 = vector.broadcast %4 : vector<16x1xf32> to vector<16x32xf32>
    %26 = arith.addf %24, %25 : vector<16x32xf32>
    %c0_11 = arith.constant 0 : index
    %c0_12 = arith.constant 0 : index
    %27 = vector.load %arg7[%c0_11, %c0_12] : memref<8x48xf32, #tpu.memory_space<vmem>>, vector<8x48xf32>
    %c0_13 = arith.constant 0 : index
    %c0_14 = arith.constant 0 : index
    %28 = vector.load %arg8[%c0_13, %c0_14] : memref<8x1xf32, #tpu.memory_space<vmem>>, vector<8x1xf32>
    %cst_15 = arith.constant 0.000000e+00 : f32
    %29 = vector.broadcast %cst_15 : f32 to vector<16x32xf32>
    %30 = arith.maximumf %26, %29 : vector<16x32xf32>
    %31 = vector.extract_strided_slice %30 {offsets = [0, 0], sizes = [16, 16], strides = [1, 1]} : vector<16x32xf32> to vector<16x16xf32>
    %cst_16 = arith.constant 0.000000e+00 : f32
    %32 = vector.broadcast %cst_16 : f32 to vector<16x1xf32>
    %33 = tpu.concatenate %32, %31, %32 in 1 : vector<16x1xf32>, vector<16x16xf32>, vector<16x1xf32> -> vector<16x18xf32>
    %34 = vector.extract_strided_slice %30 {offsets = [0, 16], sizes = [16, 16], strides = [1, 1]} : vector<16x32xf32> to vector<16x16xf32>
    %cst_17 = arith.constant 0.000000e+00 : f32
    %35 = vector.broadcast %cst_17 : f32 to vector<16x1xf32>
    %36 = tpu.concatenate %35, %34, %35 in 1 : vector<16x1xf32>, vector<16x16xf32>, vector<16x1xf32> -> vector<16x18xf32>
    %37 = vector.extract_strided_slice %33 {offsets = [0, 0], sizes = [16, 16], strides = [1, 1]} : vector<16x18xf32> to vector<16x16xf32>
    %38 = vector.extract_strided_slice %36 {offsets = [0, 0], sizes = [16, 16], strides = [1, 1]} : vector<16x18xf32> to vector<16x16xf32>
    %39 = tpu.concatenate %37, %38 in 1 : vector<16x16xf32>, vector<16x16xf32> -> vector<16x32xf32>
    %40 = vector.extract_strided_slice %33 {offsets = [0, 1], sizes = [16, 16], strides = [1, 1]} : vector<16x18xf32> to vector<16x16xf32>
    %41 = vector.extract_strided_slice %36 {offsets = [0, 1], sizes = [16, 16], strides = [1, 1]} : vector<16x18xf32> to vector<16x16xf32>
    %42 = tpu.concatenate %40, %41 in 1 : vector<16x16xf32>, vector<16x16xf32> -> vector<16x32xf32>
    %43 = vector.extract_strided_slice %33 {offsets = [0, 2], sizes = [16, 16], strides = [1, 1]} : vector<16x18xf32> to vector<16x16xf32>
    %44 = vector.extract_strided_slice %36 {offsets = [0, 2], sizes = [16, 16], strides = [1, 1]} : vector<16x18xf32> to vector<16x16xf32>
    %45 = tpu.concatenate %43, %44 in 1 : vector<16x16xf32>, vector<16x16xf32> -> vector<16x32xf32>
    %46 = tpu.concatenate %39, %42, %45 in 0 : vector<16x32xf32>, vector<16x32xf32>, vector<16x32xf32> -> vector<48x32xf32>
    %47 = arith.truncf %27 : vector<8x48xf32> to vector<8x48xbf16>
    %48 = arith.truncf %46 : vector<48x32xf32> to vector<48x32xbf16>
    %cst_18 = arith.constant dense<0.000000e+00> : vector<8x32xf32>
    %49 = tpu.matmul %47, %48, %cst_18 {dimension_numbers = #tpu.dot_dimension_numbers<[1], [0], [0], [1], [0, 0, 1, 1], [], []>} : vector<8x48xbf16>, vector<48x32xbf16>, vector<8x32xf32> -> vector<8x32xf32>
    %50 = vector.broadcast %28 : vector<8x1xf32> to vector<8x32xf32>
    %51 = arith.addf %49, %50 : vector<8x32xf32>
    %c0_19 = arith.constant 0 : index
    %c0_20 = arith.constant 0 : index
    %52 = vector.load %arg5[%c0_19, %c0_20] : memref<8x1xf32, #tpu.memory_space<vmem>>, vector<8x1xf32>
    %c0_21 = arith.constant 0 : index
    %c0_22 = arith.constant 0 : index
    %53 = vector.load %arg6[%c0_21, %c0_22] : memref<8x1xf32, #tpu.memory_space<vmem>>, vector<8x1xf32>
    %cst_23 = arith.constant dense<0.000000e+00> : vector<8xf32>
    %54 = vector.multi_reduction <add>, %51, %cst_23 [1] : vector<8x32xf32> to vector<8xf32>
    %55 = vector.shape_cast %54 : vector<8xf32> to vector<8x1xf32>
    %cst_24 = arith.constant 3.200000e+01 : f32
    %56 = vector.broadcast %cst_24 : f32 to vector<8x1xf32>
    %57 = arith.divf %55, %56 : vector<8x1xf32>
    %58 = vector.broadcast %57 : vector<8x1xf32> to vector<8x32xf32>
    %59 = arith.subf %51, %58 : vector<8x32xf32>
    %60 = arith.mulf %59, %59 : vector<8x32xf32>
    %cst_25 = arith.constant dense<0.000000e+00> : vector<8xf32>
    %61 = vector.multi_reduction <add>, %60, %cst_25 [1] : vector<8x32xf32> to vector<8xf32>
    %62 = vector.shape_cast %61 : vector<8xf32> to vector<8x1xf32>
    %cst_26 = arith.constant 3.200000e+01 : f32
    %63 = vector.broadcast %cst_26 : f32 to vector<8x1xf32>
    %64 = arith.divf %62, %63 : vector<8x1xf32>
    %65 = vector.broadcast %57 : vector<8x1xf32> to vector<8x32xf32>
    %66 = arith.subf %51, %65 : vector<8x32xf32>
    %cst_27 = arith.constant 9.99999974E-6 : f32
    %67 = vector.broadcast %cst_27 : f32 to vector<8x1xf32>
    %68 = arith.addf %64, %67 : vector<8x1xf32>
    %69 = math.rsqrt %68 : vector<8x1xf32>
    %70 = vector.broadcast %69 : vector<8x1xf32> to vector<8x32xf32>
    %71 = arith.mulf %66, %70 : vector<8x32xf32>
    %72 = vector.broadcast %52 : vector<8x1xf32> to vector<8x32xf32>
    %73 = arith.mulf %71, %72 : vector<8x32xf32>
    %74 = vector.broadcast %53 : vector<8x1xf32> to vector<8x32xf32>
    %75 = arith.addf %73, %74 : vector<8x32xf32>
    %cst_28 = arith.constant 0.000000e+00 : f32
    %76 = vector.broadcast %cst_28 : f32 to vector<8x32xf32>
    %77 = arith.maximumf %75, %76 : vector<8x32xf32>
    %c0_29 = arith.constant 0 : index
    %c0_30 = arith.constant 0 : index
    %78 = vector.load %arg2[%c0_29, %c0_30] : memref<32x64xf32, #tpu.memory_space<vmem>>, vector<32x64xf32>
    %cst_31 = arith.constant dense<0.000000e+00> : vector<8x64xf32>
    %79 = tpu.matmul %77, %78, %cst_31 {dimension_numbers = #tpu.dot_dimension_numbers<[1], [0], [0], [1], [0, 0, 1, 1], [], []>} : vector<8x32xf32>, vector<32x64xf32>, vector<8x64xf32> -> vector<8x64xf32>
    %c0_32 = arith.constant 0 : index
    %c0_33 = arith.constant 0 : index
    %80 = vector.load %arg9[%c0_32, %c0_33] : memref<8x24xf32, #tpu.memory_space<vmem>>, vector<8x24xf32>
    %c0_34 = arith.constant 0 : index
    %c0_35 = arith.constant 0 : index
    %81 = vector.load %arg10[%c0_34, %c0_35] : memref<8x1xf32, #tpu.memory_space<vmem>>, vector<8x1xf32>
    %82 = vector.extract_strided_slice %79 {offsets = [0, 0], sizes = [8, 32], strides = [1, 1]} : vector<8x64xf32> to vector<8x32xf32>
    %cst_36 = arith.constant 0.000000e+00 : f32
    %83 = vector.broadcast %cst_36 : f32 to vector<8x1xf32>
    %84 = tpu.concatenate %83, %82, %83 in 1 : vector<8x1xf32>, vector<8x32xf32>, vector<8x1xf32> -> vector<8x34xf32>
    %85 = vector.extract_strided_slice %79 {offsets = [0, 32], sizes = [8, 32], strides = [1, 1]} : vector<8x64xf32> to vector<8x32xf32>
    %cst_37 = arith.constant 0.000000e+00 : f32
    %86 = vector.broadcast %cst_37 : f32 to vector<8x1xf32>
    %87 = tpu.concatenate %86, %85, %86 in 1 : vector<8x1xf32>, vector<8x32xf32>, vector<8x1xf32> -> vector<8x34xf32>
    %88 = vector.extract_strided_slice %84 {offsets = [0, 0], sizes = [8, 32], strides = [1, 1]} : vector<8x34xf32> to vector<8x32xf32>
    %89 = vector.extract_strided_slice %87 {offsets = [0, 0], sizes = [8, 32], strides = [1, 1]} : vector<8x34xf32> to vector<8x32xf32>
    %90 = tpu.concatenate %88, %89 in 1 : vector<8x32xf32>, vector<8x32xf32> -> vector<8x64xf32>
    %91 = vector.extract_strided_slice %84 {offsets = [0, 1], sizes = [8, 32], strides = [1, 1]} : vector<8x34xf32> to vector<8x32xf32>
    %92 = vector.extract_strided_slice %87 {offsets = [0, 1], sizes = [8, 32], strides = [1, 1]} : vector<8x34xf32> to vector<8x32xf32>
    %93 = tpu.concatenate %91, %92 in 1 : vector<8x32xf32>, vector<8x32xf32> -> vector<8x64xf32>
    %94 = vector.extract_strided_slice %84 {offsets = [0, 2], sizes = [8, 32], strides = [1, 1]} : vector<8x34xf32> to vector<8x32xf32>
    %95 = vector.extract_strided_slice %87 {offsets = [0, 2], sizes = [8, 32], strides = [1, 1]} : vector<8x34xf32> to vector<8x32xf32>
    %96 = tpu.concatenate %94, %95 in 1 : vector<8x32xf32>, vector<8x32xf32> -> vector<8x64xf32>
    %97 = tpu.concatenate %90, %93, %96 in 0 : vector<8x64xf32>, vector<8x64xf32>, vector<8x64xf32> -> vector<24x64xf32>
    %98 = arith.truncf %80 : vector<8x24xf32> to vector<8x24xbf16>
    %99 = arith.truncf %97 : vector<24x64xf32> to vector<24x64xbf16>
    %cst_38 = arith.constant dense<0.000000e+00> : vector<8x64xf32>
    %100 = tpu.matmul %98, %99, %cst_38 {dimension_numbers = #tpu.dot_dimension_numbers<[1], [0], [0], [1], [0, 0, 1, 1], [], []>} : vector<8x24xbf16>, vector<24x64xbf16>, vector<8x64xf32> -> vector<8x64xf32>
    %101 = vector.broadcast %81 : vector<8x1xf32> to vector<8x64xf32>
    %102 = arith.addf %100, %101 : vector<8x64xf32>
    %cst_39 = arith.constant dense<0.000000e+00> : vector<16x64xf32>
    %103 = tpu.matmul %2, %78, %cst_39 {dimension_numbers = #tpu.dot_dimension_numbers<[1], [0], [0], [1], [0, 0, 1, 1], [], []>} : vector<16x32xf32>, vector<32x64xf32>, vector<16x64xf32> -> vector<16x64xf32>
    %c0_40 = arith.constant 0 : index
    %c0_41 = arith.constant 0 : index
    %104 = vector.load %arg11[%c0_40, %c0_41] : memref<8x48xf32, #tpu.memory_space<vmem>>, vector<8x48xf32>
    %c0_42 = arith.constant 0 : index
    %c0_43 = arith.constant 0 : index
    %105 = vector.load %arg12[%c0_42, %c0_43] : memref<8x1xf32, #tpu.memory_space<vmem>>, vector<8x1xf32>
    %106 = vector.extract_strided_slice %103 {offsets = [0, 0], sizes = [16, 32], strides = [1, 1]} : vector<16x64xf32> to vector<16x32xf32>
    %cst_44 = arith.constant 0.000000e+00 : f32
    %107 = vector.broadcast %cst_44 : f32 to vector<16x1xf32>
    %108 = tpu.concatenate %107, %106, %107 in 1 : vector<16x1xf32>, vector<16x32xf32>, vector<16x1xf32> -> vector<16x34xf32>
    %109 = vector.extract_strided_slice %103 {offsets = [0, 32], sizes = [16, 32], strides = [1, 1]} : vector<16x64xf32> to vector<16x32xf32>
    %cst_45 = arith.constant 0.000000e+00 : f32
    %110 = vector.broadcast %cst_45 : f32 to vector<16x1xf32>
    %111 = tpu.concatenate %110, %109, %110 in 1 : vector<16x1xf32>, vector<16x32xf32>, vector<16x1xf32> -> vector<16x34xf32>
    %112 = vector.extract_strided_slice %108 {offsets = [0, 0], sizes = [16, 32], strides = [1, 1]} : vector<16x34xf32> to vector<16x32xf32>
    %113 = vector.extract_strided_slice %111 {offsets = [0, 0], sizes = [16, 32], strides = [1, 1]} : vector<16x34xf32> to vector<16x32xf32>
    %114 = tpu.concatenate %112, %113 in 1 : vector<16x32xf32>, vector<16x32xf32> -> vector<16x64xf32>
    %115 = vector.extract_strided_slice %108 {offsets = [0, 1], sizes = [16, 32], strides = [1, 1]} : vector<16x34xf32> to vector<16x32xf32>
    %116 = vector.extract_strided_slice %111 {offsets = [0, 1], sizes = [16, 32], strides = [1, 1]} : vector<16x34xf32> to vector<16x32xf32>
    %117 = tpu.concatenate %115, %116 in 1 : vector<16x32xf32>, vector<16x32xf32> -> vector<16x64xf32>
    %118 = vector.extract_strided_slice %108 {offsets = [0, 2], sizes = [16, 32], strides = [1, 1]} : vector<16x34xf32> to vector<16x32xf32>
    %119 = vector.extract_strided_slice %111 {offsets = [0, 2], sizes = [16, 32], strides = [1, 1]} : vector<16x34xf32> to vector<16x32xf32>
    %120 = tpu.concatenate %118, %119 in 1 : vector<16x32xf32>, vector<16x32xf32> -> vector<16x64xf32>
    %121 = tpu.concatenate %114, %117, %120 in 0 : vector<16x64xf32>, vector<16x64xf32>, vector<16x64xf32> -> vector<48x64xf32>
    %122 = arith.truncf %104 : vector<8x48xf32> to vector<8x48xbf16>
    %123 = arith.truncf %121 : vector<48x64xf32> to vector<48x64xbf16>
    %cst_46 = arith.constant dense<0.000000e+00> : vector<8x64xf32>
    %124 = tpu.matmul %122, %123, %cst_46 {dimension_numbers = #tpu.dot_dimension_numbers<[1], [0], [0], [1], [0, 0, 1, 1], [], []>} : vector<8x48xbf16>, vector<48x64xbf16>, vector<8x64xf32> -> vector<8x64xf32>
    %125 = vector.broadcast %105 : vector<8x1xf32> to vector<8x64xf32>
    %126 = arith.addf %124, %125 : vector<8x64xf32>
    %127 = arith.addf %102, %126 : vector<8x64xf32>
    %c0_47 = arith.constant 0 : index
    %c0_48 = arith.constant 0 : index
    %128 = vector.load %arg13[%c0_47, %c0_48] : memref<8x64xf32, #tpu.memory_space<vmem>>, vector<8x64xf32>
    tpu.vector_store %arg13[%c0_47, %c0_48], %127 {strides = array<i32>} : memref<8x64xf32, #tpu.memory_space<vmem>>, vector<8x64xf32>,
    return
  }
}

module attributes {stable_mosaic.version = 11 : i64} {
  func.func @_decoder_block_kernel(%arg0: memref<35x16xf32, #tpu.memory_space<vmem>>, %arg1: memref<35x16xf32, #tpu.memory_space<vmem>>, %arg2: memref<16x32xf32, #tpu.memory_space<vmem>>, %arg3: memref<35x1xf32, #tpu.memory_space<vmem>>, %arg4: memref<35x1xf32, #tpu.memory_space<vmem>>, %arg5: memref<16x1xf32, #tpu.memory_space<vmem>>, %arg6: memref<16x1xf32, #tpu.memory_space<vmem>>, %arg7: memref<16x105xf32, #tpu.memory_space<vmem>>, %arg8: memref<16x1xf32, #tpu.memory_space<vmem>>, %arg9: memref<16x48xf32, #tpu.memory_space<vmem>>, %arg10: memref<16x1xf32, #tpu.memory_space<vmem>>, %arg11: memref<16x105xf32, #tpu.memory_space<vmem>>, %arg12: memref<16x1xf32, #tpu.memory_space<vmem>>, %arg13: memref<16x32xf32, #tpu.memory_space<vmem>>) attributes {dimension_semantics = [], scalar_prefetch = 0 : i64, scratch_operands = 0 : i64, tpu.core_type = #tpu.core_type<tc>} {
    %c0 = arith.constant 0 : index
    %c0_0 = arith.constant 0 : index
    %0 = vector.load %arg0[%c0, %c0_0] : memref<35x16xf32, #tpu.memory_space<vmem>>, vector<35x16xf32>
    %c0_1 = arith.constant 0 : index
    %c0_2 = arith.constant 0 : index
    %1 = vector.load %arg1[%c0_1, %c0_2] : memref<35x16xf32, #tpu.memory_space<vmem>>, vector<35x16xf32>
    %2 = arith.addf %0, %1 : vector<35x16xf32>
    %c0_3 = arith.constant 0 : index
    %c0_4 = arith.constant 0 : index
    %3 = vector.load %arg3[%c0_3, %c0_4] : memref<35x1xf32, #tpu.memory_space<vmem>>, vector<35x1xf32>
    %c0_5 = arith.constant 0 : index
    %c0_6 = arith.constant 0 : index
    %4 = vector.load %arg4[%c0_5, %c0_6] : memref<35x1xf32, #tpu.memory_space<vmem>>, vector<35x1xf32>
    %cst = arith.constant dense<0.000000e+00> : vector<35xf32>
    %5 = vector.multi_reduction <add>, %2, %cst [1] : vector<35x16xf32> to vector<35xf32>
    %6 = vector.shape_cast %5 : vector<35xf32> to vector<35x1xf32>
    %cst_7 = arith.constant 1.600000e+01 : f32
    %7 = vector.broadcast %cst_7 : f32 to vector<35x1xf32>
    %8 = arith.divf %6, %7 : vector<35x1xf32>
    %9 = vector.broadcast %8 : vector<35x1xf32> to vector<35x16xf32>
    %10 = arith.subf %2, %9 : vector<35x16xf32>
    %11 = arith.mulf %10, %10 : vector<35x16xf32>
    %cst_8 = arith.constant dense<0.000000e+00> : vector<35xf32>
    %12 = vector.multi_reduction <add>, %11, %cst_8 [1] : vector<35x16xf32> to vector<35xf32>
    %13 = vector.shape_cast %12 : vector<35xf32> to vector<35x1xf32>
    %cst_9 = arith.constant 1.600000e+01 : f32
    %14 = vector.broadcast %cst_9 : f32 to vector<35x1xf32>
    %15 = arith.divf %13, %14 : vector<35x1xf32>
    %16 = vector.broadcast %8 : vector<35x1xf32> to vector<35x16xf32>
    %17 = arith.subf %2, %16 : vector<35x16xf32>
    %cst_10 = arith.constant 9.99999974E-6 : f32
    %18 = vector.broadcast %cst_10 : f32 to vector<35x1xf32>
    %19 = arith.addf %15, %18 : vector<35x1xf32>
    %20 = math.rsqrt %19 : vector<35x1xf32>
    %21 = vector.broadcast %20 : vector<35x1xf32> to vector<35x16xf32>
    %22 = arith.mulf %17, %21 : vector<35x16xf32>
    %23 = vector.broadcast %3 : vector<35x1xf32> to vector<35x16xf32>
    %24 = arith.mulf %22, %23 : vector<35x16xf32>
    %25 = vector.broadcast %4 : vector<35x1xf32> to vector<35x16xf32>
    %26 = arith.addf %24, %25 : vector<35x16xf32>
    %c0_11 = arith.constant 0 : index
    %c0_12 = arith.constant 0 : index
    %27 = vector.load %arg7[%c0_11, %c0_12] : memref<16x105xf32, #tpu.memory_space<vmem>>, vector<16x105xf32>
    %c0_13 = arith.constant 0 : index
    %c0_14 = arith.constant 0 : index
    %28 = vector.load %arg8[%c0_13, %c0_14] : memref<16x1xf32, #tpu.memory_space<vmem>>, vector<16x1xf32>
    %cst_15 = arith.constant 0.000000e+00 : f32
    %29 = vector.broadcast %cst_15 : f32 to vector<35x16xf32>
    %30 = arith.maximumf %26, %29 : vector<35x16xf32>
    %31 = vector.extract_strided_slice %30 {offsets = [0, 0], sizes = [35, 8], strides = [1, 1]} : vector<35x16xf32> to vector<35x8xf32>
    %cst_16 = arith.constant 0.000000e+00 : f32
    %32 = vector.broadcast %cst_16 : f32 to vector<35x1xf32>
    %33 = tpu.concatenate %32, %31, %32 in 1 : vector<35x1xf32>, vector<35x8xf32>, vector<35x1xf32> -> vector<35x10xf32>
    %34 = vector.extract_strided_slice %30 {offsets = [0, 8], sizes = [35, 8], strides = [1, 1]} : vector<35x16xf32> to vector<35x8xf32>
    %cst_17 = arith.constant 0.000000e+00 : f32
    %35 = vector.broadcast %cst_17 : f32 to vector<35x1xf32>
    %36 = tpu.concatenate %35, %34, %35 in 1 : vector<35x1xf32>, vector<35x8xf32>, vector<35x1xf32> -> vector<35x10xf32>
    %37 = vector.extract_strided_slice %33 {offsets = [0, 0], sizes = [35, 8], strides = [1, 1]} : vector<35x10xf32> to vector<35x8xf32>
    %38 = vector.extract_strided_slice %36 {offsets = [0, 0], sizes = [35, 8], strides = [1, 1]} : vector<35x10xf32> to vector<35x8xf32>
    %39 = tpu.concatenate %37, %38 in 1 : vector<35x8xf32>, vector<35x8xf32> -> vector<35x16xf32>
    %40 = vector.extract_strided_slice %33 {offsets = [0, 1], sizes = [35, 8], strides = [1, 1]} : vector<35x10xf32> to vector<35x8xf32>
    %41 = vector.extract_strided_slice %36 {offsets = [0, 1], sizes = [35, 8], strides = [1, 1]} : vector<35x10xf32> to vector<35x8xf32>
    %42 = tpu.concatenate %40, %41 in 1 : vector<35x8xf32>, vector<35x8xf32> -> vector<35x16xf32>
    %43 = vector.extract_strided_slice %33 {offsets = [0, 2], sizes = [35, 8], strides = [1, 1]} : vector<35x10xf32> to vector<35x8xf32>
    %44 = vector.extract_strided_slice %36 {offsets = [0, 2], sizes = [35, 8], strides = [1, 1]} : vector<35x10xf32> to vector<35x8xf32>
    %45 = tpu.concatenate %43, %44 in 1 : vector<35x8xf32>, vector<35x8xf32> -> vector<35x16xf32>
    %46 = tpu.concatenate %39, %42, %45 in 0 : vector<35x16xf32>, vector<35x16xf32>, vector<35x16xf32> -> vector<105x16xf32>
    %47 = arith.truncf %27 : vector<16x105xf32> to vector<16x105xbf16>
    %48 = arith.truncf %46 : vector<105x16xf32> to vector<105x16xbf16>
    %cst_18 = arith.constant dense<0.000000e+00> : vector<16x16xf32>
    %49 = tpu.matmul %47, %48, %cst_18 {dimension_numbers = #tpu.dot_dimension_numbers<[1], [0], [0], [1], [0, 0, 1, 1], [], []>} : vector<16x105xbf16>, vector<105x16xbf16>, vector<16x16xf32> -> vector<16x16xf32>
    %50 = vector.broadcast %28 : vector<16x1xf32> to vector<16x16xf32>
    %51 = arith.addf %49, %50 : vector<16x16xf32>
    %c0_19 = arith.constant 0 : index
    %c0_20 = arith.constant 0 : index
    %52 = vector.load %arg5[%c0_19, %c0_20] : memref<16x1xf32, #tpu.memory_space<vmem>>, vector<16x1xf32>
    %c0_21 = arith.constant 0 : index
    %c0_22 = arith.constant 0 : index
    %53 = vector.load %arg6[%c0_21, %c0_22] : memref<16x1xf32, #tpu.memory_space<vmem>>, vector<16x1xf32>
    %cst_23 = arith.constant dense<0.000000e+00> : vector<16xf32>
    %54 = vector.multi_reduction <add>, %51, %cst_23 [1] : vector<16x16xf32> to vector<16xf32>
    %55 = vector.shape_cast %54 : vector<16xf32> to vector<16x1xf32>
    %cst_24 = arith.constant 1.600000e+01 : f32
    %56 = vector.broadcast %cst_24 : f32 to vector<16x1xf32>
    %57 = arith.divf %55, %56 : vector<16x1xf32>
    %58 = vector.broadcast %57 : vector<16x1xf32> to vector<16x16xf32>
    %59 = arith.subf %51, %58 : vector<16x16xf32>
    %60 = arith.mulf %59, %59 : vector<16x16xf32>
    %cst_25 = arith.constant dense<0.000000e+00> : vector<16xf32>
    %61 = vector.multi_reduction <add>, %60, %cst_25 [1] : vector<16x16xf32> to vector<16xf32>
    %62 = vector.shape_cast %61 : vector<16xf32> to vector<16x1xf32>
    %cst_26 = arith.constant 1.600000e+01 : f32
    %63 = vector.broadcast %cst_26 : f32 to vector<16x1xf32>
    %64 = arith.divf %62, %63 : vector<16x1xf32>
    %65 = vector.broadcast %57 : vector<16x1xf32> to vector<16x16xf32>
    %66 = arith.subf %51, %65 : vector<16x16xf32>
    %cst_27 = arith.constant 9.99999974E-6 : f32
    %67 = vector.broadcast %cst_27 : f32 to vector<16x1xf32>
    %68 = arith.addf %64, %67 : vector<16x1xf32>
    %69 = math.rsqrt %68 : vector<16x1xf32>
    %70 = vector.broadcast %69 : vector<16x1xf32> to vector<16x16xf32>
    %71 = arith.mulf %66, %70 : vector<16x16xf32>
    %72 = vector.broadcast %52 : vector<16x1xf32> to vector<16x16xf32>
    %73 = arith.mulf %71, %72 : vector<16x16xf32>
    %74 = vector.broadcast %53 : vector<16x1xf32> to vector<16x16xf32>
    %75 = arith.addf %73, %74 : vector<16x16xf32>
    %cst_28 = arith.constant 0.000000e+00 : f32
    %76 = vector.broadcast %cst_28 : f32 to vector<16x16xf32>
    %77 = arith.maximumf %75, %76 : vector<16x16xf32>
    %c0_29 = arith.constant 0 : index
    %c0_30 = arith.constant 0 : index
    %78 = vector.load %arg2[%c0_29, %c0_30] : memref<16x32xf32, #tpu.memory_space<vmem>>, vector<16x32xf32>
    %cst_31 = arith.constant dense<0.000000e+00> : vector<16x32xf32>
    %79 = tpu.matmul %77, %78, %cst_31 {dimension_numbers = #tpu.dot_dimension_numbers<[1], [0], [0], [1], [0, 0, 1, 1], [], []>} : vector<16x16xf32>, vector<16x32xf32>, vector<16x32xf32> -> vector<16x32xf32>
    %c0_32 = arith.constant 0 : index
    %c0_33 = arith.constant 0 : index
    %80 = vector.load %arg9[%c0_32, %c0_33] : memref<16x48xf32, #tpu.memory_space<vmem>>, vector<16x48xf32>
    %c0_34 = arith.constant 0 : index
    %c0_35 = arith.constant 0 : index
    %81 = vector.load %arg10[%c0_34, %c0_35] : memref<16x1xf32, #tpu.memory_space<vmem>>, vector<16x1xf32>
    %82 = vector.extract_strided_slice %79 {offsets = [0, 0], sizes = [16, 16], strides = [1, 1]} : vector<16x32xf32> to vector<16x16xf32>
    %cst_36 = arith.constant 0.000000e+00 : f32
    %83 = vector.broadcast %cst_36 : f32 to vector<16x1xf32>
    %84 = tpu.concatenate %83, %82, %83 in 1 : vector<16x1xf32>, vector<16x16xf32>, vector<16x1xf32> -> vector<16x18xf32>
    %85 = vector.extract_strided_slice %79 {offsets = [0, 16], sizes = [16, 16], strides = [1, 1]} : vector<16x32xf32> to vector<16x16xf32>
    %cst_37 = arith.constant 0.000000e+00 : f32
    %86 = vector.broadcast %cst_37 : f32 to vector<16x1xf32>
    %87 = tpu.concatenate %86, %85, %86 in 1 : vector<16x1xf32>, vector<16x16xf32>, vector<16x1xf32> -> vector<16x18xf32>
    %88 = vector.extract_strided_slice %84 {offsets = [0, 0], sizes = [16, 16], strides = [1, 1]} : vector<16x18xf32> to vector<16x16xf32>
    %89 = vector.extract_strided_slice %87 {offsets = [0, 0], sizes = [16, 16], strides = [1, 1]} : vector<16x18xf32> to vector<16x16xf32>
    %90 = tpu.concatenate %88, %89 in 1 : vector<16x16xf32>, vector<16x16xf32> -> vector<16x32xf32>
    %91 = vector.extract_strided_slice %84 {offsets = [0, 1], sizes = [16, 16], strides = [1, 1]} : vector<16x18xf32> to vector<16x16xf32>
    %92 = vector.extract_strided_slice %87 {offsets = [0, 1], sizes = [16, 16], strides = [1, 1]} : vector<16x18xf32> to vector<16x16xf32>
    %93 = tpu.concatenate %91, %92 in 1 : vector<16x16xf32>, vector<16x16xf32> -> vector<16x32xf32>
    %94 = vector.extract_strided_slice %84 {offsets = [0, 2], sizes = [16, 16], strides = [1, 1]} : vector<16x18xf32> to vector<16x16xf32>
    %95 = vector.extract_strided_slice %87 {offsets = [0, 2], sizes = [16, 16], strides = [1, 1]} : vector<16x18xf32> to vector<16x16xf32>
    %96 = tpu.concatenate %94, %95 in 1 : vector<16x16xf32>, vector<16x16xf32> -> vector<16x32xf32>
    %97 = tpu.concatenate %90, %93, %96 in 0 : vector<16x32xf32>, vector<16x32xf32>, vector<16x32xf32> -> vector<48x32xf32>
    %98 = arith.truncf %80 : vector<16x48xf32> to vector<16x48xbf16>
    %99 = arith.truncf %97 : vector<48x32xf32> to vector<48x32xbf16>
    %cst_38 = arith.constant dense<0.000000e+00> : vector<16x32xf32>
    %100 = tpu.matmul %98, %99, %cst_38 {dimension_numbers = #tpu.dot_dimension_numbers<[1], [0], [0], [1], [0, 0, 1, 1], [], []>} : vector<16x48xbf16>, vector<48x32xbf16>, vector<16x32xf32> -> vector<16x32xf32>
    %101 = vector.broadcast %81 : vector<16x1xf32> to vector<16x32xf32>
    %102 = arith.addf %100, %101 : vector<16x32xf32>
    %cst_39 = arith.constant dense<0.000000e+00> : vector<35x32xf32>
    %103 = tpu.matmul %2, %78, %cst_39 {dimension_numbers = #tpu.dot_dimension_numbers<[1], [0], [0], [1], [0, 0, 1, 1], [], []>} : vector<35x16xf32>, vector<16x32xf32>, vector<35x32xf32> -> vector<35x32xf32>
    %c0_40 = arith.constant 0 : index
    %c0_41 = arith.constant 0 : index
    %104 = vector.load %arg11[%c0_40, %c0_41] : memref<16x105xf32, #tpu.memory_space<vmem>>, vector<16x105xf32>
    %c0_42 = arith.constant 0 : index
    %c0_43 = arith.constant 0 : index
    %105 = vector.load %arg12[%c0_42, %c0_43] : memref<16x1xf32, #tpu.memory_space<vmem>>, vector<16x1xf32>
    %106 = vector.extract_strided_slice %103 {offsets = [0, 0], sizes = [35, 16], strides = [1, 1]} : vector<35x32xf32> to vector<35x16xf32>
    %cst_44 = arith.constant 0.000000e+00 : f32
    %107 = vector.broadcast %cst_44 : f32 to vector<35x1xf32>
    %108 = tpu.concatenate %107, %106, %107 in 1 : vector<35x1xf32>, vector<35x16xf32>, vector<35x1xf32> -> vector<35x18xf32>
    %109 = vector.extract_strided_slice %103 {offsets = [0, 16], sizes = [35, 16], strides = [1, 1]} : vector<35x32xf32> to vector<35x16xf32>
    %cst_45 = arith.constant 0.000000e+00 : f32
    %110 = vector.broadcast %cst_45 : f32 to vector<35x1xf32>
    %111 = tpu.concatenate %110, %109, %110 in 1 : vector<35x1xf32>, vector<35x16xf32>, vector<35x1xf32> -> vector<35x18xf32>
    %112 = vector.extract_strided_slice %108 {offsets = [0, 0], sizes = [35, 16], strides = [1, 1]} : vector<35x18xf32> to vector<35x16xf32>
    %113 = vector.extract_strided_slice %111 {offsets = [0, 0], sizes = [35, 16], strides = [1, 1]} : vector<35x18xf32> to vector<35x16xf32>
    %114 = tpu.concatenate %112, %113 in 1 : vector<35x16xf32>, vector<35x16xf32> -> vector<35x32xf32>
    %115 = vector.extract_strided_slice %108 {offsets = [0, 1], sizes = [35, 16], strides = [1, 1]} : vector<35x18xf32> to vector<35x16xf32>
    %116 = vector.extract_strided_slice %111 {offsets = [0, 1], sizes = [35, 16], strides = [1, 1]} : vector<35x18xf32> to vector<35x16xf32>
    %117 = tpu.concatenate %115, %116 in 1 : vector<35x16xf32>, vector<35x16xf32> -> vector<35x32xf32>
    %118 = vector.extract_strided_slice %108 {offsets = [0, 2], sizes = [35, 16], strides = [1, 1]} : vector<35x18xf32> to vector<35x16xf32>
    %119 = vector.extract_strided_slice %111 {offsets = [0, 2], sizes = [35, 16], strides = [1, 1]} : vector<35x18xf32> to vector<35x16xf32>
    %120 = tpu.concatenate %118, %119 in 1 : vector<35x16xf32>, vector<35x16xf32> -> vector<35x32xf32>
    %121 = tpu.concatenate %114, %117, %120 in 0 : vector<35x32xf32>, vector<35x32xf32>, vector<35x32xf32> -> vector<105x32xf32>
    %122 = arith.truncf %104 : vector<16x105xf32> to vector<16x105xbf16>
    %123 = arith.truncf %121 : vector<105x32xf32> to vector<105x32xbf16>
    %cst_46 = arith.constant dense<0.000000e+00> : vector<16x32xf32>
    %124 = tpu.matmul %122, %123, %cst_46 {dimension_numbers = #tpu.dot_dimension_numbers<[1], [0], [0], [1], [0, 0, 1, 1], [], []>} : vector<16x105xbf16>, vector<105x32xbf16>, vector<16x32xf32> -> vector<16x32xf32>
    %125 = vector.broadcast %105 : vector<16x1xf32> to vector<16x32xf32>
    %126 = arith.addf %124, %125 : vector<16x32xf32>
    %127 = arith.addf %102, %126 : vector<16x32xf32>
    %c0_47 = arith.constant 0 : index
    %c0_48 = arith.constant 0 : index
    %128 = vector.load %arg13[%c0_47, %c0_48] : memref<16x32xf32, #tpu.memory_space<vmem>>, vector<16x32xf32>
    tpu.vector_store %arg13[%c0_47, %c0_48], %127 {strides = array<i32>} : memref<16x32xf32, #tpu.memory_space<vmem>>, vector<16x32xf32>,
    return
  }
}

module attributes {stable_mosaic.version = 11 : i64} {
  func.func @_decoder_block_kernel(%arg0: memref<8x64xf32, #tpu.memory_space<vmem>>, %arg1: memref<8x64xf32, #tpu.memory_space<vmem>>, %arg2: memref<64x128xf32, #tpu.memory_space<vmem>>, %arg3: memref<8x1xf32, #tpu.memory_space<vmem>>, %arg4: memref<8x1xf32, #tpu.memory_space<vmem>>, %arg5: memref<8x1xf32, #tpu.memory_space<vmem>>, %arg6: memref<8x1xf32, #tpu.memory_space<vmem>>, %arg7: memref<8x24xf32, #tpu.memory_space<vmem>>, %arg8: memref<8x1xf32, #tpu.memory_space<vmem>>, %arg9: memref<8x24xf32, #tpu.memory_space<vmem>>, %arg10: memref<8x1xf32, #tpu.memory_space<vmem>>, %arg11: memref<8x24xf32, #tpu.memory_space<vmem>>, %arg12: memref<8x1xf32, #tpu.memory_space<vmem>>, %arg13: memref<8x128xf32, #tpu.memory_space<vmem>>) attributes {dimension_semantics = [], scalar_prefetch = 0 : i64, scratch_operands = 0 : i64, tpu.core_type = #tpu.core_type<tc>} {
    %c0 = arith.constant 0 : index
    %c0_0 = arith.constant 0 : index
    %0 = vector.load %arg0[%c0, %c0_0] : memref<8x64xf32, #tpu.memory_space<vmem>>, vector<8x64xf32>
    %c0_1 = arith.constant 0 : index
    %c0_2 = arith.constant 0 : index
    %1 = vector.load %arg1[%c0_1, %c0_2] : memref<8x64xf32, #tpu.memory_space<vmem>>, vector<8x64xf32>
    %2 = arith.addf %0, %1 : vector<8x64xf32>
    %c0_3 = arith.constant 0 : index
    %c0_4 = arith.constant 0 : index
    %3 = vector.load %arg3[%c0_3, %c0_4] : memref<8x1xf32, #tpu.memory_space<vmem>>, vector<8x1xf32>
    %c0_5 = arith.constant 0 : index
    %c0_6 = arith.constant 0 : index
    %4 = vector.load %arg4[%c0_5, %c0_6] : memref<8x1xf32, #tpu.memory_space<vmem>>, vector<8x1xf32>
    %cst = arith.constant dense<0.000000e+00> : vector<8xf32>
    %5 = vector.multi_reduction <add>, %2, %cst [1] : vector<8x64xf32> to vector<8xf32>
    %6 = vector.shape_cast %5 : vector<8xf32> to vector<8x1xf32>
    %cst_7 = arith.constant 6.400000e+01 : f32
    %7 = vector.broadcast %cst_7 : f32 to vector<8x1xf32>
    %8 = arith.divf %6, %7 : vector<8x1xf32>
    %9 = vector.broadcast %8 : vector<8x1xf32> to vector<8x64xf32>
    %10 = arith.subf %2, %9 : vector<8x64xf32>
    %11 = arith.mulf %10, %10 : vector<8x64xf32>
    %cst_8 = arith.constant dense<0.000000e+00> : vector<8xf32>
    %12 = vector.multi_reduction <add>, %11, %cst_8 [1] : vector<8x64xf32> to vector<8xf32>
    %13 = vector.shape_cast %12 : vector<8xf32> to vector<8x1xf32>
    %cst_9 = arith.constant 6.400000e+01 : f32
    %14 = vector.broadcast %cst_9 : f32 to vector<8x1xf32>
    %15 = arith.divf %13, %14 : vector<8x1xf32>
    %16 = vector.broadcast %8 : vector<8x1xf32> to vector<8x64xf32>
    %17 = arith.subf %2, %16 : vector<8x64xf32>
    %cst_10 = arith.constant 9.99999974E-6 : f32
    %18 = vector.broadcast %cst_10 : f32 to vector<8x1xf32>
    %19 = arith.addf %15, %18 : vector<8x1xf32>
    %20 = math.rsqrt %19 : vector<8x1xf32>
    %21 = vector.broadcast %20 : vector<8x1xf32> to vector<8x64xf32>
    %22 = arith.mulf %17, %21 : vector<8x64xf32>
    %23 = vector.broadcast %3 : vector<8x1xf32> to vector<8x64xf32>
    %24 = arith.mulf %22, %23 : vector<8x64xf32>
    %25 = vector.broadcast %4 : vector<8x1xf32> to vector<8x64xf32>
    %26 = arith.addf %24, %25 : vector<8x64xf32>
    %c0_11 = arith.constant 0 : index
    %c0_12 = arith.constant 0 : index
    %27 = vector.load %arg7[%c0_11, %c0_12] : memref<8x24xf32, #tpu.memory_space<vmem>>, vector<8x24xf32>
    %c0_13 = arith.constant 0 : index
    %c0_14 = arith.constant 0 : index
    %28 = vector.load %arg8[%c0_13, %c0_14] : memref<8x1xf32, #tpu.memory_space<vmem>>, vector<8x1xf32>
    %cst_15 = arith.constant 0.000000e+00 : f32
    %29 = vector.broadcast %cst_15 : f32 to vector<8x64xf32>
    %30 = arith.maximumf %26, %29 : vector<8x64xf32>
    %31 = vector.extract_strided_slice %30 {offsets = [0, 0], sizes = [8, 32], strides = [1, 1]} : vector<8x64xf32> to vector<8x32xf32>
    %cst_16 = arith.constant 0.000000e+00 : f32
    %32 = vector.broadcast %cst_16 : f32 to vector<8x1xf32>
    %33 = tpu.concatenate %32, %31, %32 in 1 : vector<8x1xf32>, vector<8x32xf32>, vector<8x1xf32> -> vector<8x34xf32>
    %34 = vector.extract_strided_slice %30 {offsets = [0, 32], sizes = [8, 32], strides = [1, 1]} : vector<8x64xf32> to vector<8x32xf32>
    %cst_17 = arith.constant 0.000000e+00 : f32
    %35 = vector.broadcast %cst_17 : f32 to vector<8x1xf32>
    %36 = tpu.concatenate %35, %34, %35 in 1 : vector<8x1xf32>, vector<8x32xf32>, vector<8x1xf32> -> vector<8x34xf32>
    %37 = vector.extract_strided_slice %33 {offsets = [0, 0], sizes = [8, 32], strides = [1, 1]} : vector<8x34xf32> to vector<8x32xf32>
    %38 = vector.extract_strided_slice %36 {offsets = [0, 0], sizes = [8, 32], strides = [1, 1]} : vector<8x34xf32> to vector<8x32xf32>
    %39 = tpu.concatenate %37, %38 in 1 : vector<8x32xf32>, vector<8x32xf32> -> vector<8x64xf32>
    %40 = vector.extract_strided_slice %33 {offsets = [0, 1], sizes = [8, 32], strides = [1, 1]} : vector<8x34xf32> to vector<8x32xf32>
    %41 = vector.extract_strided_slice %36 {offsets = [0, 1], sizes = [8, 32], strides = [1, 1]} : vector<8x34xf32> to vector<8x32xf32>
    %42 = tpu.concatenate %40, %41 in 1 : vector<8x32xf32>, vector<8x32xf32> -> vector<8x64xf32>
    %43 = vector.extract_strided_slice %33 {offsets = [0, 2], sizes = [8, 32], strides = [1, 1]} : vector<8x34xf32> to vector<8x32xf32>
    %44 = vector.extract_strided_slice %36 {offsets = [0, 2], sizes = [8, 32], strides = [1, 1]} : vector<8x34xf32> to vector<8x32xf32>
    %45 = tpu.concatenate %43, %44 in 1 : vector<8x32xf32>, vector<8x32xf32> -> vector<8x64xf32>
    %46 = tpu.concatenate %39, %42, %45 in 0 : vector<8x64xf32>, vector<8x64xf32>, vector<8x64xf32> -> vector<24x64xf32>
    %47 = arith.truncf %27 : vector<8x24xf32> to vector<8x24xbf16>
    %48 = arith.truncf %46 : vector<24x64xf32> to vector<24x64xbf16>
    %cst_18 = arith.constant dense<0.000000e+00> : vector<8x64xf32>
    %49 = tpu.matmul %47, %48, %cst_18 {dimension_numbers = #tpu.dot_dimension_numbers<[1], [0], [0], [1], [0, 0, 1, 1], [], []>} : vector<8x24xbf16>, vector<24x64xbf16>, vector<8x64xf32> -> vector<8x64xf32>
    %50 = vector.broadcast %28 : vector<8x1xf32> to vector<8x64xf32>
    %51 = arith.addf %49, %50 : vector<8x64xf32>
    %c0_19 = arith.constant 0 : index
    %c0_20 = arith.constant 0 : index
    %52 = vector.load %arg5[%c0_19, %c0_20] : memref<8x1xf32, #tpu.memory_space<vmem>>, vector<8x1xf32>
    %c0_21 = arith.constant 0 : index
    %c0_22 = arith.constant 0 : index
    %53 = vector.load %arg6[%c0_21, %c0_22] : memref<8x1xf32, #tpu.memory_space<vmem>>, vector<8x1xf32>
    %cst_23 = arith.constant dense<0.000000e+00> : vector<8xf32>
    %54 = vector.multi_reduction <add>, %51, %cst_23 [1] : vector<8x64xf32> to vector<8xf32>
    %55 = vector.shape_cast %54 : vector<8xf32> to vector<8x1xf32>
    %cst_24 = arith.constant 6.400000e+01 : f32
    %56 = vector.broadcast %cst_24 : f32 to vector<8x1xf32>
    %57 = arith.divf %55, %56 : vector<8x1xf32>
    %58 = vector.broadcast %57 : vector<8x1xf32> to vector<8x64xf32>
    %59 = arith.subf %51, %58 : vector<8x64xf32>
    %60 = arith.mulf %59, %59 : vector<8x64xf32>
    %cst_25 = arith.constant dense<0.000000e+00> : vector<8xf32>
    %61 = vector.multi_reduction <add>, %60, %cst_25 [1] : vector<8x64xf32> to vector<8xf32>
    %62 = vector.shape_cast %61 : vector<8xf32> to vector<8x1xf32>
    %cst_26 = arith.constant 6.400000e+01 : f32
    %63 = vector.broadcast %cst_26 : f32 to vector<8x1xf32>
    %64 = arith.divf %62, %63 : vector<8x1xf32>
    %65 = vector.broadcast %57 : vector<8x1xf32> to vector<8x64xf32>
    %66 = arith.subf %51, %65 : vector<8x64xf32>
    %cst_27 = arith.constant 9.99999974E-6 : f32
    %67 = vector.broadcast %cst_27 : f32 to vector<8x1xf32>
    %68 = arith.addf %64, %67 : vector<8x1xf32>
    %69 = math.rsqrt %68 : vector<8x1xf32>
    %70 = vector.broadcast %69 : vector<8x1xf32> to vector<8x64xf32>
    %71 = arith.mulf %66, %70 : vector<8x64xf32>
    %72 = vector.broadcast %52 : vector<8x1xf32> to vector<8x64xf32>
    %73 = arith.mulf %71, %72 : vector<8x64xf32>
    %74 = vector.broadcast %53 : vector<8x1xf32> to vector<8x64xf32>
    %75 = arith.addf %73, %74 : vector<8x64xf32>
    %cst_28 = arith.constant 0.000000e+00 : f32
    %76 = vector.broadcast %cst_28 : f32 to vector<8x64xf32>
    %77 = arith.maximumf %75, %76 : vector<8x64xf32>
    %c0_29 = arith.constant 0 : index
    %c0_30 = arith.constant 0 : index
    %78 = vector.load %arg2[%c0_29, %c0_30] : memref<64x128xf32, #tpu.memory_space<vmem>>, vector<64x128xf32>
    %cst_31 = arith.constant dense<0.000000e+00> : vector<8x128xf32>
    %79 = tpu.matmul %77, %78, %cst_31 {dimension_numbers = #tpu.dot_dimension_numbers<[1], [0], [0], [1], [0, 0, 1, 1], [], []>} : vector<8x64xf32>, vector<64x128xf32>, vector<8x128xf32> -> vector<8x128xf32>
    %c0_32 = arith.constant 0 : index
    %c0_33 = arith.constant 0 : index
    %80 = vector.load %arg9[%c0_32, %c0_33] : memref<8x24xf32, #tpu.memory_space<vmem>>, vector<8x24xf32>
    %c0_34 = arith.constant 0 : index
    %c0_35 = arith.constant 0 : index
    %81 = vector.load %arg10[%c0_34, %c0_35] : memref<8x1xf32, #tpu.memory_space<vmem>>, vector<8x1xf32>
    %82 = vector.extract_strided_slice %79 {offsets = [0, 0], sizes = [8, 64], strides = [1, 1]} : vector<8x128xf32> to vector<8x64xf32>
    %cst_36 = arith.constant 0.000000e+00 : f32
    %83 = vector.broadcast %cst_36 : f32 to vector<8x1xf32>
    %84 = tpu.concatenate %83, %82, %83 in 1 : vector<8x1xf32>, vector<8x64xf32>, vector<8x1xf32> -> vector<8x66xf32>
    %85 = vector.extract_strided_slice %79 {offsets = [0, 64], sizes = [8, 64], strides = [1, 1]} : vector<8x128xf32> to vector<8x64xf32>
    %cst_37 = arith.constant 0.000000e+00 : f32
    %86 = vector.broadcast %cst_37 : f32 to vector<8x1xf32>
    %87 = tpu.concatenate %86, %85, %86 in 1 : vector<8x1xf32>, vector<8x64xf32>, vector<8x1xf32> -> vector<8x66xf32>
    %88 = vector.extract_strided_slice %84 {offsets = [0, 0], sizes = [8, 64], strides = [1, 1]} : vector<8x66xf32> to vector<8x64xf32>
    %89 = vector.extract_strided_slice %87 {offsets = [0, 0], sizes = [8, 64], strides = [1, 1]} : vector<8x66xf32> to vector<8x64xf32>
    %90 = tpu.concatenate %88, %89 in 1 : vector<8x64xf32>, vector<8x64xf32> -> vector<8x128xf32>
    %91 = vector.extract_strided_slice %84 {offsets = [0, 1], sizes = [8, 64], strides = [1, 1]} : vector<8x66xf32> to vector<8x64xf32>
    %92 = vector.extract_strided_slice %87 {offsets = [0, 1], sizes = [8, 64], strides = [1, 1]} : vector<8x66xf32> to vector<8x64xf32>
    %93 = tpu.concatenate %91, %92 in 1 : vector<8x64xf32>, vector<8x64xf32> -> vector<8x128xf32>
    %94 = vector.extract_strided_slice %84 {offsets = [0, 2], sizes = [8, 64], strides = [1, 1]} : vector<8x66xf32> to vector<8x64xf32>
    %95 = vector.extract_strided_slice %87 {offsets = [0, 2], sizes = [8, 64], strides = [1, 1]} : vector<8x66xf32> to vector<8x64xf32>
    %96 = tpu.concatenate %94, %95 in 1 : vector<8x64xf32>, vector<8x64xf32> -> vector<8x128xf32>
    %97 = tpu.concatenate %90, %93, %96 in 0 : vector<8x128xf32>, vector<8x128xf32>, vector<8x128xf32> -> vector<24x128xf32>
    %98 = arith.truncf %80 : vector<8x24xf32> to vector<8x24xbf16>
    %99 = arith.truncf %97 : vector<24x128xf32> to vector<24x128xbf16>
    %cst_38 = arith.constant dense<0.000000e+00> : vector<8x128xf32>
    %100 = tpu.matmul %98, %99, %cst_38 {dimension_numbers = #tpu.dot_dimension_numbers<[1], [0], [0], [1], [0, 0, 1, 1], [], []>} : vector<8x24xbf16>, vector<24x128xbf16>, vector<8x128xf32> -> vector<8x128xf32>
    %101 = vector.broadcast %81 : vector<8x1xf32> to vector<8x128xf32>
    %102 = arith.addf %100, %101 : vector<8x128xf32>
    %cst_39 = arith.constant dense<0.000000e+00> : vector<8x128xf32>
    %103 = tpu.matmul %2, %78, %cst_39 {dimension_numbers = #tpu.dot_dimension_numbers<[1], [0], [0], [1], [0, 0, 1, 1], [], []>} : vector<8x64xf32>, vector<64x128xf32>, vector<8x128xf32> -> vector<8x128xf32>
    %c0_40 = arith.constant 0 : index
    %c0_41 = arith.constant 0 : index
    %104 = vector.load %arg11[%c0_40, %c0_41] : memref<8x24xf32, #tpu.memory_space<vmem>>, vector<8x24xf32>
    %c0_42 = arith.constant 0 : index
    %c0_43 = arith.constant 0 : index
    %105 = vector.load %arg12[%c0_42, %c0_43] : memref<8x1xf32, #tpu.memory_space<vmem>>, vector<8x1xf32>
    %106 = vector.extract_strided_slice %103 {offsets = [0, 0], sizes = [8, 64], strides = [1, 1]} : vector<8x128xf32> to vector<8x64xf32>
    %cst_44 = arith.constant 0.000000e+00 : f32
    %107 = vector.broadcast %cst_44 : f32 to vector<8x1xf32>
    %108 = tpu.concatenate %107, %106, %107 in 1 : vector<8x1xf32>, vector<8x64xf32>, vector<8x1xf32> -> vector<8x66xf32>
    %109 = vector.extract_strided_slice %103 {offsets = [0, 64], sizes = [8, 64], strides = [1, 1]} : vector<8x128xf32> to vector<8x64xf32>
    %cst_45 = arith.constant 0.000000e+00 : f32
    %110 = vector.broadcast %cst_45 : f32 to vector<8x1xf32>
    %111 = tpu.concatenate %110, %109, %110 in 1 : vector<8x1xf32>, vector<8x64xf32>, vector<8x1xf32> -> vector<8x66xf32>
    %112 = vector.extract_strided_slice %108 {offsets = [0, 0], sizes = [8, 64], strides = [1, 1]} : vector<8x66xf32> to vector<8x64xf32>
    %113 = vector.extract_strided_slice %111 {offsets = [0, 0], sizes = [8, 64], strides = [1, 1]} : vector<8x66xf32> to vector<8x64xf32>
    %114 = tpu.concatenate %112, %113 in 1 : vector<8x64xf32>, vector<8x64xf32> -> vector<8x128xf32>
    %115 = vector.extract_strided_slice %108 {offsets = [0, 1], sizes = [8, 64], strides = [1, 1]} : vector<8x66xf32> to vector<8x64xf32>
    %116 = vector.extract_strided_slice %111 {offsets = [0, 1], sizes = [8, 64], strides = [1, 1]} : vector<8x66xf32> to vector<8x64xf32>
    %117 = tpu.concatenate %115, %116 in 1 : vector<8x64xf32>, vector<8x64xf32> -> vector<8x128xf32>
    %118 = vector.extract_strided_slice %108 {offsets = [0, 2], sizes = [8, 64], strides = [1, 1]} : vector<8x66xf32> to vector<8x64xf32>
    %119 = vector.extract_strided_slice %111 {offsets = [0, 2], sizes = [8, 64], strides = [1, 1]} : vector<8x66xf32> to vector<8x64xf32>
    %120 = tpu.concatenate %118, %119 in 1 : vector<8x64xf32>, vector<8x64xf32> -> vector<8x128xf32>
    %121 = tpu.concatenate %114, %117, %120 in 0 : vector<8x128xf32>, vector<8x128xf32>, vector<8x128xf32> -> vector<24x128xf32>
    %122 = arith.truncf %104 : vector<8x24xf32> to vector<8x24xbf16>
    %123 = arith.truncf %121 : vector<24x128xf32> to vector<24x128xbf16>
    %cst_46 = arith.constant dense<0.000000e+00> : vector<8x128xf32>
    %124 = tpu.matmul %122, %123, %cst_46 {dimension_numbers = #tpu.dot_dimension_numbers<[1], [0], [0], [1], [0, 0, 1, 1], [], []>} : vector<8x24xbf16>, vector<24x128xbf16>, vector<8x128xf32> -> vector<8x128xf32>
    %125 = vector.broadcast %105 : vector<8x1xf32> to vector<8x128xf32>
    %126 = arith.addf %124, %125 : vector<8x128xf32>
    %127 = arith.addf %102, %126 : vector<8x128xf32>
    %c0_47 = arith.constant 0 : index
    %c0_48 = arith.constant 0 : index
    %128 = vector.load %arg13[%c0_47, %c0_48] : memref<8x128xf32, #tpu.memory_space<vmem>>, vector<8x128xf32>
    tpu.vector_store %arg13[%c0_47, %c0_48], %127 {strides = array<i32>} : memref<8x128xf32, #tpu.memory_space<vmem>>, vector<8x128xf32>,
    return
  }
}

module attributes {stable_mosaic.version = 11 : i64} {
  func.func @_output_kernel(%arg0: memref<8x128xf32, #tpu.memory_space<vmem>>, %arg1: memref<8x24xf32, #tpu.memory_space<vmem>>, %arg2: memref<8x1xf32, #tpu.memory_space<vmem>>, %arg3: memref<8x128xf32, #tpu.memory_space<vmem>>) attributes {dimension_semantics = [], scalar_prefetch = 0 : i64, scratch_operands = 0 : i64, tpu.core_type = #tpu.core_type<tc>} {
    %c0 = arith.constant 0 : index
    %c0_0 = arith.constant 0 : index
    %0 = vector.load %arg0[%c0, %c0_0] : memref<8x128xf32, #tpu.memory_space<vmem>>, vector<8x128xf32>
    %c0_1 = arith.constant 0 : index
    %c0_2 = arith.constant 0 : index
    %1 = vector.load %arg1[%c0_1, %c0_2] : memref<8x24xf32, #tpu.memory_space<vmem>>, vector<8x24xf32>
    %c0_3 = arith.constant 0 : index
    %c0_4 = arith.constant 0 : index
    %2 = vector.load %arg2[%c0_3, %c0_4] : memref<8x1xf32, #tpu.memory_space<vmem>>, vector<8x1xf32>
    %cst = arith.constant 0.000000e+00 : f32
    %3 = vector.broadcast %cst : f32 to vector<8x128xf32>
    %4 = arith.maximumf %0, %3 : vector<8x128xf32>
    %5 = vector.extract_strided_slice %4 {offsets = [0, 0], sizes = [8, 64], strides = [1, 1]} : vector<8x128xf32> to vector<8x64xf32>
    %6 = vector.extract_strided_slice %5 {offsets = [0, 1], sizes = [8, 1], strides = [1, 1]} : vector<8x64xf32> to vector<8x1xf32>
    %7 = vector.extract_strided_slice %5 {offsets = [0, 62], sizes = [8, 1], strides = [1, 1]} : vector<8x64xf32> to vector<8x1xf32>
    %8 = tpu.concatenate %6, %5, %7 in 1 : vector<8x1xf32>, vector<8x64xf32>, vector<8x1xf32> -> vector<8x66xf32>
    %9 = vector.extract_strided_slice %4 {offsets = [0, 64], sizes = [8, 64], strides = [1, 1]} : vector<8x128xf32> to vector<8x64xf32>
    %10 = vector.extract_strided_slice %9 {offsets = [0, 1], sizes = [8, 1], strides = [1, 1]} : vector<8x64xf32> to vector<8x1xf32>
    %11 = vector.extract_strided_slice %9 {offsets = [0, 62], sizes = [8, 1], strides = [1, 1]} : vector<8x64xf32> to vector<8x1xf32>
    %12 = tpu.concatenate %10, %9, %11 in 1 : vector<8x1xf32>, vector<8x64xf32>, vector<8x1xf32> -> vector<8x66xf32>
    %13 = vector.extract_strided_slice %8 {offsets = [0, 0], sizes = [8, 64], strides = [1, 1]} : vector<8x66xf32> to vector<8x64xf32>
    %14 = vector.extract_strided_slice %12 {offsets = [0, 0], sizes = [8, 64], strides = [1, 1]} : vector<8x66xf32> to vector<8x64xf32>
    %15 = tpu.concatenate %13, %14 in 1 : vector<8x64xf32>, vector<8x64xf32> -> vector<8x128xf32>
    %16 = vector.extract_strided_slice %8 {offsets = [0, 1], sizes = [8, 64], strides = [1, 1]} : vector<8x66xf32> to vector<8x64xf32>
    %17 = vector.extract_strided_slice %12 {offsets = [0, 1], sizes = [8, 64], strides = [1, 1]} : vector<8x66xf32> to vector<8x64xf32>
    %18 = tpu.concatenate %16, %17 in 1 : vector<8x64xf32>, vector<8x64xf32> -> vector<8x128xf32>
    %19 = vector.extract_strided_slice %8 {offsets = [0, 2], sizes = [8, 64], strides = [1, 1]} : vector<8x66xf32> to vector<8x64xf32>
    %20 = vector.extract_strided_slice %12 {offsets = [0, 2], sizes = [8, 64], strides = [1, 1]} : vector<8x66xf32> to vector<8x64xf32>
    %21 = tpu.concatenate %19, %20 in 1 : vector<8x64xf32>, vector<8x64xf32> -> vector<8x128xf32>
    %22 = tpu.concatenate %15, %18, %21 in 0 : vector<8x128xf32>, vector<8x128xf32>, vector<8x128xf32> -> vector<24x128xf32>
    %23 = arith.truncf %1 : vector<8x24xf32> to vector<8x24xbf16>
    %24 = arith.truncf %22 : vector<24x128xf32> to vector<24x128xbf16>
    %cst_5 = arith.constant dense<0.000000e+00> : vector<8x128xf32>
    %25 = tpu.matmul %23, %24, %cst_5 {dimension_numbers = #tpu.dot_dimension_numbers<[1], [0], [0], [1], [0, 0, 1, 1], [], []>} : vector<8x24xbf16>, vector<24x128xbf16>, vector<8x128xf32> -> vector<8x128xf32>
    %26 = vector.broadcast %2 : vector<8x1xf32> to vector<8x128xf32>
    %27 = arith.addf %25, %26 : vector<8x128xf32>
    %28 = math.tanh %27 : vector<8x128xf32>
    %29 = vector.extract_strided_slice %28 {offsets = [0, 0], sizes = [8, 64], strides = [1, 1]} : vector<8x128xf32> to vector<8x64xf32>
    %30 = vector.extract_strided_slice %29 {offsets = [0, 2], sizes = [8, 1], strides = [1, 1]} : vector<8x64xf32> to vector<8x1xf32>
    %31 = vector.extract_strided_slice %29 {offsets = [0, 1], sizes = [8, 1], strides = [1, 1]} : vector<8x64xf32> to vector<8x1xf32>
    %32 = vector.extract_strided_slice %29 {offsets = [0, 62], sizes = [8, 1], strides = [1, 1]} : vector<8x64xf32> to vector<8x1xf32>
    %33 = vector.extract_strided_slice %29 {offsets = [0, 61], sizes = [8, 1], strides = [1, 1]} : vector<8x64xf32> to vector<8x1xf32>
    %34 = tpu.concatenate %30, %31, %29, %32, %33 in 1 : vector<8x1xf32>, vector<8x1xf32>, vector<8x64xf32>, vector<8x1xf32>, vector<8x1xf32> -> vector<8x68xf32>
    %35 = vector.extract_strided_slice %34 {offsets = [0, 0], sizes = [8, 64], strides = [1, 1]} : vector<8x68xf32> to vector<8x64xf32>
    %36 = vector.extract_strided_slice %34 {offsets = [0, 1], sizes = [8, 64], strides = [1, 1]} : vector<8x68xf32> to vector<8x64xf32>
    %37 = arith.addf %35, %36 : vector<8x64xf32>
    %38 = vector.extract_strided_slice %34 {offsets = [0, 2], sizes = [8, 64], strides = [1, 1]} : vector<8x68xf32> to vector<8x64xf32>
    %39 = arith.addf %37, %38 : vector<8x64xf32>
    %40 = vector.extract_strided_slice %34 {offsets = [0, 3], sizes = [8, 64], strides = [1, 1]} : vector<8x68xf32> to vector<8x64xf32>
    %41 = arith.addf %39, %40 : vector<8x64xf32>
    %42 = vector.extract_strided_slice %34 {offsets = [0, 4], sizes = [8, 64], strides = [1, 1]} : vector<8x68xf32> to vector<8x64xf32>
    %43 = arith.addf %41, %42 : vector<8x64xf32>
    %cst_6 = arith.constant 2.000000e-01 : f32
    %44 = vector.broadcast %cst_6 : f32 to vector<8x64xf32>
    %45 = arith.mulf %43, %44 : vector<8x64xf32>
    %46 = vector.extract_strided_slice %28 {offsets = [0, 64], sizes = [8, 64], strides = [1, 1]} : vector<8x128xf32> to vector<8x64xf32>
    %47 = vector.extract_strided_slice %46 {offsets = [0, 2], sizes = [8, 1], strides = [1, 1]} : vector<8x64xf32> to vector<8x1xf32>
    %48 = vector.extract_strided_slice %46 {offsets = [0, 1], sizes = [8, 1], strides = [1, 1]} : vector<8x64xf32> to vector<8x1xf32>
    %49 = vector.extract_strided_slice %46 {offsets = [0, 62], sizes = [8, 1], strides = [1, 1]} : vector<8x64xf32> to vector<8x1xf32>
    %50 = vector.extract_strided_slice %46 {offsets = [0, 61], sizes = [8, 1], strides = [1, 1]} : vector<8x64xf32> to vector<8x1xf32>
    %51 = tpu.concatenate %47, %48, %46, %49, %50 in 1 : vector<8x1xf32>, vector<8x1xf32>, vector<8x64xf32>, vector<8x1xf32>, vector<8x1xf32> -> vector<8x68xf32>
    %52 = vector.extract_strided_slice %51 {offsets = [0, 0], sizes = [8, 64], strides = [1, 1]} : vector<8x68xf32> to vector<8x64xf32>
    %53 = vector.extract_strided_slice %51 {offsets = [0, 1], sizes = [8, 64], strides = [1, 1]} : vector<8x68xf32> to vector<8x64xf32>
    %54 = arith.addf %52, %53 : vector<8x64xf32>
    %55 = vector.extract_strided_slice %51 {offsets = [0, 2], sizes = [8, 64], strides = [1, 1]} : vector<8x68xf32> to vector<8x64xf32>
    %56 = arith.addf %54, %55 : vector<8x64xf32>
    %57 = vector.extract_strided_slice %51 {offsets = [0, 3], sizes = [8, 64], strides = [1, 1]} : vector<8x68xf32> to vector<8x64xf32>
    %58 = arith.addf %56, %57 : vector<8x64xf32>
    %59 = vector.extract_strided_slice %51 {offsets = [0, 4], sizes = [8, 64], strides = [1, 1]} : vector<8x68xf32> to vector<8x64xf32>
    %60 = arith.addf %58, %59 : vector<8x64xf32>
    %cst_7 = arith.constant 2.000000e-01 : f32
    %61 = vector.broadcast %cst_7 : f32 to vector<8x64xf32>
    %62 = arith.mulf %60, %61 : vector<8x64xf32>
    %63 = tpu.concatenate %45, %62 in 1 : vector<8x64xf32>, vector<8x64xf32> -> vector<8x128xf32>
    %c0_8 = arith.constant 0 : index
    %c0_9 = arith.constant 0 : index
    %64 = vector.load %arg3[%c0_8, %c0_9] : memref<8x128xf32, #tpu.memory_space<vmem>>, vector<8x128xf32>
    tpu.vector_store %arg3[%c0_8, %c0_9], %63 {strides = array<i32>} : memref<8x128xf32, #tpu.memory_space<vmem>>, vector<8x128xf32>,
    return
  }
}

</mosaic_0001>

<llo_original>
// kernel: res_generator1_forward.10
$region0: #{res_generator1_forward.10}
  #allocation0 [shape = 'u32[]', space=smem, size = 0x4, offset = 0x4, fixed_abs, tag = 'smem constant byte address 0x4 - core index']
  #allocation1 [shape = 'u32[144,128]{1,0:T(1,128)}', space=vmem, size = 0x12000, scoped, tag = 'internal scratch']
  %s0 = inlined_call_operand.vmem [shape: f32[32,16], index: 0, kind: input, shape index: {}]
  %s1 = inlined_call_operand.vmem [shape: f32[8,96], index: 1, kind: input, shape index: {}]
  %s2 = inlined_call_operand.vmem [shape: f32[8,1], index: 2, kind: input, shape index: {}]
  %s3 = inlined_call_operand.vmem [shape: f32[8,16], index: 3, kind: output, shape index: {}]
  %s4 = sld [smem:[#allocation0]]
  $region22: #{res_generator1_forward.10} parent=0
    _
  %s6 = ssub.s32 1, %s4
  %s7 = scalar_select 0, %s6, %s4
  // Predicated region
  $region2: #{res_generator1_forward.10} parent=0 // pred_check
    _
  $region3: #{res_generator1_forward.10} parent=0 // pred_check_branch
    %9 = sbr.rel (0) target = $region5
  $region4: #{res_generator1_forward.10} parent=0 // pred_region
    _
  $region5: #{res_generator1_forward.10} parent=0 // pred_fallthru
    _
  // Predicated region
  $region6: #{res_generator1_forward.10} parent=0 // pred_check
    _
  $region7: #{res_generator1_forward.10} parent=0 // pred_check_branch
    %11 = sbr.rel (0) target = $region9
  $region8: #{res_generator1_forward.10} parent=0 // pred_region
    _
  $region9: #{res_generator1_forward.10} parent=0 // pred_fallthru
    _
  // Predicated region
  $region10: #{res_generator1_forward.10} parent=0 // pred_check
    _
  $region11: #{res_generator1_forward.10} parent=0 // pred_check_branch
    %13 = sbr.rel (0) target = $region13
  $region12: #{res_generator1_forward.10} parent=0 // pred_region
    _
  $region13: #{res_generator1_forward.10} parent=0 // pred_fallthru
    _
  %v15 = vld [vmem:[%s0] sm:$0xff]
  %v16 = vld [vmem:[%s0 + $0x8] sm:$0xff]
  %v17 = vld [vmem:[%s0 + $0x10] sm:$0xff]
  %v18 = vld [vmem:[%s0 + $0x18] sm:$0xff]
  %v19 = vld [vmem:[%s1] sm:$0xff]
  %v20 = vld [vmem:[%s2] sm:$0xff]
  %v21 = vmax.f32 %v15, 0.0
  %v22 = vmax.f32 %v16, 0.0
  %v23 = vmax.f32 %v17, 0.0
  %v24 = vmax.f32 %v18, 0.0
  %29 = vrot.lane.b32.xlu0 %v21, 127
  %v30 = vpop.permute.xlu0 %29
  %31 = vrot.lane.b32.xlu0 %v22, 127
  %v32 = vpop.permute.xlu0 %31
  %33 = vrot.lane.b32.xlu0 %v23, 127
  %v34 = vpop.permute.xlu0 %33
  %35 = vrot.lane.b32.xlu0 %v24, 127
  %v36 = vpop.permute.xlu0 %35
  %41 = vrot.lane.b32.xlu0 %v21, 1
  %v42 = vpop.permute.xlu0 %41
  %43 = vrot.lane.b32.xlu0 %v22, 1
  %v44 = vpop.permute.xlu0 %43
  %45 = vrot.lane.b32.xlu0 %v23, 1
  %v46 = vpop.permute.xlu0 %45
  %47 = vrot.lane.b32.xlu0 %v24, 1
  %v48 = vpop.permute.xlu0 %47
  %53 = vrot.lane.b32.xlu0 %v21, 3
  %v54 = vpop.permute.xlu0 %53
  %55 = vrot.lane.b32.xlu0 %v22, 3
  %v56 = vpop.permute.xlu0 %55
  %57 = vrot.lane.b32.xlu0 %v23, 3
  %v58 = vpop.permute.xlu0 %57
  %59 = vrot.lane.b32.xlu0 %v24, 3
  %v60 = vpop.permute.xlu0 %59
  %vm65 = vcmask 7168
  %v66 = vsel %vm65, %v30, %v42
  %v67 = vsel %vm65, %v32, %v44
  %v68 = vsel %vm65, %v34, %v46
  %v69 = vsel %vm65, %v36, %v48
  %vm70 = vcmask 72704
  %v71 = vsel %vm70, %v66, %v54
  %v72 = vsel %vm70, %v67, %v56
  %v73 = vsel %vm70, %v68, %v58
  %v74 = vsel %vm70, %v69, %v60
  %75 = vrot.lane.b32.xlu0 %v21, 119
  %v76 = vpop.permute.xlu0 %75
  %77 = vrot.lane.b32.xlu0 %v22, 119
  %v78 = vpop.permute.xlu0 %77
  %79 = vrot.lane.b32.xlu0 %v23, 119
  %v80 = vpop.permute.xlu0 %79
  %81 = vrot.lane.b32.xlu0 %v24, 119
  %v82 = vpop.permute.xlu0 %81
  %87 = vrot.lane.b32.xlu0 %v21, 121
  %v88 = vpop.permute.xlu0 %87
  %89 = vrot.lane.b32.xlu0 %v22, 121
  %v90 = vpop.permute.xlu0 %89
  %91 = vrot.lane.b32.xlu0 %v23, 121
  %v92 = vpop.permute.xlu0 %91
  %93 = vrot.lane.b32.xlu0 %v24, 121
  %v94 = vpop.permute.xlu0 %93
  %99 = vrot.lane.b32.xlu0 %v21, 123
  %v100 = vpop.permute.xlu0 %99
  %101 = vrot.lane.b32.xlu0 %v22, 123
  %v102 = vpop.permute.xlu0 %101
  %103 = vrot.lane.b32.xlu0 %v23, 123
  %v104 = vpop.permute.xlu0 %103
  %105 = vrot.lane.b32.xlu0 %v24, 123
  %v106 = vpop.permute.xlu0 %105
  %v111 = vsel %vm65, %v76, %v88
  %v112 = vsel %vm65, %v78, %v90
  %v113 = vsel %vm65, %v80, %v92
  %v114 = vsel %vm65, %v82, %v94
  %v115 = vsel %vm70, %v111, %v100
  %v116 = vsel %vm70, %v112, %v102
  %v117 = vsel %vm70, %v113, %v104
  %v118 = vsel %vm70, %v114, %v106
  %123 = vrot.lane.b32.xlu0 %v115, 8
  %v124 = vpop.permute.xlu0 %123
  %125 = vrot.lane.b32.xlu0 %v116, 8
  %v126 = vpop.permute.xlu0 %125
  %127 = vrot.lane.b32.xlu0 %v117, 8
  %v128 = vpop.permute.xlu0 %127
  %129 = vrot.lane.b32.xlu0 %v118, 8
  %v130 = vpop.permute.xlu0 %129
  %vm135 = vcmask 64512
  %v136 = vsel %vm135, %v71, %v124
  %v137 = vsel %vm135, %v72, %v126
  %v138 = vsel %vm135, %v73, %v128
  %v139 = vsel %vm135, %v74, %v130
  %144 = vrot.lane.b32.xlu0 %v71, 127
  %v145 = vpop.permute.xlu0 %144
  %146 = vrot.lane.b32.xlu0 %v72, 127
  %v147 = vpop.permute.xlu0 %146
  %148 = vrot.lane.b32.xlu0 %v73, 127
  %v149 = vpop.permute.xlu0 %148
  %150 = vrot.lane.b32.xlu0 %v74, 127
  %v151 = vpop.permute.xlu0 %150
  %156 = vrot.lane.b32.xlu0 %v115, 7
  %v157 = vpop.permute.xlu0 %156
  %158 = vrot.lane.b32.xlu0 %v116, 7
  %v159 = vpop.permute.xlu0 %158
  %160 = vrot.lane.b32.xlu0 %v117, 7
  %v161 = vpop.permute.xlu0 %160
  %162 = vrot.lane.b32.xlu0 %v118, 7
  %v163 = vpop.permute.xlu0 %162
  %v168 = vsel %vm135, %v145, %v157
  %v169 = vsel %vm135, %v147, %v159
  %v170 = vsel %vm135, %v149, %v161
  %v171 = vsel %vm135, %v151, %v163
  %172 = vrot.lane.b32.xlu0 %v71, 126
  %v173 = vpop.permute.xlu0 %172
  %174 = vrot.lane.b32.xlu0 %v72, 126
  %v175 = vpop.permute.xlu0 %174
  %176 = vrot.lane.b32.xlu0 %v73, 126
  %v177 = vpop.permute.xlu0 %176
  %178 = vrot.lane.b32.xlu0 %v74, 126
  %v179 = vpop.permute.xlu0 %178
  %184 = vrot.lane.b32.xlu0 %v115, 6
  %v185 = vpop.permute.xlu0 %184
  %186 = vrot.lane.b32.xlu0 %v116, 6
  %v187 = vpop.permute.xlu0 %186
  %188 = vrot.lane.b32.xlu0 %v117, 6
  %v189 = vpop.permute.xlu0 %188
  %190 = vrot.lane.b32.xlu0 %v118, 6
  %v191 = vpop.permute.xlu0 %190
  %v196 = vsel %vm135, %v173, %v185
  %v197 = vsel %vm135, %v175, %v187
  %v198 = vsel %vm135, %v177, %v189
  %v199 = vsel %vm135, %v179, %v191
  %v200 = vpack.c.bf16 %v19, %v19
  %v201 = vpack.c.bf16 %v137, %v136
  %v202 = vpack.c.bf16 %v139, %v138
  %v203 = vpack.c.bf16 %v169, %v168
  %v204 = vpack.c.bf16 %v171, %v170
  %v205 = vpack.c.bf16 %v197, %v196
  %v206 = vpack.c.bf16 %v199, %v198
  %208 = vset.pattern.permute.xlu0 0
  %209 = vperm.xlu0 %208, %v20
  %v210 = vpop.permute.xlu0 %209
  %vm212 = vcmask 785408
  %v214 = vsel %vm212, %v200, 0
  %216 = vmatprep.subr.bf16.mxu0 0
  %217 = vmatpush1.bf16.msra.mxu0 %v201
  %218 = vmatprep.subr.bf16.mxu0 0
  %219 = vmatpush1.bf16.msra.mxu0 %v202
  %220 = vmatprep.subr.bf16.mxu0 0
  %221 = vmatpush1.bf16.msra.mxu0 %v203
  %222 = vmatprep.subr.bf16.mxu0 0
  %223 = vmatpush1.bf16.msra.mxu0 %v204
  %224 = vmatprep.subr.bf16.mxu0 0
  %225 = vmatpush1.bf16.msra.mxu0 %v205
  %226 = vmatprep.subr.bf16.mxu0 0
  %227 = vmatpush1.bf16.msra.mxu0 %v206
  %228 = vmatprep.subr.bf16.mxu0 0
  %229 = vmatpush1.bf16.msra.mxu0 0
  %230 = vmatprep.subr.bf16.mxu0 0
  %231 = vmatpush1.bf16.msra.mxu0 0
  %232 = vmatprep.subr.bf16.mxu0 0
  %233 = vmatpush1.bf16.msra.mxu0 0
  %234 = vmatprep.subr.bf16.mxu0 0
  %235 = vmatpush1.bf16.msra.mxu0 0
  %236 = vmatprep.subr.bf16.mxu0 0
  %237 = vmatpush1.bf16.msra.mxu0 0
  %238 = vmatprep.subr.bf16.mxu0 0
  %239 = vmatpush1.bf16.msra.mxu0 0
  %240 = vmatprep.subr.bf16.mxu0 0
  %241 = vmatpush1.bf16.msra.mxu0 0
  %242 = vmatprep.subr.bf16.mxu0 0
  %243 = vmatpush1.bf16.msra.mxu0 0
  %244 = vmatprep.subr.bf16.mxu0 0
  %245 = vmatpush1.bf16.msra.mxu0 0
  %246 = vmatprep.subr.bf16.mxu0 0
  %247 = vmatpush1.bf16.msra.mxu0 0
  %248 = vmatprep.mubr.bf16.mxu0 0
  %249 = vmatmul.mubr.bf16.gmra.mrb[0].mxu0 %v214
  %v250 = vpop.f32.mrb[0].mxu0
  %v251 = vadd.f32 %v210, %v250
  %v252 = vpop.f32.mrb[0].mxu0
  %v253 = vpop.f32.mrb[0].mxu0
  %v254 = vpop.f32.mrb[0].mxu0
  %255 = vdwg.mxu0
  %v256 = vtanh.pop %v251
  %vm257 = vcmask 130048
  %258 = vst.msk [vmem:[%s3] sm:$0xff] %vm257, %v256
  // Predicated region
  $region14: #{res_generator1_forward.10} parent=0 // pred_check
    _
  $region15: #{res_generator1_forward.10} parent=0 // pred_check_branch
    %260 = sbr.rel (0) target = $region17
  $region16: #{res_generator1_forward.10} parent=0 // pred_region
    _
  $region17: #{res_generator1_forward.10} parent=0 // pred_fallthru
    _
  // Predicated region
  $region18: #{res_generator1_forward.10} parent=0 // pred_check
    _
  $region19: #{res_generator1_forward.10} parent=0 // pred_check_branch
    %262 = sbr.rel (0) target = $region21
  $region20: #{res_generator1_forward.10} parent=0 // pred_region
    _
  $region21: #{res_generator1_forward.10} parent=0 // pred_fallthru
    _

// kernel: res_generator1_forward.8
$region0: #{res_generator1_forward.8}
  #allocation0 [shape = 'u32[]', space=smem, size = 0x4, offset = 0x4, fixed_abs, tag = 'smem constant byte address 0x4 - core index']
  #allocation1 [shape = 'u32[144,128]{1,0:T(1,128)}', space=vmem, size = 0x12000, scoped, tag = 'internal scratch']
  %s0 = inlined_call_operand.vmem [shape: f32[16,16], index: 0, kind: input, shape index: {}]
  %s1 = inlined_call_operand.vmem [shape: f32[16,16], index: 1, kind: input, shape index: {}]
  %s2 = inlined_call_operand.vmem [shape: f32[16,1], index: 2, kind: input, shape index: {}]
  %s3 = inlined_call_operand.vmem [shape: f32[16,1], index: 3, kind: input, shape index: {}]
  %s4 = inlined_call_operand.vmem [shape: f32[32,1], index: 4, kind: input, shape index: {}]
  %s5 = inlined_call_operand.vmem [shape: f32[32,1], index: 5, kind: input, shape index: {}]
  %s6 = inlined_call_operand.vmem [shape: f32[32,48], index: 6, kind: input, shape index: {}]
  %s7 = inlined_call_operand.vmem [shape: f32[32,1], index: 7, kind: input, shape index: {}]
  %s8 = inlined_call_operand.vmem [shape: f32[32,96], index: 8, kind: input, shape index: {}]
  %s9 = inlined_call_operand.vmem [shape: f32[32,1], index: 9, kind: input, shape index: {}]
  %s10 = inlined_call_operand.vmem [shape: f32[32,16], index: 10, kind: input, shape index: {}]
  %s11 = inlined_call_operand.vmem [shape: f32[32,1], index: 11, kind: input, shape index: {}]
  %s12 = inlined_call_operand.vmem [shape: f32[32,16], index: 12, kind: output, shape index: {}]
  %s13 = sld [smem:[#allocation0]]
  $region58: #{res_generator1_forward.8} parent=0
    _
  %s15 = ssub.s32 1, %s13
  %s16 = scalar_select 0, %s15, %s13
  // Predicated region
  $region2: #{res_generator1_forward.8} parent=0 // pred_check
    _
  $region3: #{res_generator1_forward.8} parent=0 // pred_check_branch
    %18 = sbr.rel (0) target = $region5
  $region4: #{res_generator1_forward.8} parent=0 // pred_region
    _
  $region5: #{res_generator1_forward.8} parent=0 // pred_fallthru
    _
  // Predicated region
  $region6: #{res_generator1_forward.8} parent=0 // pred_check
    _
  $region7: #{res_generator1_forward.8} parent=0 // pred_check_branch
    %20 = sbr.rel (0) target = $region9
  $region8: #{res_generator1_forward.8} parent=0 // pred_region
    _
  $region9: #{res_generator1_forward.8} parent=0 // pred_fallthru
    _
  // Predicated region
  $region10: #{res_generator1_forward.8} parent=0 // pred_check
    _
  $region11: #{res_generator1_forward.8} parent=0 // pred_check_branch
    %22 = sbr.rel (0) target = $region13
  $region12: #{res_generator1_forward.8} parent=0 // pred_region
    _
  $region13: #{res_generator1_forward.8} parent=0 // pred_fallthru
    _
  // Predicated region
  $region14: #{res_generator1_forward.8} parent=0 // pred_check
    _
  $region15: #{res_generator1_forward.8} parent=0 // pred_check_branch
    %24 = sbr.rel (0) target = $region17
  $region16: #{res_generator1_forward.8} parent=0 // pred_region
    _
  $region17: #{res_generator1_forward.8} parent=0 // pred_fallthru
    _
  // Predicated region
  $region18: #{res_generator1_forward.8} parent=0 // pred_check
    _
  $region19: #{res_generator1_forward.8} parent=0 // pred_check_branch
    %26 = sbr.rel (0) target = $region21
  $region20: #{res_generator1_forward.8} parent=0 // pred_region
    _
  $region21: #{res_generator1_forward.8} parent=0 // pred_fallthru
    _
  // Predicated region
  $region22: #{res_generator1_forward.8} parent=0 // pred_check
    _
  $region23: #{res_generator1_forward.8} parent=0 // pred_check_branch
    %28 = sbr.rel (0) target = $region25
  $region24: #{res_generator1_forward.8} parent=0 // pred_region
    _
  $region25: #{res_generator1_forward.8} parent=0 // pred_fallthru
    _
  // Predicated region
  $region26: #{res_generator1_forward.8} parent=0 // pred_check
    _
  $region27: #{res_generator1_forward.8} parent=0 // pred_check_branch
    %30 = sbr.rel (0) target = $region29
  $region28: #{res_generator1_forward.8} parent=0 // pred_region
    _
  $region29: #{res_generator1_forward.8} parent=0 // pred_fallthru
    _
  // Predicated region
  $region30: #{res_generator1_forward.8} parent=0 // pred_check
    _
  $region31: #{res_generator1_forward.8} parent=0 // pred_check_branch
    %32 = sbr.rel (0) target = $region33
  $region32: #{res_generator1_forward.8} parent=0 // pred_region
    _
  $region33: #{res_generator1_forward.8} parent=0 // pred_fallthru
    _
  // Predicated region
  $region34: #{res_generator1_forward.8} parent=0 // pred_check
    _
  $region35: #{res_generator1_forward.8} parent=0 // pred_check_branch
    %34 = sbr.rel (0) target = $region37
  $region36: #{res_generator1_forward.8} parent=0 // pred_region
    _
  $region37: #{res_generator1_forward.8} parent=0 // pred_fallthru
    _
  // Predicated region
  $region38: #{res_generator1_forward.8} parent=0 // pred_check
    _
  $region39: #{res_generator1_forward.8} parent=0 // pred_check_branch
    %36 = sbr.rel (0) target = $region41
  $region40: #{res_generator1_forward.8} parent=0 // pred_region
    _
  $region41: #{res_generator1_forward.8} parent=0 // pred_fallthru
    _
  // Predicated region
  $region42: #{res_generator1_forward.8} parent=0 // pred_check
    _
  $region43: #{res_generator1_forward.8} parent=0 // pred_check_branch
    %38 = sbr.rel (0) target = $region45
  $region44: #{res_generator1_forward.8} parent=0 // pred_region
    _
  $region45: #{res_generator1_forward.8} parent=0 // pred_fallthru
    _
  // Predicated region
  $region46: #{res_generator1_forward.8} parent=0 // pred_check
    _
  $region47: #{res_generator1_forward.8} parent=0 // pred_check_branch
    %40 = sbr.rel (0) target = $region49
  $region48: #{res_generator1_forward.8} parent=0 // pred_region
    _
  $region49: #{res_generator1_forward.8} parent=0 // pred_fallthru
    _
  %v42 = vld [vmem:[%s0] sm:$0xff]
  %v43 = vld [vmem:[%s0 + $0x8] sm:$0xff]
  %v44 = vld [vmem:[%s1] sm:$0xff]
  %v45 = vld [vmem:[%s1 + $0x8] sm:$0xff]
  %v46 = vadd.f32 %v42, %v44
  %v47 = vadd.f32 %v43, %v45
  %v48 = vld [vmem:[%s2] sm:$0xff]
  %v49 = vld [vmem:[%s2 + $0x8] sm:$0xff]
  %v50 = vld [vmem:[%s3] sm:$0xff]
  %v51 = vld [vmem:[%s3 + $0x8] sm:$0xff]
  %vm52 = vcmask 130048
  %v53 = vsel %vm52, %v46, 0.0
  %54 = vadd.xlane.f32.xlu0 %v53
  %v55 = vpop.xlane.xlu0 %54
  %v56 = vsel %vm52, %v47, 0.0
  %57 = vadd.xlane.f32.xlu0 %v56
  %v58 = vpop.xlane.xlu0 %57
  %v59 = vrcp.pop 16.0
  %v60 = vmul.f32 %v55, %v59
  %v61 = vmul.f32 %v58, %v59
  %v62 = vsub.f32 %v46, %v60
  %v63 = vsub.f32 %v47, %v61
  %v64 = vmul.f32 %v62, %v62
  %v65 = vmul.f32 %v63, %v63
  %v66 = vsel %vm52, %v64, 0.0
  %67 = vadd.xlane.f32.xlu0 %v66
  %v68 = vpop.xlane.xlu0 %67
  %v69 = vsel %vm52, %v65, 0.0
  %70 = vadd.xlane.f32.xlu0 %v69
  %v71 = vpop.xlane.xlu0 %70
  %v72 = vmul.f32 %v68, %v59
  %v73 = vmul.f32 %v71, %v59
  %v74 = vadd.f32 %v72, 1e-05
  %v75 = vadd.f32 %v73, 1e-05
  %v76 = vrsqrt.pop %v74
  %v77 = vrsqrt.pop %v75
  %v78 = vmul.f32 %v62, %v76
  %v79 = vmul.f32 %v63, %v77
  %81 = vset.pattern.permute.xlu0 0
  %82 = vperm.xlu0 %81, %v48
  %v83 = vpop.permute.xlu0 %82
  %86 = vset.pattern.permute.xlu0 0
  %87 = vperm.xlu0 %86, %v49
  %v88 = vpop.permute.xlu0 %87
  %v90 = vmul.f32 %v78, %v83
  %v91 = vmul.f32 %v79, %v88
  %93 = vset.pattern.permute.xlu0 0
  %94 = vperm.xlu0 %93, %v50
  %v95 = vpop.permute.xlu0 %94
  %98 = vset.pattern.permute.xlu0 0
  %99 = vperm.xlu0 %98, %v51
  %v100 = vpop.permute.xlu0 %99
  %v102 = vadd.f32 %v90, %v95
  %v103 = vadd.f32 %v91, %v100
  %v104 = vld [vmem:[%s6] sm:$0xff]
  %v105 = vld [vmem:[%s6 + $0x8] sm:$0xff]
  %v106 = vld [vmem:[%s6 + $0x10] sm:$0xff]
  %v107 = vld [vmem:[%s6 + $0x18] sm:$0xff]
  %v108 = vld [vmem:[%s7] sm:$0xff]
  %v109 = vld [vmem:[%s7 + $0x8] sm:$0xff]
  %v110 = vld [vmem:[%s7 + $0x10] sm:$0xff]
  %v111 = vld [vmem:[%s7 + $0x18] sm:$0xff]
  %v112 = vmax.f32 %v102, 0.0
  %v113 = vmax.f32 %v103, 0.0
  %116 = vrot.lane.b32.xlu0 %v112, 1
  %v117 = vpop.permute.xlu0 %116
  %118 = vrot.lane.b32.xlu0 %v113, 1
  %v119 = vpop.permute.xlu0 %118
  %vm122 = vcmask 7168
  %v123 = vsel %vm122, 0.0, %v117
  %v124 = vsel %vm122, 0.0, %v119
  %vm125 = vcmask 72704
  %v126 = vsel %vm125, %v123, 0.0
  %v127 = vsel %vm125, %v124, 0.0
  %128 = vrot.lane.b32.xlu0 %v112, 121
  %v129 = vpop.permute.xlu0 %128
  %130 = vrot.lane.b32.xlu0 %v113, 121
  %v131 = vpop.permute.xlu0 %130
  %v134 = vsel %vm122, 0.0, %v129
  %v135 = vsel %vm122, 0.0, %v131
  %v136 = vsel %vm125, %v134, 0.0
  %v137 = vsel %vm125, %v135, 0.0
  %140 = vrot.lane.b32.xlu0 %v136, 8
  %v141 = vpop.permute.xlu0 %140
  %142 = vrot.lane.b32.xlu0 %v137, 8
  %v143 = vpop.permute.xlu0 %142
  %vm146 = vcmask 64512
  %v147 = vsel %vm146, %v126, %v141
  %v148 = vsel %vm146, %v127, %v143
  %151 = vrot.lane.b32.xlu0 %v126, 127
  %v152 = vpop.permute.xlu0 %151
  %153 = vrot.lane.b32.xlu0 %v127, 127
  %v154 = vpop.permute.xlu0 %153
  %157 = vrot.lane.b32.xlu0 %v136, 7
  %v158 = vpop.permute.xlu0 %157
  %159 = vrot.lane.b32.xlu0 %v137, 7
  %v160 = vpop.permute.xlu0 %159
  %v163 = vsel %vm146, %v152, %v158
  %v164 = vsel %vm146, %v154, %v160
  %165 = vrot.lane.b32.xlu0 %v126, 126
  %v166 = vpop.permute.xlu0 %165
  %167 = vrot.lane.b32.xlu0 %v127, 126
  %v168 = vpop.permute.xlu0 %167
  %171 = vrot.lane.b32.xlu0 %v136, 6
  %v172 = vpop.permute.xlu0 %171
  %173 = vrot.lane.b32.xlu0 %v137, 6
  %v174 = vpop.permute.xlu0 %173
  %v177 = vsel %vm146, %v166, %v172
  %v178 = vsel %vm146, %v168, %v174
  %v179 = vpack.c.bf16 %v105, %v104
  %v180 = vpack.c.bf16 %v107, %v106
  %v181 = vpack.c.bf16 %v148, %v147
  %v182 = vpack.c.bf16 %v164, %v163
  %v183 = vpack.c.bf16 %v178, %v177
  %185 = vset.pattern.permute.xlu0 0
  %186 = vperm.xlu0 %185, %v108
  %v187 = vpop.permute.xlu0 %186
  %190 = vset.pattern.permute.xlu0 0
  %191 = vperm.xlu0 %190, %v109
  %v192 = vpop.permute.xlu0 %191
  %195 = vset.pattern.permute.xlu0 0
  %196 = vperm.xlu0 %195, %v110
  %v197 = vpop.permute.xlu0 %196
  %200 = vset.pattern.permute.xlu0 0
  %201 = vperm.xlu0 %200, %v111
  %v202 = vpop.permute.xlu0 %201
  %vm204 = vcmask 392192
  %v206 = vsel %vm204, %v179, 0
  %v209 = vsel %vm204, %v180, 0
  %211 = vmatprep.subr.bf16.mxu0 0
  %212 = vmatpush1.bf16.msra.mxu0 %v181
  %213 = vmatprep.subr.bf16.mxu0 0
  %214 = vmatpush1.bf16.msra.mxu0 %v182
  %215 = vmatprep.subr.bf16.mxu0 0
  %216 = vmatpush1.bf16.msra.mxu0 %v183
  %217 = vmatprep.subr.bf16.mxu0 0
  %218 = vmatpush1.bf16.msra.mxu0 0
  %219 = vmatprep.subr.bf16.mxu0 0
  %220 = vmatpush1.bf16.msra.mxu0 0
  %221 = vmatprep.subr.bf16.mxu0 0
  %222 = vmatpush1.bf16.msra.mxu0 0
  %223 = vmatprep.subr.bf16.mxu0 0
  %224 = vmatpush1.bf16.msra.mxu0 0
  %225 = vmatprep.subr.bf16.mxu0 0
  %226 = vmatpush1.bf16.msra.mxu0 0
  %227 = vmatprep.subr.bf16.mxu0 0
  %228 = vmatpush1.bf16.msra.mxu0 0
  %229 = vmatprep.subr.bf16.mxu0 0
  %230 = vmatpush1.bf16.msra.mxu0 0
  %231 = vmatprep.subr.bf16.mxu0 0
  %232 = vmatpush1.bf16.msra.mxu0 0
  %233 = vmatprep.subr.bf16.mxu0 0
  %234 = vmatpush1.bf16.msra.mxu0 0
  %235 = vmatprep.subr.bf16.mxu0 0
  %236 = vmatpush1.bf16.msra.mxu0 0
  %237 = vmatprep.subr.bf16.mxu0 0
  %238 = vmatpush1.bf16.msra.mxu0 0
  %239 = vmatprep.subr.bf16.mxu0 0
  %240 = vmatpush1.bf16.msra.mxu0 0
  %241 = vmatprep.subr.bf16.mxu0 0
  %242 = vmatpush1.bf16.msra.mxu0 0
  %243 = vmatprep.mubr.bf16.mxu0 0
  %244 = vmatmul.mubr.bf16.gmra.mrb[0].mxu0 %v206
  %v245 = vpop.f32.mrb[0].mxu0
  %v246 = vadd.f32 %v187, %v245
  %v247 = vpop.f32.mrb[0].mxu0
  %v248 = vpop.f32.mrb[0].mxu0
  %v249 = vadd.f32 %v192, %v248
  %v250 = vpop.f32.mrb[0].mxu0
  %251 = vmatprep.mubr.bf16.mxu0 0
  %252 = vmatmul.mubr.bf16.gmra.mrb[0].mxu0 %v209
  %v253 = vpop.f32.mrb[0].mxu0
  %v254 = vadd.f32 %v197, %v253
  %v255 = vpop.f32.mrb[0].mxu0
  %v256 = vpop.f32.mrb[0].mxu0
  %v257 = vadd.f32 %v202, %v256
  %v258 = vpop.f32.mrb[0].mxu0
  %259 = vdwg.mxu0
  %v260 = vld [vmem:[%s4] sm:$0xff]
  %v261 = vld [vmem:[%s4 + $0x8] sm:$0xff]
  %v262 = vld [vmem:[%s4 + $0x10] sm:$0xff]
  %v263 = vld [vmem:[%s4 + $0x18] sm:$0xff]
  %v264 = vld [vmem:[%s5] sm:$0xff]
  %v265 = vld [vmem:[%s5 + $0x8] sm:$0xff]
  %v266 = vld [vmem:[%s5 + $0x10] sm:$0xff]
  %v267 = vld [vmem:[%s5 + $0x18] sm:$0xff]
  %v268 = vsel %vm52, %v246, 0.0
  %269 = vadd.xlane.f32.xlu0 %v268
  %v270 = vpop.xlane.xlu0 %269
  %v271 = vsel %vm52, %v249, 0.0
  %272 = vadd.xlane.f32.xlu0 %v271
  %v273 = vpop.xlane.xlu0 %272
  %v274 = vsel %vm52, %v254, 0.0
  %275 = vadd.xlane.f32.xlu0 %v274
  %v276 = vpop.xlane.xlu0 %275
  %v277 = vsel %vm52, %v257, 0.0
  %278 = vadd.xlane.f32.xlu0 %v277
  %v279 = vpop.xlane.xlu0 %278
  %v280 = vmul.f32 %v270, %v59
  %v281 = vmul.f32 %v273, %v59
  %v282 = vmul.f32 %v276, %v59
  %v283 = vmul.f32 %v279, %v59
  %v284 = vsub.f32 %v246, %v280
  %v285 = vsub.f32 %v249, %v281
  %v286 = vsub.f32 %v254, %v282
  %v287 = vsub.f32 %v257, %v283
  %v288 = vmul.f32 %v284, %v284
  %v289 = vmul.f32 %v285, %v285
  %v290 = vmul.f32 %v286, %v286
  %v291 = vmul.f32 %v287, %v287
  %v292 = vsel %vm52, %v288, 0.0
  %293 = vadd.xlane.f32.xlu0 %v292
  %v294 = vpop.xlane.xlu0 %293
  %v295 = vsel %vm52, %v289, 0.0
  %296 = vadd.xlane.f32.xlu0 %v295
  %v297 = vpop.xlane.xlu0 %296
  %v298 = vsel %vm52, %v290, 0.0
  %299 = vadd.xlane.f32.xlu0 %v298
  %v300 = vpop.xlane.xlu0 %299
  %v301 = vsel %vm52, %v291, 0.0
  %302 = vadd.xlane.f32.xlu0 %v301
  %v303 = vpop.xlane.xlu0 %302
  %v304 = vmul.f32 %v294, %v59
  %v305 = vmul.f32 %v297, %v59
  %v306 = vmul.f32 %v300, %v59
  %v307 = vmul.f32 %v303, %v59
  %v308 = vadd.f32 %v304, 1e-05
  %v309 = vadd.f32 %v305, 1e-05
  %v310 = vadd.f32 %v306, 1e-05
  %v311 = vadd.f32 %v307, 1e-05
  %v312 = vrsqrt.pop %v308
  %v313 = vrsqrt.pop %v309
  %v314 = vrsqrt.pop %v310
  %v315 = vrsqrt.pop %v311
  %v316 = vmul.f32 %v284, %v312
  %v317 = vmul.f32 %v285, %v313
  %v318 = vmul.f32 %v286, %v314
  %v319 = vmul.f32 %v287, %v315
  %321 = vset.pattern.permute.xlu0 0
  %322 = vperm.xlu0 %321, %v260
  %v323 = vpop.permute.xlu0 %322
  %326 = vset.pattern.permute.xlu0 0
  %327 = vperm.xlu0 %326, %v261
  %v328 = vpop.permute.xlu0 %327
  %331 = vset.pattern.permute.xlu0 0
  %332 = vperm.xlu0 %331, %v262
  %v333 = vpop.permute.xlu0 %332
  %336 = vset.pattern.permute.xlu0 0
  %337 = vperm.xlu0 %336, %v263
  %v338 = vpop.permute.xlu0 %337
  %v340 = vmul.f32 %v316, %v323
  %v341 = vmul.f32 %v317, %v328
  %v342 = vmul.f32 %v318, %v333
  %v343 = vmul.f32 %v319, %v338
  %345 = vset.pattern.permute.xlu0 0
  %346 = vperm.xlu0 %345, %v264
  %v347 = vpop.permute.xlu0 %346
  %350 = vset.pattern.permute.xlu0 0
  %351 = vperm.xlu0 %350, %v265
  %v352 = vpop.permute.xlu0 %351
  %355 = vset.pattern.permute.xlu0 0
  %356 = vperm.xlu0 %355, %v266
  %v357 = vpop.permute.xlu0 %356
  %360 = vset.pattern.permute.xlu0 0
  %361 = vperm.xlu0 %360, %v267
  %v362 = vpop.permute.xlu0 %361
  %v364 = vadd.f32 %v340, %v347
  %v365 = vadd.f32 %v341, %v352
  %v366 = vadd.f32 %v342, %v357
  %v367 = vadd.f32 %v343, %v362
  %v368 = vld [vmem:[%s8] sm:$0xff]
  %v369 = vld [vmem:[%s8 + $0x8] sm:$0xff]
  %v370 = vld [vmem:[%s8 + $0x10] sm:$0xff]
  %v371 = vld [vmem:[%s8 + $0x18] sm:$0xff]
  %v372 = vld [vmem:[%s9] sm:$0xff]
  %v373 = vld [vmem:[%s9 + $0x8] sm:$0xff]
  %v374 = vld [vmem:[%s9 + $0x10] sm:$0xff]
  %v375 = vld [vmem:[%s9 + $0x18] sm:$0xff]
  %v376 = vmax.f32 %v364, 0.0
  %v377 = vmax.f32 %v365, 0.0
  %v378 = vmax.f32 %v366, 0.0
  %v379 = vmax.f32 %v367, 0.0
  %384 = vrot.lane.b32.xlu0 %v376, 1
  %v385 = vpop.permute.xlu0 %384
  %386 = vrot.lane.b32.xlu0 %v377, 1
  %v387 = vpop.permute.xlu0 %386
  %388 = vrot.lane.b32.xlu0 %v378, 1
  %v389 = vpop.permute.xlu0 %388
  %390 = vrot.lane.b32.xlu0 %v379, 1
  %v391 = vpop.permute.xlu0 %390
  %v396 = vsel %vm122, 0.0, %v385
  %v397 = vsel %vm122, 0.0, %v387
  %v398 = vsel %vm122, 0.0, %v389
  %v399 = vsel %vm122, 0.0, %v391
  %v400 = vsel %vm125, %v396, 0.0
  %v401 = vsel %vm125, %v397, 0.0
  %v402 = vsel %vm125, %v398, 0.0
  %v403 = vsel %vm125, %v399, 0.0
  %404 = vrot.lane.b32.xlu0 %v376, 121
  %v405 = vpop.permute.xlu0 %404
  %406 = vrot.lane.b32.xlu0 %v377, 121
  %v407 = vpop.permute.xlu0 %406
  %408 = vrot.lane.b32.xlu0 %v378, 121
  %v409 = vpop.permute.xlu0 %408
  %410 = vrot.lane.b32.xlu0 %v379, 121
  %v411 = vpop.permute.xlu0 %410
  %v416 = vsel %vm122, 0.0, %v405
  %v417 = vsel %vm122, 0.0, %v407
  %v418 = vsel %vm122, 0.0, %v409
  %v419 = vsel %vm122, 0.0, %v411
  %v420 = vsel %vm125, %v416, 0.0
  %v421 = vsel %vm125, %v417, 0.0
  %v422 = vsel %vm125, %v418, 0.0
  %v423 = vsel %vm125, %v419, 0.0
  %428 = vrot.lane.b32.xlu0 %v420, 8
  %v429 = vpop.permute.xlu0 %428
  %430 = vrot.lane.b32.xlu0 %v421, 8
  %v431 = vpop.permute.xlu0 %430
  %432 = vrot.lane.b32.xlu0 %v422, 8
  %v433 = vpop.permute.xlu0 %432
  %434 = vrot.lane.b32.xlu0 %v423, 8
  %v435 = vpop.permute.xlu0 %434
  %v440 = vsel %vm146, %v400, %v429
  %v441 = vsel %vm146, %v401, %v431
  %v442 = vsel %vm146, %v402, %v433
  %v443 = vsel %vm146, %v403, %v435
  %448 = vrot.lane.b32.xlu0 %v400, 127
  %v449 = vpop.permute.xlu0 %448
  %450 = vrot.lane.b32.xlu0 %v401, 127
  %v451 = vpop.permute.xlu0 %450
  %452 = vrot.lane.b32.xlu0 %v402, 127
  %v453 = vpop.permute.xlu0 %452
  %454 = vrot.lane.b32.xlu0 %v403, 127
  %v455 = vpop.permute.xlu0 %454
  %460 = vrot.lane.b32.xlu0 %v420, 7
  %v461 = vpop.permute.xlu0 %460
  %462 = vrot.lane.b32.xlu0 %v421, 7
  %v463 = vpop.permute.xlu0 %462
  %464 = vrot.lane.b32.xlu0 %v422, 7
  %v465 = vpop.permute.xlu0 %464
  %466 = vrot.lane.b32.xlu0 %v423, 7
  %v467 = vpop.permute.xlu0 %466
  %v472 = vsel %vm146, %v449, %v461
  %v473 = vsel %vm146, %v451, %v463
  %v474 = vsel %vm146, %v453, %v465
  %v475 = vsel %vm146, %v455, %v467
  %476 = vrot.lane.b32.xlu0 %v400, 126
  %v477 = vpop.permute.xlu0 %476
  %478 = vrot.lane.b32.xlu0 %v401, 126
  %v479 = vpop.permute.xlu0 %478
  %480 = vrot.lane.b32.xlu0 %v402, 126
  %v481 = vpop.permute.xlu0 %480
  %482 = vrot.lane.b32.xlu0 %v403, 126
  %v483 = vpop.permute.xlu0 %482
  %488 = vrot.lane.b32.xlu0 %v420, 6
  %v489 = vpop.permute.xlu0 %488
  %490 = vrot.lane.b32.xlu0 %v421, 6
  %v491 = vpop.permute.xlu0 %490
  %492 = vrot.lane.b32.xlu0 %v422, 6
  %v493 = vpop.permute.xlu0 %492
  %494 = vrot.lane.b32.xlu0 %v423, 6
  %v495 = vpop.permute.xlu0 %494
  %v500 = vsel %vm146, %v477, %v489
  %v501 = vsel %vm146, %v479, %v491
  %v502 = vsel %vm146, %v481, %v493
  %v503 = vsel %vm146, %v483, %v495
  %v504 = vpack.c.bf16 %v369, %v368
  %v505 = vpack.c.bf16 %v371, %v370
  %v506 = vpack.c.bf16 %v441, %v440
  %v507 = vpack.c.bf16 %v443, %v442
  %v508 = vpack.c.bf16 %v473, %v472
  %v509 = vpack.c.bf16 %v475, %v474
  %v510 = vpack.c.bf16 %v501, %v500
  %v511 = vpack.c.bf16 %v503, %v502
  %513 = vset.pattern.permute.xlu0 0
  %514 = vperm.xlu0 %513, %v372
  %v515 = vpop.permute.xlu0 %514
  %518 = vset.pattern.permute.xlu0 0
  %519 = vperm.xlu0 %518, %v373
  %v520 = vpop.permute.xlu0 %519
  %523 = vset.pattern.permute.xlu0 0
  %524 = vperm.xlu0 %523, %v374
  %v525 = vpop.permute.xlu0 %524
  %528 = vset.pattern.permute.xlu0 0
  %529 = vperm.xlu0 %528, %v375
  %v530 = vpop.permute.xlu0 %529
  %vm532 = vcmask 785408
  %v534 = vsel %vm532, %v504, 0
  %v537 = vsel %vm532, %v505, 0
  %539 = vmatprep.subr.bf16.mxu0 0
  %540 = vmatpush1.bf16.msra.mxu0 %v506
  %541 = vmatprep.subr.bf16.mxu0 0
  %542 = vmatpush1.bf16.msra.mxu0 %v507
  %543 = vmatprep.subr.bf16.mxu0 0
  %544 = vmatpush1.bf16.msra.mxu0 %v508
  %545 = vmatprep.subr.bf16.mxu0 0
  %546 = vmatpush1.bf16.msra.mxu0 %v509
  %547 = vmatprep.subr.bf16.mxu0 0
  %548 = vmatpush1.bf16.msra.mxu0 %v510
  %549 = vmatprep.subr.bf16.mxu0 0
  %550 = vmatpush1.bf16.msra.mxu0 %v511
  %551 = vmatprep.subr.bf16.mxu0 0
  %552 = vmatpush1.bf16.msra.mxu0 0
  %553 = vmatprep.subr.bf16.mxu0 0
  %554 = vmatpush1.bf16.msra.mxu0 0
  %555 = vmatprep.subr.bf16.mxu0 0
  %556 = vmatpush1.bf16.msra.mxu0 0
  %557 = vmatprep.subr.bf16.mxu0 0
  %558 = vmatpush1.bf16.msra.mxu0 0
  %559 = vmatprep.subr.bf16.mxu0 0
  %560 = vmatpush1.bf16.msra.mxu0 0
  %561 = vmatprep.subr.bf16.mxu0 0
  %562 = vmatpush1.bf16.msra.mxu0 0
  %563 = vmatprep.subr.bf16.mxu0 0
  %564 = vmatpush1.bf16.msra.mxu0 0
  %565 = vmatprep.subr.bf16.mxu0 0
  %566 = vmatpush1.bf16.msra.mxu0 0
  %567 = vmatprep.subr.bf16.mxu0 0
  %568 = vmatpush1.bf16.msra.mxu0 0
  %569 = vmatprep.subr.bf16.mxu0 0
  %570 = vmatpush1.bf16.msra.mxu0 0
  %571 = vmatprep.mubr.bf16.mxu0 0
  %572 = vmatmul.mubr.bf16.gmra.mrb[0].mxu0 %v534
  %v573 = vpop.f32.mrb[0].mxu0
  %v574 = vadd.f32 %v515, %v573
  %v575 = vpop.f32.mrb[0].mxu0
  %v576 = vpop.f32.mrb[0].mxu0
  %v577 = vadd.f32 %v520, %v576
  %v578 = vpop.f32.mrb[0].mxu0
  %579 = vmatprep.mubr.bf16.mxu0 0
  %580 = vmatmul.mubr.bf16.gmra.mrb[0].mxu0 %v537
  %v581 = vpop.f32.mrb[0].mxu0
  %v582 = vadd.f32 %v525, %v581
  %v583 = vpop.f32.mrb[0].mxu0
  %v584 = vpop.f32.mrb[0].mxu0
  %v585 = vadd.f32 %v530, %v584
  %v586 = vpop.f32.mrb[0].mxu0
  %587 = vdwg.mxu0
  %v588 = vld [vmem:[%s10] sm:$0xff]
  %v589 = vld [vmem:[%s10 + $0x8] sm:$0xff]
  %v590 = vld [vmem:[%s10 + $0x10] sm:$0xff]
  %v591 = vld [vmem:[%s10 + $0x18] sm:$0xff]
  %v592 = vpack.c.bf16 %v589, %v588
  %v593 = vpack.c.bf16 %v591, %v590
  %v594 = vpack.c.bf16 %v47, %v46
  %v595 = vld [vmem:[%s11] sm:$0xff]
  %v596 = vld [vmem:[%s11 + $0x8] sm:$0xff]
  %v597 = vld [vmem:[%s11 + $0x10] sm:$0xff]
  %v598 = vld [vmem:[%s11 + $0x18] sm:$0xff]
  %600 = vset.pattern.permute.xlu0 0
  %601 = vperm.xlu0 %600, %v595
  %v602 = vpop.permute.xlu0 %601
  %605 = vset.pattern.permute.xlu0 0
  %606 = vperm.xlu0 %605, %v596
  %v607 = vpop.permute.xlu0 %606
  %610 = vset.pattern.permute.xlu0 0
  %611 = vperm.xlu0 %610, %v597
  %v612 = vpop.permute.xlu0 %611
  %615 = vset.pattern.permute.xlu0 0
  %616 = vperm.xlu0 %615, %v598
  %v617 = vpop.permute.xlu0 %616
  %v620 = vsel %vm52, %v592, 0
  %v623 = vsel %vm52, %v593, 0
  %625 = vmatprep.subr.bf16.mxu0 0
  %626 = vmatpush1.bf16.msra.mxu0 %v594
  %627 = vmatprep.subr.bf16.mxu0 0
  %628 = vmatpush1.bf16.msra.mxu0 0
  %629 = vmatprep.subr.bf16.mxu0 0
  %630 = vmatpush1.bf16.msra.mxu0 0
  %631 = vmatprep.subr.bf16.mxu0 0
  %632 = vmatpush1.bf16.msra.mxu0 0
  %633 = vmatprep.subr.bf16.mxu0 0
  %634 = vmatpush1.bf16.msra.mxu0 0
  %635 = vmatprep.subr.bf16.mxu0 0
  %636 = vmatpush1.bf16.msra.mxu0 0
  %637 = vmatprep.subr.bf16.mxu0 0
  %638 = vmatpush1.bf16.msra.mxu0 0
  %639 = vmatprep.subr.bf16.mxu0 0
  %640 = vmatpush1.bf16.msra.mxu0 0
  %641 = vmatprep.subr.bf16.mxu0 0
  %642 = vmatpush1.bf16.msra.mxu0 0
  %643 = vmatprep.subr.bf16.mxu0 0
  %644 = vmatpush1.bf16.msra.mxu0 0
  %645 = vmatprep.subr.bf16.mxu0 0
  %646 = vmatpush1.bf16.msra.mxu0 0
  %647 = vmatprep.subr.bf16.mxu0 0
  %648 = vmatpush1.bf16.msra.mxu0 0
  %649 = vmatprep.subr.bf16.mxu0 0
  %650 = vmatpush1.bf16.msra.mxu0 0
  %651 = vmatprep.subr.bf16.mxu0 0
  %652 = vmatpush1.bf16.msra.mxu0 0
  %653 = vmatprep.subr.bf16.mxu0 0
  %654 = vmatpush1.bf16.msra.mxu0 0
  %655 = vmatprep.subr.bf16.mxu0 0
  %656 = vmatpush1.bf16.msra.mxu0 0
  %657 = vmatprep.mubr.bf16.mxu0 0
  %658 = vmatmul.mubr.bf16.gmra.mrb[0].mxu0 %v620
  %v659 = vpop.f32.mrb[0].mxu0
  %v660 = vadd.f32 %v602, %v659
  %v661 = vpop.f32.mrb[0].mxu0
  %v662 = vpop.f32.mrb[0].mxu0
  %v663 = vadd.f32 %v607, %v662
  %v664 = vpop.f32.mrb[0].mxu0
  %665 = vmatprep.mubr.bf16.mxu0 0
  %666 = vmatmul.mubr.bf16.gmra.mrb[0].mxu0 %v623
  %v667 = vpop.f32.mrb[0].mxu0
  %v668 = vadd.f32 %v612, %v667
  %v669 = vpop.f32.mrb[0].mxu0
  %v670 = vpop.f32.mrb[0].mxu0
  %v671 = vadd.f32 %v617, %v670
  %v672 = vpop.f32.mrb[0].mxu0
  %673 = vdwg.mxu0
  %v674 = vadd.f32 %v574, %v660
  %v675 = vadd.f32 %v577, %v663
  %v676 = vadd.f32 %v582, %v668
  %v677 = vadd.f32 %v585, %v671
  %678 = vst.msk [vmem:[%s12] sm:$0xff] %vm52, %v674
  %679 = vst.msk [vmem:[%s12 + $0x8] sm:$0xff] %vm52, %v675
  %680 = vst.msk [vmem:[%s12 + $0x10] sm:$0xff] %vm52, %v676
  %681 = vst.msk [vmem:[%s12 + $0x18] sm:$0xff] %vm52, %v677
  // Predicated region
  $region50: #{res_generator1_forward.8} parent=0 // pred_check
    _
  $region51: #{res_generator1_forward.8} parent=0 // pred_check_branch
    %683 = sbr.rel (0) target = $region53
  $region52: #{res_generator1_forward.8} parent=0 // pred_region
    _
  $region53: #{res_generator1_forward.8} parent=0 // pred_fallthru
    _
  // Predicated region
  $region54: #{res_generator1_forward.8} parent=0 // pred_check
    _
  $region55: #{res_generator1_forward.8} parent=0 // pred_check_branch
    %685 = sbr.rel (0) target = $region57
  $region56: #{res_generator1_forward.8} parent=0 // pred_region
    _
  $region57: #{res_generator1_forward.8} parent=0 // pred_fallthru
    _

// kernel: res_generator1_forward.9
$region0: #{res_generator1_forward.9}
  #allocation0 [shape = 'u32[]', space=smem, size = 0x4, offset = 0x4, fixed_abs, tag = 'smem constant byte address 0x4 - core index']
  #allocation1 [shape = 'u32[144,128]{1,0:T(1,128)}', space=vmem, size = 0x12000, scoped, tag = 'internal scratch']
  %s0 = inlined_call_operand.vmem [shape: f32[32,16], index: 0, kind: input, shape index: {}]
  %s1 = inlined_call_operand.vmem [shape: f32[32,96], index: 1, kind: input, shape index: {}]
  %s2 = inlined_call_operand.vmem [shape: f32[32,1], index: 2, kind: input, shape index: {}]
  %s3 = inlined_call_operand.vmem [shape: f32[32,96], index: 3, kind: input, shape index: {}]
  %s4 = inlined_call_operand.vmem [shape: f32[32,1], index: 4, kind: input, shape index: {}]
  %s5 = inlined_call_operand.vmem [shape: f32[32,32], index: 5, kind: input, shape index: {}]
  %s6 = inlined_call_operand.vmem [shape: f32[32,1], index: 6, kind: input, shape index: {}]
  %s7 = inlined_call_operand.vmem [shape: f32[32,16], index: 7, kind: output, shape index: {}]
  %s8 = sld [smem:[#allocation0]]
  $region38: #{res_generator1_forward.9} parent=0
    _
  %s10 = ssub.s32 1, %s8
  %s11 = scalar_select 0, %s10, %s8
  // Predicated region
  $region2: #{res_generator1_forward.9} parent=0 // pred_check
    _
  $region3: #{res_generator1_forward.9} parent=0 // pred_check_branch
    %13 = sbr.rel (0) target = $region5
  $region4: #{res_generator1_forward.9} parent=0 // pred_region
    _
  $region5: #{res_generator1_forward.9} parent=0 // pred_fallthru
    _
  // Predicated region
  $region6: #{res_generator1_forward.9} parent=0 // pred_check
    _
  $region7: #{res_generator1_forward.9} parent=0 // pred_check_branch
    %15 = sbr.rel (0) target = $region9
  $region8: #{res_generator1_forward.9} parent=0 // pred_region
    _
  $region9: #{res_generator1_forward.9} parent=0 // pred_fallthru
    _
  // Predicated region
  $region10: #{res_generator1_forward.9} parent=0 // pred_check
    _
  $region11: #{res_generator1_forward.9} parent=0 // pred_check_branch
    %17 = sbr.rel (0) target = $region13
  $region12: #{res_generator1_forward.9} parent=0 // pred_region
    _
  $region13: #{res_generator1_forward.9} parent=0 // pred_fallthru
    _
  // Predicated region
  $region14: #{res_generator1_forward.9} parent=0 // pred_check
    _
  $region15: #{res_generator1_forward.9} parent=0 // pred_check_branch
    %19 = sbr.rel (0) target = $region17
  $region16: #{res_generator1_forward.9} parent=0 // pred_region
    _
  $region17: #{res_generator1_forward.9} parent=0 // pred_fallthru
    _
  // Predicated region
  $region18: #{res_generator1_forward.9} parent=0 // pred_check
    _
  $region19: #{res_generator1_forward.9} parent=0 // pred_check_branch
    %21 = sbr.rel (0) target = $region21
  $region20: #{res_generator1_forward.9} parent=0 // pred_region
    _
  $region21: #{res_generator1_forward.9} parent=0 // pred_fallthru
    _
  // Predicated region
  $region22: #{res_generator1_forward.9} parent=0 // pred_check
    _
  $region23: #{res_generator1_forward.9} parent=0 // pred_check_branch
    %23 = sbr.rel (0) target = $region25
  $region24: #{res_generator1_forward.9} parent=0 // pred_region
    _
  $region25: #{res_generator1_forward.9} parent=0 // pred_fallthru
    _
  // Predicated region
  $region26: #{res_generator1_forward.9} parent=0 // pred_check
    _
  $region27: #{res_generator1_forward.9} parent=0 // pred_check_branch
    %25 = sbr.rel (0) target = $region29
  $region28: #{res_generator1_forward.9} parent=0 // pred_region
    _
  $region29: #{res_generator1_forward.9} parent=0 // pred_fallthru
    _
  %v27 = vld [vmem:[%s0] sm:$0xff]
  %v28 = vld [vmem:[%s0 + $0x8] sm:$0xff]
  %v29 = vld [vmem:[%s0 + $0x10] sm:$0xff]
  %v30 = vld [vmem:[%s0 + $0x18] sm:$0xff]
  %v31 = vld [vmem:[%s1] sm:$0xff]
  %v32 = vld [vmem:[%s1 + $0x8] sm:$0xff]
  %v33 = vld [vmem:[%s1 + $0x10] sm:$0xff]
  %v34 = vld [vmem:[%s1 + $0x18] sm:$0xff]
  %v35 = vld [vmem:[%s2] sm:$0xff]
  %v36 = vld [vmem:[%s2 + $0x8] sm:$0xff]
  %v37 = vld [vmem:[%s2 + $0x10] sm:$0xff]
  %v38 = vld [vmem:[%s2 + $0x18] sm:$0xff]
  %v39 = vmax.f32 %v27, 0.0
  %v40 = vmax.f32 %v28, 0.0
  %v41 = vmax.f32 %v29, 0.0
  %v42 = vmax.f32 %v30, 0.0
  %47 = vrot.lane.b32.xlu0 %v39, 1
  %v48 = vpop.permute.xlu0 %47
  %49 = vrot.lane.b32.xlu0 %v40, 1
  %v50 = vpop.permute.xlu0 %49
  %51 = vrot.lane.b32.xlu0 %v41, 1
  %v52 = vpop.permute.xlu0 %51
  %53 = vrot.lane.b32.xlu0 %v42, 1
  %v54 = vpop.permute.xlu0 %53
  %vm59 = vcmask 7168
  %v60 = vsel %vm59, 0.0, %v48
  %v61 = vsel %vm59, 0.0, %v50
  %v62 = vsel %vm59, 0.0, %v52
  %v63 = vsel %vm59, 0.0, %v54
  %vm64 = vcmask 72704
  %v65 = vsel %vm64, %v60, 0.0
  %v66 = vsel %vm64, %v61, 0.0
  %v67 = vsel %vm64, %v62, 0.0
  %v68 = vsel %vm64, %v63, 0.0
  %69 = vrot.lane.b32.xlu0 %v39, 121
  %v70 = vpop.permute.xlu0 %69
  %71 = vrot.lane.b32.xlu0 %v40, 121
  %v72 = vpop.permute.xlu0 %71
  %73 = vrot.lane.b32.xlu0 %v41, 121
  %v74 = vpop.permute.xlu0 %73
  %75 = vrot.lane.b32.xlu0 %v42, 121
  %v76 = vpop.permute.xlu0 %75
  %v81 = vsel %vm59, 0.0, %v70
  %v82 = vsel %vm59, 0.0, %v72
  %v83 = vsel %vm59, 0.0, %v74
  %v84 = vsel %vm59, 0.0, %v76
  %v85 = vsel %vm64, %v81, 0.0
  %v86 = vsel %vm64, %v82, 0.0
  %v87 = vsel %vm64, %v83, 0.0
  %v88 = vsel %vm64, %v84, 0.0
  %93 = vrot.lane.b32.xlu0 %v85, 8
  %v94 = vpop.permute.xlu0 %93
  %95 = vrot.lane.b32.xlu0 %v86, 8
  %v96 = vpop.permute.xlu0 %95
  %97 = vrot.lane.b32.xlu0 %v87, 8
  %v98 = vpop.permute.xlu0 %97
  %99 = vrot.lane.b32.xlu0 %v88, 8
  %v100 = vpop.permute.xlu0 %99
  %vm105 = vcmask 64512
  %v106 = vsel %vm105, %v65, %v94
  %v107 = vsel %vm105, %v66, %v96
  %v108 = vsel %vm105, %v67, %v98
  %v109 = vsel %vm105, %v68, %v100
  %114 = vrot.lane.b32.xlu0 %v65, 127
  %v115 = vpop.permute.xlu0 %114
  %116 = vrot.lane.b32.xlu0 %v66, 127
  %v117 = vpop.permute.xlu0 %116
  %118 = vrot.lane.b32.xlu0 %v67, 127
  %v119 = vpop.permute.xlu0 %118
  %120 = vrot.lane.b32.xlu0 %v68, 127
  %v121 = vpop.permute.xlu0 %120
  %126 = vrot.lane.b32.xlu0 %v85, 7
  %v127 = vpop.permute.xlu0 %126
  %128 = vrot.lane.b32.xlu0 %v86, 7
  %v129 = vpop.permute.xlu0 %128
  %130 = vrot.lane.b32.xlu0 %v87, 7
  %v131 = vpop.permute.xlu0 %130
  %132 = vrot.lane.b32.xlu0 %v88, 7
  %v133 = vpop.permute.xlu0 %132
  %v138 = vsel %vm105, %v115, %v127
  %v139 = vsel %vm105, %v117, %v129
  %v140 = vsel %vm105, %v119, %v131
  %v141 = vsel %vm105, %v121, %v133
  %142 = vrot.lane.b32.xlu0 %v65, 126
  %v143 = vpop.permute.xlu0 %142
  %144 = vrot.lane.b32.xlu0 %v66, 126
  %v145 = vpop.permute.xlu0 %144
  %146 = vrot.lane.b32.xlu0 %v67, 126
  %v147 = vpop.permute.xlu0 %146
  %148 = vrot.lane.b32.xlu0 %v68, 126
  %v149 = vpop.permute.xlu0 %148
  %154 = vrot.lane.b32.xlu0 %v85, 6
  %v155 = vpop.permute.xlu0 %154
  %156 = vrot.lane.b32.xlu0 %v86, 6
  %v157 = vpop.permute.xlu0 %156
  %158 = vrot.lane.b32.xlu0 %v87, 6
  %v159 = vpop.permute.xlu0 %158
  %160 = vrot.lane.b32.xlu0 %v88, 6
  %v161 = vpop.permute.xlu0 %160
  %v166 = vsel %vm105, %v143, %v155
  %v167 = vsel %vm105, %v145, %v157
  %v168 = vsel %vm105, %v147, %v159
  %v169 = vsel %vm105, %v149, %v161
  %v170 = vpack.c.bf16 %v32, %v31
  %v171 = vpack.c.bf16 %v34, %v33
  %v172 = vpack.c.bf16 %v107, %v106
  %v173 = vpack.c.bf16 %v109, %v108
  %v174 = vpack.c.bf16 %v139, %v138
  %v175 = vpack.c.bf16 %v141, %v140
  %v176 = vpack.c.bf16 %v167, %v166
  %v177 = vpack.c.bf16 %v169, %v168
  %179 = vset.pattern.permute.xlu0 0
  %180 = vperm.xlu0 %179, %v35
  %v181 = vpop.permute.xlu0 %180
  %184 = vset.pattern.permute.xlu0 0
  %185 = vperm.xlu0 %184, %v36
  %v186 = vpop.permute.xlu0 %185
  %189 = vset.pattern.permute.xlu0 0
  %190 = vperm.xlu0 %189, %v37
  %v191 = vpop.permute.xlu0 %190
  %194 = vset.pattern.permute.xlu0 0
  %195 = vperm.xlu0 %194, %v38
  %v196 = vpop.permute.xlu0 %195
  %vm198 = vcmask 785408
  %v200 = vsel %vm198, %v170, 0
  %v203 = vsel %vm198, %v171, 0
  %205 = vmatprep.subr.bf16.mxu0 0
  %206 = vmatpush1.bf16.msra.mxu0 %v172
  %207 = vmatprep.subr.bf16.mxu0 0
  %208 = vmatpush1.bf16.msra.mxu0 %v173
  %209 = vmatprep.subr.bf16.mxu0 0
  %210 = vmatpush1.bf16.msra.mxu0 %v174
  %211 = vmatprep.subr.bf16.mxu0 0
  %212 = vmatpush1.bf16.msra.mxu0 %v175
  %213 = vmatprep.subr.bf16.mxu0 0
  %214 = vmatpush1.bf16.msra.mxu0 %v176
  %215 = vmatprep.subr.bf16.mxu0 0
  %216 = vmatpush1.bf16.msra.mxu0 %v177
  %217 = vmatprep.subr.bf16.mxu0 0
  %218 = vmatpush1.bf16.msra.mxu0 0
  %219 = vmatprep.subr.bf16.mxu0 0
  %220 = vmatpush1.bf16.msra.mxu0 0
  %221 = vmatprep.subr.bf16.mxu0 0
  %222 = vmatpush1.bf16.msra.mxu0 0
  %223 = vmatprep.subr.bf16.mxu0 0
  %224 = vmatpush1.bf16.msra.mxu0 0
  %225 = vmatprep.subr.bf16.mxu0 0
  %226 = vmatpush1.bf16.msra.mxu0 0
  %227 = vmatprep.subr.bf16.mxu0 0
  %228 = vmatpush1.bf16.msra.mxu0 0
  %229 = vmatprep.subr.bf16.mxu0 0
  %230 = vmatpush1.bf16.msra.mxu0 0
  %231 = vmatprep.subr.bf16.mxu0 0
  %232 = vmatpush1.bf16.msra.mxu0 0
  %233 = vmatprep.subr.bf16.mxu0 0
  %234 = vmatpush1.bf16.msra.mxu0 0
  %235 = vmatprep.subr.bf16.mxu0 0
  %236 = vmatpush1.bf16.msra.mxu0 0
  %237 = vmatprep.mubr.bf16.mxu0 0
  %238 = vmatmul.mubr.bf16.gmra.mrb[0].mxu0 %v200
  %v239 = vpop.f32.mrb[0].mxu0
  %v240 = vadd.f32 %v181, %v239
  %v241 = vpop.f32.mrb[0].mxu0
  %v242 = vpop.f32.mrb[0].mxu0
  %v243 = vadd.f32 %v186, %v242
  %v244 = vpop.f32.mrb[0].mxu0
  %245 = vmatprep.mubr.bf16.mxu0 0
  %246 = vmatmul.mubr.bf16.gmra.mrb[0].mxu0 %v203
  %v247 = vpop.f32.mrb[0].mxu0
  %v248 = vadd.f32 %v191, %v247
  %v249 = vpop.f32.mrb[0].mxu0
  %v250 = vpop.f32.mrb[0].mxu0
  %v251 = vadd.f32 %v196, %v250
  %v252 = vpop.f32.mrb[0].mxu0
  %253 = vdwg.mxu0
  %v254 = vld [vmem:[%s3] sm:$0xff]
  %v255 = vld [vmem:[%s3 + $0x8] sm:$0xff]
  %v256 = vld [vmem:[%s3 + $0x10] sm:$0xff]
  %v257 = vld [vmem:[%s3 + $0x18] sm:$0xff]
  %v258 = vld [vmem:[%s4] sm:$0xff]
  %v259 = vld [vmem:[%s4 + $0x8] sm:$0xff]
  %v260 = vld [vmem:[%s4 + $0x10] sm:$0xff]
  %v261 = vld [vmem:[%s4 + $0x18] sm:$0xff]
  %v262 = vmax.f32 %v240, 0.0
  %v263 = vmax.f32 %v243, 0.0
  %v264 = vmax.f32 %v248, 0.0
  %v265 = vmax.f32 %v251, 0.0
  %270 = vrot.lane.b32.xlu0 %v262, 1
  %v271 = vpop.permute.xlu0 %270
  %272 = vrot.lane.b32.xlu0 %v263, 1
  %v273 = vpop.permute.xlu0 %272
  %274 = vrot.lane.b32.xlu0 %v264, 1
  %v275 = vpop.permute.xlu0 %274
  %276 = vrot.lane.b32.xlu0 %v265, 1
  %v277 = vpop.permute.xlu0 %276
  %v282 = vsel %vm59, 0.0, %v271
  %v283 = vsel %vm59, 0.0, %v273
  %v284 = vsel %vm59, 0.0, %v275
  %v285 = vsel %vm59, 0.0, %v277
  %v286 = vsel %vm64, %v282, 0.0
  %v287 = vsel %vm64, %v283, 0.0
  %v288 = vsel %vm64, %v284, 0.0
  %v289 = vsel %vm64, %v285, 0.0
  %290 = vrot.lane.b32.xlu0 %v262, 121
  %v291 = vpop.permute.xlu0 %290
  %292 = vrot.lane.b32.xlu0 %v263, 121
  %v293 = vpop.permute.xlu0 %292
  %294 = vrot.lane.b32.xlu0 %v264, 121
  %v295 = vpop.permute.xlu0 %294
  %296 = vrot.lane.b32.xlu0 %v265, 121
  %v297 = vpop.permute.xlu0 %296
  %v302 = vsel %vm59, 0.0, %v291
  %v303 = vsel %vm59, 0.0, %v293
  %v304 = vsel %vm59, 0.0, %v295
  %v305 = vsel %vm59, 0.0, %v297
  %v306 = vsel %vm64, %v302, 0.0
  %v307 = vsel %vm64, %v303, 0.0
  %v308 = vsel %vm64, %v304, 0.0
  %v309 = vsel %vm64, %v305, 0.0
  %314 = vrot.lane.b32.xlu0 %v306, 8
  %v315 = vpop.permute.xlu0 %314
  %316 = vrot.lane.b32.xlu0 %v307, 8
  %v317 = vpop.permute.xlu0 %316
  %318 = vrot.lane.b32.xlu0 %v308, 8
  %v319 = vpop.permute.xlu0 %318
  %320 = vrot.lane.b32.xlu0 %v309, 8
  %v321 = vpop.permute.xlu0 %320
  %v326 = vsel %vm105, %v286, %v315
  %v327 = vsel %vm105, %v287, %v317
  %v328 = vsel %vm105, %v288, %v319
  %v329 = vsel %vm105, %v289, %v321
  %334 = vrot.lane.b32.xlu0 %v286, 127
  %v335 = vpop.permute.xlu0 %334
  %336 = vrot.lane.b32.xlu0 %v287, 127
  %v337 = vpop.permute.xlu0 %336
  %338 = vrot.lane.b32.xlu0 %v288, 127
  %v339 = vpop.permute.xlu0 %338
  %340 = vrot.lane.b32.xlu0 %v289, 127
  %v341 = vpop.permute.xlu0 %340
  %346 = vrot.lane.b32.xlu0 %v306, 7
  %v347 = vpop.permute.xlu0 %346
  %348 = vrot.lane.b32.xlu0 %v307, 7
  %v349 = vpop.permute.xlu0 %348
  %350 = vrot.lane.b32.xlu0 %v308, 7
  %v351 = vpop.permute.xlu0 %350
  %352 = vrot.lane.b32.xlu0 %v309, 7
  %v353 = vpop.permute.xlu0 %352
  %v358 = vsel %vm105, %v335, %v347
  %v359 = vsel %vm105, %v337, %v349
  %v360 = vsel %vm105, %v339, %v351
  %v361 = vsel %vm105, %v341, %v353
  %362 = vrot.lane.b32.xlu0 %v286, 126
  %v363 = vpop.permute.xlu0 %362
  %364 = vrot.lane.b32.xlu0 %v287, 126
  %v365 = vpop.permute.xlu0 %364
  %366 = vrot.lane.b32.xlu0 %v288, 126
  %v367 = vpop.permute.xlu0 %366
  %368 = vrot.lane.b32.xlu0 %v289, 126
  %v369 = vpop.permute.xlu0 %368
  %374 = vrot.lane.b32.xlu0 %v306, 6
  %v375 = vpop.permute.xlu0 %374
  %376 = vrot.lane.b32.xlu0 %v307, 6
  %v377 = vpop.permute.xlu0 %376
  %378 = vrot.lane.b32.xlu0 %v308, 6
  %v379 = vpop.permute.xlu0 %378
  %380 = vrot.lane.b32.xlu0 %v309, 6
  %v381 = vpop.permute.xlu0 %380
  %v386 = vsel %vm105, %v363, %v375
  %v387 = vsel %vm105, %v365, %v377
  %v388 = vsel %vm105, %v367, %v379
  %v389 = vsel %vm105, %v369, %v381
  %v390 = vpack.c.bf16 %v255, %v254
  %v391 = vpack.c.bf16 %v257, %v256
  %v392 = vpack.c.bf16 %v327, %v326
  %v393 = vpack.c.bf16 %v329, %v328
  %v394 = vpack.c.bf16 %v359, %v358
  %v395 = vpack.c.bf16 %v361, %v360
  %v396 = vpack.c.bf16 %v387, %v386
  %v397 = vpack.c.bf16 %v389, %v388
  %399 = vset.pattern.permute.xlu0 0
  %400 = vperm.xlu0 %399, %v258
  %v401 = vpop.permute.xlu0 %400
  %404 = vset.pattern.permute.xlu0 0
  %405 = vperm.xlu0 %404, %v259
  %v406 = vpop.permute.xlu0 %405
  %409 = vset.pattern.permute.xlu0 0
  %410 = vperm.xlu0 %409, %v260
  %v411 = vpop.permute.xlu0 %410
  %414 = vset.pattern.permute.xlu0 0
  %415 = vperm.xlu0 %414, %v261
  %v416 = vpop.permute.xlu0 %415
  %v419 = vsel %vm198, %v390, 0
  %v422 = vsel %vm198, %v391, 0
  %424 = vmatprep.subr.bf16.mxu0 0
  %425 = vmatpush1.bf16.msra.mxu0 %v392
  %426 = vmatprep.subr.bf16.mxu0 0
  %427 = vmatpush1.bf16.msra.mxu0 %v393
  %428 = vmatprep.subr.bf16.mxu0 0
  %429 = vmatpush1.bf16.msra.mxu0 %v394
  %430 = vmatprep.subr.bf16.mxu0 0
  %431 = vmatpush1.bf16.msra.mxu0 %v395
  %432 = vmatprep.subr.bf16.mxu0 0
  %433 = vmatpush1.bf16.msra.mxu0 %v396
  %434 = vmatprep.subr.bf16.mxu0 0
  %435 = vmatpush1.bf16.msra.mxu0 %v397
  %436 = vmatprep.subr.bf16.mxu0 0
  %437 = vmatpush1.bf16.msra.mxu0 0
  %438 = vmatprep.subr.bf16.mxu0 0
  %439 = vmatpush1.bf16.msra.mxu0 0
  %440 = vmatprep.subr.bf16.mxu0 0
  %441 = vmatpush1.bf16.msra.mxu0 0
  %442 = vmatprep.subr.bf16.mxu0 0
  %443 = vmatpush1.bf16.msra.mxu0 0
  %444 = vmatprep.subr.bf16.mxu0 0
  %445 = vmatpush1.bf16.msra.mxu0 0
  %446 = vmatprep.subr.bf16.mxu0 0
  %447 = vmatpush1.bf16.msra.mxu0 0
  %448 = vmatprep.subr.bf16.mxu0 0
  %449 = vmatpush1.bf16.msra.mxu0 0
  %450 = vmatprep.subr.bf16.mxu0 0
  %451 = vmatpush1.bf16.msra.mxu0 0
  %452 = vmatprep.subr.bf16.mxu0 0
  %453 = vmatpush1.bf16.msra.mxu0 0
  %454 = vmatprep.subr.bf16.mxu0 0
  %455 = vmatpush1.bf16.msra.mxu0 0
  %456 = vmatprep.mubr.bf16.mxu0 0
  %457 = vmatmul.mubr.bf16.gmra.mrb[0].mxu0 %v419
  %v458 = vpop.f32.mrb[0].mxu0
  %v459 = vadd.f32 %v401, %v458
  %v460 = vpop.f32.mrb[0].mxu0
  %v461 = vpop.f32.mrb[0].mxu0
  %v462 = vadd.f32 %v406, %v461
  %v463 = vpop.f32.mrb[0].mxu0
  %464 = vmatprep.mubr.bf16.mxu0 0
  %465 = vmatmul.mubr.bf16.gmra.mrb[0].mxu0 %v422
  %v466 = vpop.f32.mrb[0].mxu0
  %v467 = vadd.f32 %v411, %v466
  %v468 = vpop.f32.mrb[0].mxu0
  %v469 = vpop.f32.mrb[0].mxu0
  %v470 = vadd.f32 %v416, %v469
  %v471 = vpop.f32.mrb[0].mxu0
  %472 = vdwg.mxu0
  %v473 = vld [vmem:[%s5] sm:$0xff]
  %v474 = vld [vmem:[%s5 + $0x8] sm:$0xff]
  %v475 = vld [vmem:[%s5 + $0x10] sm:$0xff]
  %v476 = vld [vmem:[%s5 + $0x18] sm:$0xff]
  %v477 = vpack.c.bf16 %v474, %v473
  %v478 = vpack.c.bf16 %v476, %v475
  %v479 = vpack.c.bf16 %v28, %v27
  %v480 = vpack.c.bf16 %v30, %v29
  %v481 = vld [vmem:[%s6] sm:$0xff]
  %v482 = vld [vmem:[%s6 + $0x8] sm:$0xff]
  %v483 = vld [vmem:[%s6 + $0x10] sm:$0xff]
  %v484 = vld [vmem:[%s6 + $0x18] sm:$0xff]
  %486 = vset.pattern.permute.xlu0 0
  %487 = vperm.xlu0 %486, %v481
  %v488 = vpop.permute.xlu0 %487
  %491 = vset.pattern.permute.xlu0 0
  %492 = vperm.xlu0 %491, %v482
  %v493 = vpop.permute.xlu0 %492
  %496 = vset.pattern.permute.xlu0 0
  %497 = vperm.xlu0 %496, %v483
  %v498 = vpop.permute.xlu0 %497
  %501 = vset.pattern.permute.xlu0 0
  %502 = vperm.xlu0 %501, %v484
  %v503 = vpop.permute.xlu0 %502
  %vm505 = vcmask 261120
  %v507 = vsel %vm505, %v477, 0
  %v510 = vsel %vm505, %v478, 0
  %512 = vmatprep.subr.bf16.mxu0 0
  %513 = vmatpush1.bf16.msra.mxu0 %v479
  %514 = vmatprep.subr.bf16.mxu0 0
  %515 = vmatpush1.bf16.msra.mxu0 %v480
  %516 = vmatprep.subr.bf16.mxu0 0
  %517 = vmatpush1.bf16.msra.mxu0 0
  %518 = vmatprep.subr.bf16.mxu0 0
  %519 = vmatpush1.bf16.msra.mxu0 0
  %520 = vmatprep.subr.bf16.mxu0 0
  %521 = vmatpush1.bf16.msra.mxu0 0
  %522 = vmatprep.subr.bf16.mxu0 0
  %523 = vmatpush1.bf16.msra.mxu0 0
  %524 = vmatprep.subr.bf16.mxu0 0
  %525 = vmatpush1.bf16.msra.mxu0 0
  %526 = vmatprep.subr.bf16.mxu0 0
  %527 = vmatpush1.bf16.msra.mxu0 0
  %528 = vmatprep.subr.bf16.mxu0 0
  %529 = vmatpush1.bf16.msra.mxu0 0
  %530 = vmatprep.subr.bf16.mxu0 0
  %531 = vmatpush1.bf16.msra.mxu0 0
  %532 = vmatprep.subr.bf16.mxu0 0
  %533 = vmatpush1.bf16.msra.mxu0 0
  %534 = vmatprep.subr.bf16.mxu0 0
  %535 = vmatpush1.bf16.msra.mxu0 0
  %536 = vmatprep.subr.bf16.mxu0 0
  %537 = vmatpush1.bf16.msra.mxu0 0
  %538 = vmatprep.subr.bf16.mxu0 0
  %539 = vmatpush1.bf16.msra.mxu0 0
  %540 = vmatprep.subr.bf16.mxu0 0
  %541 = vmatpush1.bf16.msra.mxu0 0
  %542 = vmatprep.subr.bf16.mxu0 0
  %543 = vmatpush1.bf16.msra.mxu0 0
  %544 = vmatprep.mubr.bf16.mxu0 0
  %545 = vmatmul.mubr.bf16.gmra.mrb[0].mxu0 %v507
  %v546 = vpop.f32.mrb[0].mxu0
  %v547 = vadd.f32 %v488, %v546
  %v548 = vpop.f32.mrb[0].mxu0
  %v549 = vpop.f32.mrb[0].mxu0
  %v550 = vadd.f32 %v493, %v549
  %v551 = vpop.f32.mrb[0].mxu0
  %552 = vmatprep.mubr.bf16.mxu0 0
  %553 = vmatmul.mubr.bf16.gmra.mrb[0].mxu0 %v510
  %v554 = vpop.f32.mrb[0].mxu0
  %v555 = vadd.f32 %v498, %v554
  %v556 = vpop.f32.mrb[0].mxu0
  %v557 = vpop.f32.mrb[0].mxu0
  %v558 = vadd.f32 %v503, %v557
  %v559 = vpop.f32.mrb[0].mxu0
  %560 = vdwg.mxu0
  %v561 = vadd.f32 %v459, %v547
  %v562 = vadd.f32 %v462, %v550
  %v563 = vadd.f32 %v467, %v555
  %v564 = vadd.f32 %v470, %v558
  %vm565 = vcmask 130048
  %566 = vst.msk [vmem:[%s7] sm:$0xff] %vm565, %v561
  %567 = vst.msk [vmem:[%s7 + $0x8] sm:$0xff] %vm565, %v562
  %568 = vst.msk [vmem:[%s7 + $0x10] sm:$0xff] %vm565, %v563
  %569 = vst.msk [vmem:[%s7 + $0x18] sm:$0xff] %vm565, %v564
  // Predicated region
  $region30: #{res_generator1_forward.9} parent=0 // pred_check
    _
  $region31: #{res_generator1_forward.9} parent=0 // pred_check_branch
    %571 = sbr.rel (0) target = $region33
  $region32: #{res_generator1_forward.9} parent=0 // pred_region
    _
  $region33: #{res_generator1_forward.9} parent=0 // pred_fallthru
    _
  // Predicated region
  $region34: #{res_generator1_forward.9} parent=0 // pred_check
    _
  $region35: #{res_generator1_forward.9} parent=0 // pred_check_branch
    %573 = sbr.rel (0) target = $region37
  $region36: #{res_generator1_forward.9} parent=0 // pred_region
    _
  $region37: #{res_generator1_forward.9} parent=0 // pred_fallthru
    _

// kernel: res_generator1_forward.11
$region0: #{res_generator1_forward.11}
  #allocation0 [shape = 'u32[]', space=smem, size = 0x4, offset = 0x4, fixed_abs, tag = 'smem constant byte address 0x4 - core index']
  #allocation1 [shape = 'u32[144,128]{1,0:T(1,128)}', space=vmem, size = 0x12000, scoped, tag = 'internal scratch']
  #allocation2 [shape = 'f32[1,1]{1,0:T(1,128)S(1)}', space=vmem, size = 0x200, scoped, tag = 'scoped memory for res_generator1_forward.11']
  %s0 = inlined_call_operand.vmem [shape: f32[32,16], index: 0, kind: input, shape index: {}]
  %s1 = inlined_call_operand.vmem [shape: f32[32,16], index: 1, kind: input, shape index: {}]
  %s2 = inlined_call_operand.vmem [shape: f32[4,32], index: 2, kind: input, shape index: {}]
  %s3 = inlined_call_operand.vmem [shape: f32[4,32], index: 3, kind: input, shape index: {}]
  %s4 = inlined_call_operand.vmem [shape: f32[32,32], index: 4, kind: input, shape index: {}]
  %s5 = inlined_call_operand.<no memory space> [shape: f32[1,1], index: 5, kind: input, shape index: {}]
  %s6 = inlined_call_operand.vmem [shape: f32[32,16], index: 6, kind: output, shape index: {}]
  %s7 = sld [smem:[#allocation0]]
  $region34: #{res_generator1_forward.11} parent=0
    _
  %s9 = ssub.s32 1, %s7
  %s10 = scalar_select 0, %s9, %s7
  %v11 = vstv %s5
  %12 = vst [vmem:[#allocation2] sm:$0x1] %v11
  // Predicated region
  $region2: #{res_generator1_forward.11} parent=0 // pred_check
    _
  $region3: #{res_generator1_forward.11} parent=0 // pred_check_branch
    %14 = sbr.rel (0) target = $region5
  $region4: #{res_generator1_forward.11} parent=0 // pred_region
    _
  $region5: #{res_generator1_forward.11} parent=0 // pred_fallthru
    _
  // Predicated region
  $region6: #{res_generator1_forward.11} parent=0 // pred_check
    _
  $region7: #{res_generator1_forward.11} parent=0 // pred_check_branch
    %16 = sbr.rel (0) target = $region9
  $region8: #{res_generator1_forward.11} parent=0 // pred_region
    _
  $region9: #{res_generator1_forward.11} parent=0 // pred_fallthru
    _
  // Predicated region
  $region10: #{res_generator1_forward.11} parent=0 // pred_check
    _
  $region11: #{res_generator1_forward.11} parent=0 // pred_check_branch
    %18 = sbr.rel (0) target = $region13
  $region12: #{res_generator1_forward.11} parent=0 // pred_region
    _
  $region13: #{res_generator1_forward.11} parent=0 // pred_fallthru
    _
  // Predicated region
  $region14: #{res_generator1_forward.11} parent=0 // pred_check
    _
  $region15: #{res_generator1_forward.11} parent=0 // pred_check_branch
    %20 = sbr.rel (0) target = $region17
  $region16: #{res_generator1_forward.11} parent=0 // pred_region
    _
  $region17: #{res_generator1_forward.11} parent=0 // pred_fallthru
    _
  // Predicated region
  $region18: #{res_generator1_forward.11} parent=0 // pred_check
    _
  $region19: #{res_generator1_forward.11} parent=0 // pred_check_branch
    %22 = sbr.rel (0) target = $region21
  $region20: #{res_generator1_forward.11} parent=0 // pred_region
    _
  $region21: #{res_generator1_forward.11} parent=0 // pred_fallthru
    _
  // Predicated region
  $region22: #{res_generator1_forward.11} parent=0 // pred_check
    _
  $region23: #{res_generator1_forward.11} parent=0 // pred_check_branch
    %24 = sbr.rel (0) target = $region25
  $region24: #{res_generator1_forward.11} parent=0 // pred_region
    _
  $region25: #{res_generator1_forward.11} parent=0 // pred_fallthru
    _
  %v26 = vld [vmem:[%s0] sm:$0xff]
  %v27 = vld [vmem:[%s0 + $0x8] sm:$0xff]
  %v28 = vld [vmem:[%s0 + $0x10] sm:$0xff]
  %v29 = vld [vmem:[%s0 + $0x18] sm:$0xff]
  %v30 = vld [vmem:[%s1] sm:$0xff]
  %v31 = vld [vmem:[%s1 + $0x8] sm:$0xff]
  %v32 = vld [vmem:[%s1 + $0x10] sm:$0xff]
  %v33 = vld [vmem:[%s1 + $0x18] sm:$0xff]
  %v34 = vld [vmem:[%s2] sm:$0xf]
  %v35 = vpack.c.bf16 %v34, %v34
  %v36 = vpack.c.bf16 %v27, %v26
  %v37 = vpack.c.bf16 %v29, %v28
  %vm38 = vcmask 261120
  %v40 = vsel %vm38, %v35, 0
  %42 = vmatprep.subr.bf16.mxu0 0
  %43 = vmatpush1.bf16.msra.mxu0 %v36
  %44 = vmatprep.subr.bf16.mxu0 0
  %45 = vmatpush1.bf16.msra.mxu0 %v37
  %46 = vmatprep.subr.bf16.mxu0 0
  %47 = vmatpush1.bf16.msra.mxu0 0
  %48 = vmatprep.subr.bf16.mxu0 0
  %49 = vmatpush1.bf16.msra.mxu0 0
  %50 = vmatprep.subr.bf16.mxu0 0
  %51 = vmatpush1.bf16.msra.mxu0 0
  %52 = vmatprep.subr.bf16.mxu0 0
  %53 = vmatpush1.bf16.msra.mxu0 0
  %54 = vmatprep.subr.bf16.mxu0 0
  %55 = vmatpush1.bf16.msra.mxu0 0
  %56 = vmatprep.subr.bf16.mxu0 0
  %57 = vmatpush1.bf16.msra.mxu0 0
  %58 = vmatprep.subr.bf16.mxu0 0
  %59 = vmatpush1.bf16.msra.mxu0 0
  %60 = vmatprep.subr.bf16.mxu0 0
  %61 = vmatpush1.bf16.msra.mxu0 0
  %62 = vmatprep.subr.bf16.mxu0 0
  %63 = vmatpush1.bf16.msra.mxu0 0
  %64 = vmatprep.subr.bf16.mxu0 0
  %65 = vmatpush1.bf16.msra.mxu0 0
  %66 = vmatprep.subr.bf16.mxu0 0
  %67 = vmatpush1.bf16.msra.mxu0 0
  %68 = vmatprep.subr.bf16.mxu0 0
  %69 = vmatpush1.bf16.msra.mxu0 0
  %70 = vmatprep.subr.bf16.mxu0 0
  %71 = vmatpush1.bf16.msra.mxu0 0
  %72 = vmatprep.subr.bf16.mxu0 0
  %73 = vmatpush1.bf16.msra.mxu0 0
  %74 = vmatprep.mubr.bf16.mxu0 0
  %75 = vmatmul.mubr.bf16.gmra.mrb[0].mxu0 %v40
  %v76 = vpop.f32.mrb[0].mxu0
  %v77 = vadd.f32 0.0, %v76
  %v78 = vpop.f32.mrb[0].mxu0
  %v79 = vpop.f32.mrb[0].mxu0
  %v80 = vpop.f32.mrb[0].mxu0
  %81 = vdwg.mxu0
  %v82 = vld [vmem:[%s3] sm:$0xf]
  %v83 = vpack.c.bf16 %v82, %v82
  %v84 = vpack.c.bf16 %v31, %v30
  %v85 = vpack.c.bf16 %v33, %v32
  %v87 = vsel %vm38, %v83, 0
  %89 = vmatprep.subr.bf16.mxu0 0
  %90 = vmatpush1.bf16.msra.mxu0 %v84
  %91 = vmatprep.subr.bf16.mxu0 0
  %92 = vmatpush1.bf16.msra.mxu0 %v85
  %93 = vmatprep.subr.bf16.mxu0 0
  %94 = vmatpush1.bf16.msra.mxu0 0
  %95 = vmatprep.subr.bf16.mxu0 0
  %96 = vmatpush1.bf16.msra.mxu0 0
  %97 = vmatprep.subr.bf16.mxu0 0
  %98 = vmatpush1.bf16.msra.mxu0 0
  %99 = vmatprep.subr.bf16.mxu0 0
  %100 = vmatpush1.bf16.msra.mxu0 0
  %101 = vmatprep.subr.bf16.mxu0 0
  %102 = vmatpush1.bf16.msra.mxu0 0
  %103 = vmatprep.subr.bf16.mxu0 0
  %104 = vmatpush1.bf16.msra.mxu0 0
  %105 = vmatprep.subr.bf16.mxu0 0
  %106 = vmatpush1.bf16.msra.mxu0 0
  %107 = vmatprep.subr.bf16.mxu0 0
  %108 = vmatpush1.bf16.msra.mxu0 0
  %109 = vmatprep.subr.bf16.mxu0 0
  %110 = vmatpush1.bf16.msra.mxu0 0
  %111 = vmatprep.subr.bf16.mxu0 0
  %112 = vmatpush1.bf16.msra.mxu0 0
  %113 = vmatprep.subr.bf16.mxu0 0
  %114 = vmatpush1.bf16.msra.mxu0 0
  %115 = vmatprep.subr.bf16.mxu0 0
  %116 = vmatpush1.bf16.msra.mxu0 0
  %117 = vmatprep.subr.bf16.mxu0 0
  %118 = vmatpush1.bf16.msra.mxu0 0
  %119 = vmatprep.subr.bf16.mxu0 0
  %120 = vmatpush1.bf16.msra.mxu0 0
  %121 = vmatprep.mubr.bf16.mxu0 0
  %122 = vmatmul.mubr.bf16.gmra.mrb[0].mxu0 %v87
  %v123 = vpop.f32.mrb[0].mxu0
  %v124 = vadd.f32 0.0, %v123
  %v125 = vpop.f32.mrb[0].mxu0
  %v126 = vpop.f32.mrb[0].mxu0
  %v127 = vpop.f32.mrb[0].mxu0
  %128 = vdwg.mxu0
  %v129 = vld [vmem:[%s4] sm:$0xff]
  %v130 = vld [vmem:[%s4 + $0x8] sm:$0xff]
  %v131 = vld [vmem:[%s4 + $0x10] sm:$0xff]
  %v132 = vld [vmem:[%s4 + $0x18] sm:$0xff]
  %v133 = vpack.c.bf16 %v130, %v129
  %v134 = vpack.c.bf16 %v132, %v131
  %v136 = vsel %vm38, %v133, 0
  %v139 = vsel %vm38, %v134, 0
  %141 = vmatprep.subr.bf16.mxu0 0
  %142 = vmatpush1.bf16.msra.mxu0 %v84
  %143 = vmatprep.subr.bf16.mxu0 0
  %144 = vmatpush1.bf16.msra.mxu0 %v85
  %145 = vmatprep.subr.bf16.mxu0 0
  %146 = vmatpush1.bf16.msra.mxu0 0
  %147 = vmatprep.subr.bf16.mxu0 0
  %148 = vmatpush1.bf16.msra.mxu0 0
  %149 = vmatprep.subr.bf16.mxu0 0
  %150 = vmatpush1.bf16.msra.mxu0 0
  %151 = vmatprep.subr.bf16.mxu0 0
  %152 = vmatpush1.bf16.msra.mxu0 0
  %153 = vmatprep.subr.bf16.mxu0 0
  %154 = vmatpush1.bf16.msra.mxu0 0
  %155 = vmatprep.subr.bf16.mxu0 0
  %156 = vmatpush1.bf16.msra.mxu0 0
  %157 = vmatprep.subr.bf16.mxu0 0
  %158 = vmatpush1.bf16.msra.mxu0 0
  %159 = vmatprep.subr.bf16.mxu0 0
  %160 = vmatpush1.bf16.msra.mxu0 0
  %161 = vmatprep.subr.bf16.mxu0 0
  %162 = vmatpush1.bf16.msra.mxu0 0
  %163 = vmatprep.subr.bf16.mxu0 0
  %164 = vmatpush1.bf16.msra.mxu0 0
  %165 = vmatprep.subr.bf16.mxu0 0
  %166 = vmatpush1.bf16.msra.mxu0 0
  %167 = vmatprep.subr.bf16.mxu0 0
  %168 = vmatpush1.bf16.msra.mxu0 0
  %169 = vmatprep.subr.bf16.mxu0 0
  %170 = vmatpush1.bf16.msra.mxu0 0
  %171 = vmatprep.subr.bf16.mxu0 0
  %172 = vmatpush1.bf16.msra.mxu0 0
  %173 = vmatprep.mubr.bf16.mxu0 0
  %174 = vmatmul.mubr.bf16.gmra.mrb[0].mxu0 %v136
  %v175 = vpop.f32.mrb[0].mxu0
  %v176 = vadd.f32 0.0, %v175
  %v177 = vpop.f32.mrb[0].mxu0
  %v178 = vpop.f32.mrb[0].mxu0
  %v179 = vadd.f32 0.0, %v178
  %v180 = vpop.f32.mrb[0].mxu0
  %181 = vmatprep.mubr.bf16.mxu0 0
  %182 = vmatmul.mubr.bf16.gmra.mrb[0].mxu0 %v139
  %v183 = vpop.f32.mrb[0].mxu0
  %v184 = vadd.f32 0.0, %v183
  %v185 = vpop.f32.mrb[0].mxu0
  %v186 = vpop.f32.mrb[0].mxu0
  %v187 = vadd.f32 0.0, %v186
  %v188 = vpop.f32.mrb[0].mxu0
  %189 = vdwg.mxu0
  %v190 = vld [vmem:[#allocation2] sm:$0x1]
  %v191 = vpack.c.bf16 %v77, %v77
  %v192 = vpack.c.bf16 %v124, %v124
  %193 = vxpose.xlu0.c.b16.start [1/8] %v191, 128
  %194 = vxpose.xlu0.c.b16.cont [2/8] 0, 128
  %195 = vxpose.xlu0.c.b16.cont [3/8] 0, 128
  %196 = vxpose.xlu0.c.b16.cont [4/8] 0, 128
  %197 = vxpose.xlu0.c.b16.cont [5/8] 0, 128
  %198 = vxpose.xlu0.c.b16.cont [6/8] 0, 128
  %199 = vxpose.xlu0.c.b16.cont [7/8] 0, 128
  %200 = vxpose.xlu0.c.b16.end [8/8] 0, 128
  %v201 = vpop.trf.xlu0
  %v202 = vpop.trf.xlu0
  %v203 = vpop.trf.xlu0
  %v204 = vpop.trf.xlu0
  %v205 = vpop.trf.xlu0
  %v206 = vpop.trf.xlu0
  %v207 = vpop.trf.xlu0
  %v208 = vpop.trf.xlu0
  %vm209 = vcmask 31744
  %v211 = vsel %vm209, %v201, 0
  %vm213 = vcmask 1041408
  %v215 = vsel %vm213, %v192, 0
  %217 = vmatprep.subr.bf16.mxu0 0
  %218 = vmatpush1.bf16.msra.mxu0 %v215
  %219 = vmatprep.subr.bf16.mxu0 0
  %220 = vmatpush1.bf16.msra.mxu0 0
  %221 = vmatprep.subr.bf16.mxu0 0
  %222 = vmatpush1.bf16.msra.mxu0 0
  %223 = vmatprep.subr.bf16.mxu0 0
  %224 = vmatpush1.bf16.msra.mxu0 0
  %225 = vmatprep.subr.bf16.mxu0 0
  %226 = vmatpush1.bf16.msra.mxu0 0
  %227 = vmatprep.subr.bf16.mxu0 0
  %228 = vmatpush1.bf16.msra.mxu0 0
  %229 = vmatprep.subr.bf16.mxu0 0
  %230 = vmatpush1.bf16.msra.mxu0 0
  %231 = vmatprep.subr.bf16.mxu0 0
  %232 = vmatpush1.bf16.msra.mxu0 0
  %233 = vmatprep.subr.bf16.mxu0 0
  %234 = vmatpush1.bf16.msra.mxu0 0
  %235 = vmatprep.subr.bf16.mxu0 0
  %236 = vmatpush1.bf16.msra.mxu0 0
  %237 = vmatprep.subr.bf16.mxu0 0
  %238 = vmatpush1.bf16.msra.mxu0 0
  %239 = vmatprep.subr.bf16.mxu0 0
  %240 = vmatpush1.bf16.msra.mxu0 0
  %241 = vmatprep.subr.bf16.mxu0 0
  %242 = vmatpush1.bf16.msra.mxu0 0
  %243 = vmatprep.subr.bf16.mxu0 0
  %244 = vmatpush1.bf16.msra.mxu0 0
  %245 = vmatprep.subr.bf16.mxu0 0
  %246 = vmatpush1.bf16.msra.mxu0 0
  %247 = vmatprep.subr.bf16.mxu0 0
  %248 = vmatpush1.bf16.msra.mxu0 0
  %249 = vmatprep.mubr.bf16.mxu0 0
  %250 = vmatmul.mubr.bf16.gmra.mrb[0].mxu0 %v211
  %v251 = vpop.f32.mrb[0].mxu0
  %v252 = vadd.f32 0.0, %v251
  %v253 = vpop.f32.mrb[0].mxu0
  %v254 = vpop.f32.mrb[0].mxu0
  %v255 = vpop.f32.mrb[0].mxu0
  %256 = vdwg.mxu0
  %vm257 = vcmask 64512
  %v258 = vsel %vm257, %v252, -inf
  %259 = vmax.xlane.f32.xlu0 %v258
  %v260 = vpop.xlane.xlu0 %259
  %v261 = vsub.f32 %v252, %v260
  %v262 = vmul.f32 %v261, 1.442695
  %v263 = vpow.pop %v262
  %v264 = vsel %vm257, %v263, 0.0
  %265 = vadd.xlane.f32.xlu0 %v264
  %v266 = vpop.xlane.xlu0 %265
  %v267 = vrcp.pop %v266
  %v268 = vmul.f32 %v263, %v267
  %v269 = vpack.c.bf16 %v179, %v176
  %v270 = vpack.c.bf16 %v187, %v184
  %v271 = vpack.c.bf16 %v268, %v268
  %v273 = vsel %vm257, %v269, 0
  %v276 = vsel %vm257, %v270, 0
  %v279 = vsel %vm257, %v271, 0
  %281 = vmatprep.subr.bf16.mxu0 0
  %282 = vmatpush1.bf16.xpose.msra.mxu0 %v279
  %283 = vmatprep.subr.bf16.mxu0 0
  %284 = vmatpush1.bf16.xpose.msra.mxu0 0
  %285 = vmatprep.subr.bf16.mxu0 0
  %286 = vmatpush1.bf16.xpose.msra.mxu0 0
  %287 = vmatprep.subr.bf16.mxu0 0
  %288 = vmatpush1.bf16.xpose.msra.mxu0 0
  %289 = vmatprep.subr.bf16.mxu0 0
  %290 = vmatpush1.bf16.xpose.msra.mxu0 0
  %291 = vmatprep.subr.bf16.mxu0 0
  %292 = vmatpush1.bf16.xpose.msra.mxu0 0
  %293 = vmatprep.subr.bf16.mxu0 0
  %294 = vmatpush1.bf16.xpose.msra.mxu0 0
  %295 = vmatprep.subr.bf16.mxu0 0
  %296 = vmatpush1.bf16.xpose.msra.mxu0 0
  %297 = vmatprep.subr.bf16.mxu0 0
  %298 = vmatpush1.bf16.xpose.msra.mxu0 0
  %299 = vmatprep.subr.bf16.mxu0 0
  %300 = vmatpush1.bf16.xpose.msra.mxu0 0
  %301 = vmatprep.subr.bf16.mxu0 0
  %302 = vmatpush1.bf16.xpose.msra.mxu0 0
  %303 = vmatprep.subr.bf16.mxu0 0
  %304 = vmatpush1.bf16.xpose.msra.mxu0 0
  %305 = vmatprep.subr.bf16.mxu0 0
  %306 = vmatpush1.bf16.xpose.msra.mxu0 0
  %307 = vmatprep.subr.bf16.mxu0 0
  %308 = vmatpush1.bf16.xpose.msra.mxu0 0
  %309 = vmatprep.subr.bf16.mxu0 0
  %310 = vmatpush1.bf16.xpose.msra.mxu0 0
  %311 = vmatprep.subr.bf16.mxu0 0
  %312 = vmatpush1.bf16.xpose.msra.mxu0 0
  %313 = vmatprep.mubr.bf16.mxu0 0
  %314 = vmatmul.mubr.bf16.gmra.mrb[0].mxu0 %v273
  %v315 = vpop.f32.mrb[0].mxu0
  %v316 = vadd.f32 0.0, %v315
  %v317 = vpop.f32.mrb[0].mxu0
  %v318 = vpop.f32.mrb[0].mxu0
  %v319 = vadd.f32 0.0, %v318
  %v320 = vpop.f32.mrb[0].mxu0
  %321 = vmatprep.mubr.bf16.mxu0 0
  %322 = vmatmul.mubr.bf16.gmra.mrb[0].mxu0 %v276
  %v323 = vpop.f32.mrb[0].mxu0
  %v324 = vadd.f32 0.0, %v323
  %v325 = vpop.f32.mrb[0].mxu0
  %v326 = vpop.f32.mrb[0].mxu0
  %v327 = vadd.f32 0.0, %v326
  %v328 = vpop.f32.mrb[0].mxu0
  %329 = vdwg.mxu0
  %v331 = vlaneseq
  %v332 = vshrl.u32 %v331, 7
  %v333 = vsub.s32 0, %v332
  %v334 = vrot.slane %v190, %v333
  %335 = vset.pattern.permute.xlu0 0
  %336 = vperm.xlu0 %335, %v334
  %v337 = vpop.permute.xlu0 %336
  %v339 = vmul.f32 %v337, %v316
  %v340 = vmul.f32 %v337, %v319
  %v341 = vmul.f32 %v337, %v324
  %v342 = vmul.f32 %v337, %v327
  %v343 = vadd.f32 %v339, %v26
  %v344 = vadd.f32 %v340, %v27
  %v345 = vadd.f32 %v341, %v28
  %v346 = vadd.f32 %v342, %v29
  %348 = vrot.lane.b32.xlu0 %v191, 120
  %v349 = vpop.permute.xlu0 %348
  %351 = vxpose.xlu0.c.b16.start [1/8] %v349, 128
  %352 = vxpose.xlu0.c.b16.cont [2/8] 0, 128
  %353 = vxpose.xlu0.c.b16.cont [3/8] 0, 128
  %354 = vxpose.xlu0.c.b16.cont [4/8] 0, 128
  %355 = vxpose.xlu0.c.b16.cont [5/8] 0, 128
  %356 = vxpose.xlu0.c.b16.cont [6/8] 0, 128
  %357 = vxpose.xlu0.c.b16.cont [7/8] 0, 128
  %358 = vxpose.xlu0.c.b16.end [8/8] 0, 128
  %v359 = vpop.trf.xlu0
  %v360 = vpop.trf.xlu0
  %v361 = vpop.trf.xlu0
  %v362 = vpop.trf.xlu0
  %v363 = vpop.trf.xlu0
  %v364 = vpop.trf.xlu0
  %v365 = vpop.trf.xlu0
  %v366 = vpop.trf.xlu0
  %368 = vrot.lane.b32.xlu0 %v192, 120
  %v369 = vpop.permute.xlu0 %368
  %v371 = vsel %vm209, %v359, 0
  %v374 = vsel %vm213, %v369, 0
  %376 = vmatprep.subr.bf16.mxu0 0
  %377 = vmatpush1.bf16.msra.mxu0 %v374
  %378 = vmatprep.subr.bf16.mxu0 0
  %379 = vmatpush1.bf16.msra.mxu0 0
  %380 = vmatprep.subr.bf16.mxu0 0
  %381 = vmatpush1.bf16.msra.mxu0 0
  %382 = vmatprep.subr.bf16.mxu0 0
  %383 = vmatpush1.bf16.msra.mxu0 0
  %384 = vmatprep.subr.bf16.mxu0 0
  %385 = vmatpush1.bf16.msra.mxu0 0
  %386 = vmatprep.subr.bf16.mxu0 0
  %387 = vmatpush1.bf16.msra.mxu0 0
  %388 = vmatprep.subr.bf16.mxu0 0
  %389 = vmatpush1.bf16.msra.mxu0 0
  %390 = vmatprep.subr.bf16.mxu0 0
  %391 = vmatpush1.bf16.msra.mxu0 0
  %392 = vmatprep.subr.bf16.mxu0 0
  %393 = vmatpush1.bf16.msra.mxu0 0
  %394 = vmatprep.subr.bf16.mxu0 0
  %395 = vmatpush1.bf16.msra.mxu0 0
  %396 = vmatprep.subr.bf16.mxu0 0
  %397 = vmatpush1.bf16.msra.mxu0 0
  %398 = vmatprep.subr.bf16.mxu0 0
  %399 = vmatpush1.bf16.msra.mxu0 0
  %400 = vmatprep.subr.bf16.mxu0 0
  %401 = vmatpush1.bf16.msra.mxu0 0
  %402 = vmatprep.subr.bf16.mxu0 0
  %403 = vmatpush1.bf16.msra.mxu0 0
  %404 = vmatprep.subr.bf16.mxu0 0
  %405 = vmatpush1.bf16.msra.mxu0 0
  %406 = vmatprep.subr.bf16.mxu0 0
  %407 = vmatpush1.bf16.msra.mxu0 0
  %408 = vmatprep.mubr.bf16.mxu0 0
  %409 = vmatmul.mubr.bf16.gmra.mrb[0].mxu0 %v371
  %v410 = vpop.f32.mrb[0].mxu0
  %v411 = vadd.f32 0.0, %v410
  %v412 = vpop.f32.mrb[0].mxu0
  %v413 = vpop.f32.mrb[0].mxu0
  %v414 = vpop.f32.mrb[0].mxu0
  %415 = vdwg.mxu0
  %v416 = vsel %vm257, %v411, -inf
  %417 = vmax.xlane.f32.xlu0 %v416
  %v418 = vpop.xlane.xlu0 %417
  %v419 = vsub.f32 %v411, %v418
  %v420 = vmul.f32 %v419, 1.442695
  %v421 = vpow.pop %v420
  %v422 = vsel %vm257, %v421, 0.0
  %423 = vadd.xlane.f32.xlu0 %v422
  %v424 = vpop.xlane.xlu0 %423
  %v425 = vrcp.pop %v424
  %v426 = vmul.f32 %v421, %v425
  %v427 = vpack.c.bf16 %v426, %v426
  %430 = vrot.lane.b32.xlu0 %v269, 120
  %v431 = vpop.permute.xlu0 %430
  %432 = vrot.lane.b32.xlu0 %v270, 120
  %v433 = vpop.permute.xlu0 %432
  %v435 = vsel %vm257, %v431, 0
  %v438 = vsel %vm257, %v433, 0
  %v441 = vsel %vm257, %v427, 0
  %443 = vmatprep.subr.bf16.mxu0 0
  %444 = vmatpush1.bf16.xpose.msra.mxu0 %v441
  %445 = vmatprep.subr.bf16.mxu0 0
  %446 = vmatpush1.bf16.xpose.msra.mxu0 0
  %447 = vmatprep.subr.bf16.mxu0 0
  %448 = vmatpush1.bf16.xpose.msra.mxu0 0
  %449 = vmatprep.subr.bf16.mxu0 0
  %450 = vmatpush1.bf16.xpose.msra.mxu0 0
  %451 = vmatprep.subr.bf16.mxu0 0
  %452 = vmatpush1.bf16.xpose.msra.mxu0 0
  %453 = vmatprep.subr.bf16.mxu0 0
  %454 = vmatpush1.bf16.xpose.msra.mxu0 0
  %455 = vmatprep.subr.bf16.mxu0 0
  %456 = vmatpush1.bf16.xpose.msra.mxu0 0
  %457 = vmatprep.subr.bf16.mxu0 0
  %458 = vmatpush1.bf16.xpose.msra.mxu0 0
  %459 = vmatprep.subr.bf16.mxu0 0
  %460 = vmatpush1.bf16.xpose.msra.mxu0 0
  %461 = vmatprep.subr.bf16.mxu0 0
  %462 = vmatpush1.bf16.xpose.msra.mxu0 0
  %463 = vmatprep.subr.bf16.mxu0 0
  %464 = vmatpush1.bf16.xpose.msra.mxu0 0
  %465 = vmatprep.subr.bf16.mxu0 0
  %466 = vmatpush1.bf16.xpose.msra.mxu0 0
  %467 = vmatprep.subr.bf16.mxu0 0
  %468 = vmatpush1.bf16.xpose.msra.mxu0 0
  %469 = vmatprep.subr.bf16.mxu0 0
  %470 = vmatpush1.bf16.xpose.msra.mxu0 0
  %471 = vmatprep.subr.bf16.mxu0 0
  %472 = vmatpush1.bf16.xpose.msra.mxu0 0
  %473 = vmatprep.subr.bf16.mxu0 0
  %474 = vmatpush1.bf16.xpose.msra.mxu0 0
  %475 = vmatprep.mubr.bf16.mxu0 0
  %476 = vmatmul.mubr.bf16.gmra.mrb[0].mxu0 %v435
  %v477 = vpop.f32.mrb[0].mxu0
  %v478 = vadd.f32 0.0, %v477
  %v479 = vpop.f32.mrb[0].mxu0
  %v480 = vpop.f32.mrb[0].mxu0
  %v481 = vadd.f32 0.0, %v480
  %v482 = vpop.f32.mrb[0].mxu0
  %483 = vmatprep.mubr.bf16.mxu0 0
  %484 = vmatmul.mubr.bf16.gmra.mrb[0].mxu0 %v438
  %v485 = vpop.f32.mrb[0].mxu0
  %v486 = vadd.f32 0.0, %v485
  %v487 = vpop.f32.mrb[0].mxu0
  %v488 = vpop.f32.mrb[0].mxu0
  %v489 = vadd.f32 0.0, %v488
  %v490 = vpop.f32.mrb[0].mxu0
  %491 = vdwg.mxu0
  %v492 = vmul.f32 %v337, %v478
  %v493 = vmul.f32 %v337, %v481
  %v494 = vmul.f32 %v337, %v486
  %v495 = vmul.f32 %v337, %v489
  %500 = vrot.lane.b32.xlu0 %v26, 120
  %v501 = vpop.permute.xlu0 %500
  %502 = vrot.lane.b32.xlu0 %v27, 120
  %v503 = vpop.permute.xlu0 %502
  %504 = vrot.lane.b32.xlu0 %v28, 120
  %v505 = vpop.permute.xlu0 %504
  %506 = vrot.lane.b32.xlu0 %v29, 120
  %v507 = vpop.permute.xlu0 %506
  %v512 = vadd.f32 %v492, %v501
  %v513 = vadd.f32 %v493, %v503
  %v514 = vadd.f32 %v494, %v505
  %v515 = vadd.f32 %v495, %v507
  %520 = vrot.lane.b32.xlu0 %v512, 8
  %v521 = vpop.permute.xlu0 %520
  %522 = vrot.lane.b32.xlu0 %v513, 8
  %v523 = vpop.permute.xlu0 %522
  %524 = vrot.lane.b32.xlu0 %v514, 8
  %v525 = vpop.permute.xlu0 %524
  %526 = vrot.lane.b32.xlu0 %v515, 8
  %v527 = vpop.permute.xlu0 %526
  %v532 = vsel %vm257, %v343, %v521
  %v533 = vsel %vm257, %v344, %v523
  %v534 = vsel %vm257, %v345, %v525
  %v535 = vsel %vm257, %v346, %v527
  %vm536 = vcmask 130048
  %537 = vst.msk [vmem:[%s6] sm:$0xff] %vm536, %v532
  %538 = vst.msk [vmem:[%s6 + $0x8] sm:$0xff] %vm536, %v533
  %539 = vst.msk [vmem:[%s6 + $0x10] sm:$0xff] %vm536, %v534
  %540 = vst.msk [vmem:[%s6 + $0x18] sm:$0xff] %vm536, %v535
  // Predicated region
  $region26: #{res_generator1_forward.11} parent=0 // pred_check
    _
  $region27: #{res_generator1_forward.11} parent=0 // pred_check_branch
    %542 = sbr.rel (0) target = $region29
  $region28: #{res_generator1_forward.11} parent=0 // pred_region
    _
  $region29: #{res_generator1_forward.11} parent=0 // pred_fallthru
    _
  // Predicated region
  $region30: #{res_generator1_forward.11} parent=0 // pred_check
    _
  $region31: #{res_generator1_forward.11} parent=0 // pred_check_branch
    %544 = sbr.rel (0) target = $region33
  $region32: #{res_generator1_forward.11} parent=0 // pred_region
    _
  $region33: #{res_generator1_forward.11} parent=0 // pred_fallthru
    _

// kernel: tile.34
$region0: #{tile.34}
  %s0 = inlined_call_operand.vmem [shape: f32[16,2,16], index: 0, kind: input, shape index: {}]
  %s1 = inlined_call_operand.vmem [shape: f32[16,32], index: 1, kind: output, shape index: {}]
  $region1: #{tile.34} parent=0
    #allocation0 [shape = 'u8[65536]{0}', space=vmem, size = 0x10000, scoped, tag = 'scoped mem for input reshape']
    %s3 = sshllo.u32 0, 2
    %s4 = smul.addr 2, 15
    %s5 = scalar_lea.vmem %s0, %s4
    %v6 = vld [vmem:[%s5] sm:%s3]
    %s7 = scalar_lea.vmem [#allocation0], 120
    %8 = vst [vmem:[%s7] sm:%s3] %v6
    %s9 = smul.addr 2, 14
    %s10 = scalar_lea.vmem %s0, %s9
    %v11 = vld [vmem:[%s10] sm:%s3]
    %s12 = scalar_lea.vmem [#allocation0], 112
    %13 = vst [vmem:[%s12] sm:%s3] %v11
    %s14 = smul.addr 2, 13
    %s15 = scalar_lea.vmem %s0, %s14
    %v16 = vld [vmem:[%s15] sm:%s3]
    %s17 = scalar_lea.vmem [#allocation0], 104
    %18 = vst [vmem:[%s17] sm:%s3] %v16
    %s19 = smul.addr 2, 12
    %s20 = scalar_lea.vmem %s0, %s19
    %v21 = vld [vmem:[%s20] sm:%s3]
    %s22 = scalar_lea.vmem [#allocation0], 96
    %23 = vst [vmem:[%s22] sm:%s3] %v21
    %s24 = smul.addr 2, 11
    %s25 = scalar_lea.vmem %s0, %s24
    %v26 = vld [vmem:[%s25] sm:%s3]
    %s27 = scalar_lea.vmem [#allocation0], 88
    %28 = vst [vmem:[%s27] sm:%s3] %v26
    %s29 = smul.addr 2, 10
    %s30 = scalar_lea.vmem %s0, %s29
    %v31 = vld [vmem:[%s30] sm:%s3]
    %s32 = scalar_lea.vmem [#allocation0], 80
    %33 = vst [vmem:[%s32] sm:%s3] %v31
    %s34 = smul.addr 2, 9
    %s35 = scalar_lea.vmem %s0, %s34
    %v36 = vld [vmem:[%s35] sm:%s3]
    %s37 = scalar_lea.vmem [#allocation0], 72
    %38 = vst [vmem:[%s37] sm:%s3] %v36
    %s39 = smul.addr 2, 8
    %s40 = scalar_lea.vmem %s0, %s39
    %v41 = vld [vmem:[%s40] sm:%s3]
    %s42 = scalar_lea.vmem [#allocation0], 64
    %43 = vst [vmem:[%s42] sm:%s3] %v41
    %s44 = smul.addr 2, 7
    %s45 = scalar_lea.vmem %s0, %s44
    %v46 = vld [vmem:[%s45] sm:%s3]
    %s47 = scalar_lea.vmem [#allocation0], 56
    %48 = vst [vmem:[%s47] sm:%s3] %v46
    %s49 = smul.addr 2, 6
    %s50 = scalar_lea.vmem %s0, %s49
    %v51 = vld [vmem:[%s50] sm:%s3]
    %s52 = scalar_lea.vmem [#allocation0], 48
    %53 = vst [vmem:[%s52] sm:%s3] %v51
    %s54 = smul.addr 2, 5
    %s55 = scalar_lea.vmem %s0, %s54
    %v56 = vld [vmem:[%s55] sm:%s3]
    %s57 = scalar_lea.vmem [#allocation0], 40
    %58 = vst [vmem:[%s57] sm:%s3] %v56
    %s59 = smul.addr 2, 4
    %s60 = scalar_lea.vmem %s0, %s59
    %v61 = vld [vmem:[%s60] sm:%s3]
    %s62 = scalar_lea.vmem [#allocation0], 32
    %63 = vst [vmem:[%s62] sm:%s3] %v61
    %s64 = smul.addr 2, 3
    %s65 = scalar_lea.vmem %s0, %s64
    %v66 = vld [vmem:[%s65] sm:%s3]
    %s67 = scalar_lea.vmem [#allocation0], 24
    %68 = vst [vmem:[%s67] sm:%s3] %v66
    %s69 = smul.addr 2, 2
    %s70 = scalar_lea.vmem %s0, %s69
    %v71 = vld [vmem:[%s70] sm:%s3]
    %s72 = scalar_lea.vmem [#allocation0], 16
    %73 = vst [vmem:[%s72] sm:%s3] %v71
    %s74 = scalar_lea.vmem %s0, 2
    %v75 = vld [vmem:[%s74] sm:%s3]
    %s76 = scalar_lea.vmem [#allocation0], 8
    %77 = vst [vmem:[%s76] sm:%s3] %v75
    %v78 = vld [vmem:[%s0] sm:%s3]
    %79 = vst [vmem:[#allocation0] sm:%s3] %v78
    %v80 = vld [vmem:[#allocation0] ss:$8 sm:$0xf]
    %v81 = vld [vmem:[#allocation0] ss:$8 sm:$0xf0]
    %vm82 = vcmask 1047556
    %v83 = vsel %vm82, %v81, %v80
    %vm84 = vcmask 130048
    %85 = vst.msk [vmem:[%s1] sm:$0xff] %vm84, %v83
    %s86 = scalar_lea.vmem [#allocation0], 64
    %v87 = vld [vmem:[%s86] ss:$8 sm:$0xf]
    %s88 = scalar_lea.vmem [#allocation0], 64
    %v89 = vld [vmem:[%s88] ss:$8 sm:$0xf0]
    %vm90 = vcmask 1047556
    %v91 = vsel %vm90, %v89, %v87
    %vm92 = vcmask 130048
    %s93 = scalar_lea.vmem %s1, 8
    %94 = vst.msk [vmem:[%s93] sm:$0xff] %vm92, %v91
    %s95 = scalar_lea.vmem [#allocation0], 1
    %v96 = vld [vmem:[%s95] ss:$8 sm:$0xf]
    %s97 = scalar_lea.vmem [#allocation0], 1
    %v98 = vld [vmem:[%s97] ss:$8 sm:$0xf0]
    %vm99 = vcmask 1047556
    %v100 = vsel %vm99, %v98, %v96
    %101 = vrot.lane.b32.xlu0 %v100, 16
    %v102 = vpop.permute.xlu0 %101
    %vm103 = vcmask 261248
    %104 = vst.msk [vmem:[%s1] sm:$0xff] %vm103, %v102
    %s105 = scalar_lea.vmem [#allocation0], 65
    %v106 = vld [vmem:[%s105] ss:$8 sm:$0xf]
    %s107 = scalar_lea.vmem [#allocation0], 65
    %v108 = vld [vmem:[%s107] ss:$8 sm:$0xf0]
    %vm109 = vcmask 1047556
    %v110 = vsel %vm109, %v108, %v106
    %111 = vrot.lane.b32.xlu0 %v110, 16
    %v112 = vpop.permute.xlu0 %111
    %vm113 = vcmask 261248
    %s114 = scalar_lea.vmem %s1, 8
    %115 = vst.msk [vmem:[%s114] sm:$0xff] %vm113, %v112

// kernel: tile.39
$region0: #{tile.39}
  %s0 = inlined_call_operand.vmem [shape: f32[8,2,32], index: 0, kind: input, shape index: {}]
  %s1 = inlined_call_operand.vmem [shape: f32[8,64], index: 1, kind: output, shape index: {}]
  $region1: #{tile.39} parent=0
    #allocation0 [shape = 'u8[32768]{0}', space=vmem, size = 0x8000, scoped, tag = 'scoped mem for input reshape']
    %s3 = sshllo.u32 0, 2
    %s4 = smul.addr 2, 7
    %s5 = scalar_lea.vmem %s0, %s4
    %v6 = vld [vmem:[%s5] sm:%s3]
    %s7 = scalar_lea.vmem [#allocation0], 56
    %8 = vst [vmem:[%s7] sm:%s3] %v6
    %s9 = smul.addr 2, 6
    %s10 = scalar_lea.vmem %s0, %s9
    %v11 = vld [vmem:[%s10] sm:%s3]
    %s12 = scalar_lea.vmem [#allocation0], 48
    %13 = vst [vmem:[%s12] sm:%s3] %v11
    %s14 = smul.addr 2, 5
    %s15 = scalar_lea.vmem %s0, %s14
    %v16 = vld [vmem:[%s15] sm:%s3]
    %s17 = scalar_lea.vmem [#allocation0], 40
    %18 = vst [vmem:[%s17] sm:%s3] %v16
    %s19 = smul.addr 2, 4
    %s20 = scalar_lea.vmem %s0, %s19
    %v21 = vld [vmem:[%s20] sm:%s3]
    %s22 = scalar_lea.vmem [#allocation0], 32
    %23 = vst [vmem:[%s22] sm:%s3] %v21
    %s24 = smul.addr 2, 3
    %s25 = scalar_lea.vmem %s0, %s24
    %v26 = vld [vmem:[%s25] sm:%s3]
    %s27 = scalar_lea.vmem [#allocation0], 24
    %28 = vst [vmem:[%s27] sm:%s3] %v26
    %s29 = smul.addr 2, 2
    %s30 = scalar_lea.vmem %s0, %s29
    %v31 = vld [vmem:[%s30] sm:%s3]
    %s32 = scalar_lea.vmem [#allocation0], 16
    %33 = vst [vmem:[%s32] sm:%s3] %v31
    %s34 = scalar_lea.vmem %s0, 2
    %v35 = vld [vmem:[%s34] sm:%s3]
    %s36 = scalar_lea.vmem [#allocation0], 8
    %37 = vst [vmem:[%s36] sm:%s3] %v35
    %v38 = vld [vmem:[%s0] sm:%s3]
    %39 = vst [vmem:[#allocation0] sm:%s3] %v38
    %v40 = vld [vmem:[#allocation0] ss:$8 sm:$0xf]
    %v41 = vld [vmem:[#allocation0] ss:$8 sm:$0xf0]
    %vm42 = vcmask 1047556
    %v43 = vsel %vm42, %v41, %v40
    %vm44 = vcmask 261120
    %45 = vst.msk [vmem:[%s1] sm:$0xff] %vm44, %v43
    %s46 = scalar_lea.vmem [#allocation0], 1
    %v47 = vld [vmem:[%s46] ss:$8 sm:$0xf]
    %s48 = scalar_lea.vmem [#allocation0], 1
    %v49 = vld [vmem:[%s48] ss:$8 sm:$0xf0]
    %vm50 = vcmask 1047556
    %v51 = vsel %vm50, %v49, %v47
    %52 = vrot.lane.b32.xlu0 %v51, 32
    %v53 = vpop.permute.xlu0 %52
    %vm54 = vcmask 523520
    %55 = vst.msk [vmem:[%s1] sm:$0xff] %vm54, %v53

// kernel: res_generator1_forward.13
$region0: #{res_generator1_forward.13}
  #allocation0 [shape = 'u32[]', space=smem, size = 0x4, offset = 0x4, fixed_abs, tag = 'smem constant byte address 0x4 - core index']
  #allocation1 [shape = 'u32[144,128]{1,0:T(1,128)}', space=vmem, size = 0x12000, scoped, tag = 'internal scratch']
  %s0 = inlined_call_operand.vmem [shape: f32[16,32], index: 0, kind: input, shape index: {}]
  %s1 = inlined_call_operand.vmem [shape: f32[16,32], index: 1, kind: input, shape index: {}]
  %s2 = inlined_call_operand.vmem [shape: f32[32,64], index: 2, kind: input, shape index: {}]
  %s3 = inlined_call_operand.vmem [shape: f32[16,1], index: 3, kind: input, shape index: {}]
  %s4 = inlined_call_operand.vmem [shape: f32[16,1], index: 4, kind: input, shape index: {}]
  %s5 = inlined_call_operand.vmem [shape: f32[8,1], index: 5, kind: input, shape index: {}]
  %s6 = inlined_call_operand.vmem [shape: f32[8,1], index: 6, kind: input, shape index: {}]
  %s7 = inlined_call_operand.vmem [shape: f32[8,48], index: 7, kind: input, shape index: {}]
  %s8 = inlined_call_operand.vmem [shape: f32[8,1], index: 8, kind: input, shape index: {}]
  %s9 = inlined_call_operand.vmem [shape: f32[8,24], index: 9, kind: input, shape index: {}]
  %s10 = inlined_call_operand.vmem [shape: f32[8,1], index: 10, kind: input, shape index: {}]
  %s11 = inlined_call_operand.vmem [shape: f32[8,48], index: 11, kind: input, shape index: {}]
  %s12 = inlined_call_operand.vmem [shape: f32[8,1], index: 12, kind: input, shape index: {}]
  %s13 = inlined_call_operand.vmem [shape: f32[8,64], index: 13, kind: output, shape index: {}]
  %s14 = sld [smem:[#allocation0]]
  $region62: #{res_generator1_forward.13} parent=0
    _
  %s16 = ssub.s32 1, %s14
  %s17 = scalar_select 0, %s16, %s14
  // Predicated region
  $region2: #{res_generator1_forward.13} parent=0 // pred_check
    _
  $region3: #{res_generator1_forward.13} parent=0 // pred_check_branch
    %19 = sbr.rel (0) target = $region5
  $region4: #{res_generator1_forward.13} parent=0 // pred_region
    _
  $region5: #{res_generator1_forward.13} parent=0 // pred_fallthru
    _
  // Predicated region
  $region6: #{res_generator1_forward.13} parent=0 // pred_check
    _
  $region7: #{res_generator1_forward.13} parent=0 // pred_check_branch
    %21 = sbr.rel (0) target = $region9
  $region8: #{res_generator1_forward.13} parent=0 // pred_region
    _
  $region9: #{res_generator1_forward.13} parent=0 // pred_fallthru
    _
  // Predicated region
  $region10: #{res_generator1_forward.13} parent=0 // pred_check
    _
  $region11: #{res_generator1_forward.13} parent=0 // pred_check_branch
    %23 = sbr.rel (0) target = $region13
  $region12: #{res_generator1_forward.13} parent=0 // pred_region
    _
  $region13: #{res_generator1_forward.13} parent=0 // pred_fallthru
    _
  // Predicated region
  $region14: #{res_generator1_forward.13} parent=0 // pred_check
    _
  $region15: #{res_generator1_forward.13} parent=0 // pred_check_branch
    %25 = sbr.rel (0) target = $region17
  $region16: #{res_generator1_forward.13} parent=0 // pred_region
    _
  $region17: #{res_generator1_forward.13} parent=0 // pred_fallthru
    _
  // Predicated region
  $region18: #{res_generator1_forward.13} parent=0 // pred_check
    _
  $region19: #{res_generator1_forward.13} parent=0 // pred_check_branch
    %27 = sbr.rel (0) target = $region21
  $region20: #{res_generator1_forward.13} parent=0 // pred_region
    _
  $region21: #{res_generator1_forward.13} parent=0 // pred_fallthru
    _
  // Predicated region
  $region22: #{res_generator1_forward.13} parent=0 // pred_check
    _
  $region23: #{res_generator1_forward.13} parent=0 // pred_check_branch
    %29 = sbr.rel (0) target = $region25
  $region24: #{res_generator1_forward.13} parent=0 // pred_region
    _
  $region25: #{res_generator1_forward.13} parent=0 // pred_fallthru
    _
  // Predicated region
  $region26: #{res_generator1_forward.13} parent=0 // pred_check
    _
  $region27: #{res_generator1_forward.13} parent=0 // pred_check_branch
    %31 = sbr.rel (0) target = $region29
  $region28: #{res_generator1_forward.13} parent=0 // pred_region
    _
  $region29: #{res_generator1_forward.13} parent=0 // pred_fallthru
    _
  // Predicated region
  $region30: #{res_generator1_forward.13} parent=0 // pred_check
    _
  $region31: #{res_generator1_forward.13} parent=0 // pred_check_branch
    %33 = sbr.rel (0) target = $region33
  $region32: #{res_generator1_forward.13} parent=0 // pred_region
    _
  $region33: #{res_generator1_forward.13} parent=0 // pred_fallthru
    _
  // Predicated region
  $region34: #{res_generator1_forward.13} parent=0 // pred_check
    _
  $region35: #{res_generator1_forward.13} parent=0 // pred_check_branch
    %35 = sbr.rel (0) target = $region37
  $region36: #{res_generator1_forward.13} parent=0 // pred_region
    _
  $region37: #{res_generator1_forward.13} parent=0 // pred_fallthru
    _
  // Predicated region
  $region38: #{res_generator1_forward.13} parent=0 // pred_check
    _
  $region39: #{res_generator1_forward.13} parent=0 // pred_check_branch
    %37 = sbr.rel (0) target = $region41
  $region40: #{res_generator1_forward.13} parent=0 // pred_region
    _
  $region41: #{res_generator1_forward.13} parent=0 // pred_fallthru
    _
  // Predicated region
  $region42: #{res_generator1_forward.13} parent=0 // pred_check
    _
  $region43: #{res_generator1_forward.13} parent=0 // pred_check_branch
    %39 = sbr.rel (0) target = $region45
  $region44: #{res_generator1_forward.13} parent=0 // pred_region
    _
  $region45: #{res_generator1_forward.13} parent=0 // pred_fallthru
    _
  // Predicated region
  $region46: #{res_generator1_forward.13} parent=0 // pred_check
    _
  $region47: #{res_generator1_forward.13} parent=0 // pred_check_branch
    %41 = sbr.rel (0) target = $region49
  $region48: #{res_generator1_forward.13} parent=0 // pred_region
    _
  $region49: #{res_generator1_forward.13} parent=0 // pred_fallthru
    _
  // Predicated region
  $region50: #{res_generator1_forward.13} parent=0 // pred_check
    _
  $region51: #{res_generator1_forward.13} parent=0 // pred_check_branch
    %43 = sbr.rel (0) target = $region53
  $region52: #{res_generator1_forward.13} parent=0 // pred_region
    _
  $region53: #{res_generator1_forward.13} parent=0 // pred_fallthru
    _
  %v45 = vld [vmem:[%s0] sm:$0xff]
  %v46 = vld [vmem:[%s0 + $0x8] sm:$0xff]
  %v47 = vld [vmem:[%s1] sm:$0xff]
  %v48 = vld [vmem:[%s1 + $0x8] sm:$0xff]
  %v49 = vadd.f32 %v45, %v47
  %v50 = vadd.f32 %v46, %v48
  %v51 = vld [vmem:[%s3] sm:$0xff]
  %v52 = vld [vmem:[%s3 + $0x8] sm:$0xff]
  %v53 = vld [vmem:[%s4] sm:$0xff]
  %v54 = vld [vmem:[%s4 + $0x8] sm:$0xff]
  %vm55 = vcmask 261120
  %v56 = vsel %vm55, %v49, 0.0
  %57 = vadd.xlane.f32.xlu0 %v56
  %v58 = vpop.xlane.xlu0 %57
  %v59 = vsel %vm55, %v50, 0.0
  %60 = vadd.xlane.f32.xlu0 %v59
  %v61 = vpop.xlane.xlu0 %60
  %v62 = vrcp.pop 32.0
  %v63 = vmul.f32 %v58, %v62
  %v64 = vmul.f32 %v61, %v62
  %v65 = vsub.f32 %v49, %v63
  %v66 = vsub.f32 %v50, %v64
  %v67 = vmul.f32 %v65, %v65
  %v68 = vmul.f32 %v66, %v66
  %v69 = vsel %vm55, %v67, 0.0
  %70 = vadd.xlane.f32.xlu0 %v69
  %v71 = vpop.xlane.xlu0 %70
  %v72 = vsel %vm55, %v68, 0.0
  %73 = vadd.xlane.f32.xlu0 %v72
  %v74 = vpop.xlane.xlu0 %73
  %v75 = vmul.f32 %v71, %v62
  %v76 = vmul.f32 %v74, %v62
  %v77 = vadd.f32 %v75, 1e-05
  %v78 = vadd.f32 %v76, 1e-05
  %v79 = vrsqrt.pop %v77
  %v80 = vrsqrt.pop %v78
  %v81 = vmul.f32 %v65, %v79
  %v82 = vmul.f32 %v66, %v80
  %84 = vset.pattern.permute.xlu0 0
  %85 = vperm.xlu0 %84, %v51
  %v86 = vpop.permute.xlu0 %85
  %89 = vset.pattern.permute.xlu0 0
  %90 = vperm.xlu0 %89, %v52
  %v91 = vpop.permute.xlu0 %90
  %v93 = vmul.f32 %v81, %v86
  %v94 = vmul.f32 %v82, %v91
  %96 = vset.pattern.permute.xlu0 0
  %97 = vperm.xlu0 %96, %v53
  %v98 = vpop.permute.xlu0 %97
  %101 = vset.pattern.permute.xlu0 0
  %102 = vperm.xlu0 %101, %v54
  %v103 = vpop.permute.xlu0 %102
  %v105 = vadd.f32 %v93, %v98
  %v106 = vadd.f32 %v94, %v103
  %v107 = vld [vmem:[%s7] sm:$0xff]
  %v108 = vld [vmem:[%s8] sm:$0xff]
  %v109 = vmax.f32 %v105, 0.0
  %v110 = vmax.f32 %v106, 0.0
  %113 = vrot.lane.b32.xlu0 %v109, 1
  %v114 = vpop.permute.xlu0 %113
  %115 = vrot.lane.b32.xlu0 %v110, 1
  %v116 = vpop.permute.xlu0 %115
  %vm119 = vcmask 7168
  %v120 = vsel %vm119, 0.0, %v114
  %v121 = vsel %vm119, 0.0, %v116
  %vm122 = vcmask 138240
  %v123 = vsel %vm122, %v120, 0.0
  %v124 = vsel %vm122, %v121, 0.0
  %125 = vrot.lane.b32.xlu0 %v109, 113
  %v126 = vpop.permute.xlu0 %125
  %127 = vrot.lane.b32.xlu0 %v110, 113
  %v128 = vpop.permute.xlu0 %127
  %v131 = vsel %vm119, 0.0, %v126
  %v132 = vsel %vm119, 0.0, %v128
  %v133 = vsel %vm122, %v131, 0.0
  %v134 = vsel %vm122, %v132, 0.0
  %137 = vrot.lane.b32.xlu0 %v133, 16
  %v138 = vpop.permute.xlu0 %137
  %139 = vrot.lane.b32.xlu0 %v134, 16
  %v140 = vpop.permute.xlu0 %139
  %vm143 = vcmask 130048
  %v144 = vsel %vm143, %v123, %v138
  %v145 = vsel %vm143, %v124, %v140
  %148 = vrot.lane.b32.xlu0 %v123, 127
  %v149 = vpop.permute.xlu0 %148
  %150 = vrot.lane.b32.xlu0 %v124, 127
  %v151 = vpop.permute.xlu0 %150
  %154 = vrot.lane.b32.xlu0 %v133, 15
  %v155 = vpop.permute.xlu0 %154
  %156 = vrot.lane.b32.xlu0 %v134, 15
  %v157 = vpop.permute.xlu0 %156
  %v160 = vsel %vm143, %v149, %v155
  %v161 = vsel %vm143, %v151, %v157
  %162 = vrot.lane.b32.xlu0 %v123, 126
  %v163 = vpop.permute.xlu0 %162
  %164 = vrot.lane.b32.xlu0 %v124, 126
  %v165 = vpop.permute.xlu0 %164
  %168 = vrot.lane.b32.xlu0 %v133, 14
  %v169 = vpop.permute.xlu0 %168
  %170 = vrot.lane.b32.xlu0 %v134, 14
  %v171 = vpop.permute.xlu0 %170
  %v174 = vsel %vm143, %v163, %v169
  %v175 = vsel %vm143, %v165, %v171
  %v176 = vpack.c.bf16 %v107, %v107
  %v177 = vpack.c.bf16 %v145, %v144
  %v178 = vpack.c.bf16 %v161, %v160
  %v179 = vpack.c.bf16 %v175, %v174
  %181 = vset.pattern.permute.xlu0 0
  %182 = vperm.xlu0 %181, %v108
  %v183 = vpop.permute.xlu0 %182
  %vm185 = vcmask 392192
  %v187 = vsel %vm185, %v176, 0
  %189 = vmatprep.subr.bf16.mxu0 0
  %190 = vmatpush1.bf16.msra.mxu0 %v177
  %191 = vmatprep.subr.bf16.mxu0 0
  %192 = vmatpush1.bf16.msra.mxu0 %v178
  %193 = vmatprep.subr.bf16.mxu0 0
  %194 = vmatpush1.bf16.msra.mxu0 %v179
  %195 = vmatprep.subr.bf16.mxu0 0
  %196 = vmatpush1.bf16.msra.mxu0 0
  %197 = vmatprep.subr.bf16.mxu0 0
  %198 = vmatpush1.bf16.msra.mxu0 0
  %199 = vmatprep.subr.bf16.mxu0 0
  %200 = vmatpush1.bf16.msra.mxu0 0
  %201 = vmatprep.subr.bf16.mxu0 0
  %202 = vmatpush1.bf16.msra.mxu0 0
  %203 = vmatprep.subr.bf16.mxu0 0
  %204 = vmatpush1.bf16.msra.mxu0 0
  %205 = vmatprep.subr.bf16.mxu0 0
  %206 = vmatpush1.bf16.msra.mxu0 0
  %207 = vmatprep.subr.bf16.mxu0 0
  %208 = vmatpush1.bf16.msra.mxu0 0
  %209 = vmatprep.subr.bf16.mxu0 0
  %210 = vmatpush1.bf16.msra.mxu0 0
  %211 = vmatprep.subr.bf16.mxu0 0
  %212 = vmatpush1.bf16.msra.mxu0 0
  %213 = vmatprep.subr.bf16.mxu0 0
  %214 = vmatpush1.bf16.msra.mxu0 0
  %215 = vmatprep.subr.bf16.mxu0 0
  %216 = vmatpush1.bf16.msra.mxu0 0
  %217 = vmatprep.subr.bf16.mxu0 0
  %218 = vmatpush1.bf16.msra.mxu0 0
  %219 = vmatprep.subr.bf16.mxu0 0
  %220 = vmatpush1.bf16.msra.mxu0 0
  %221 = vmatprep.mubr.bf16.mxu0 0
  %222 = vmatmul.mubr.bf16.gmra.mrb[0].mxu0 %v187
  %v223 = vpop.f32.mrb[0].mxu0
  %v224 = vadd.f32 %v183, %v223
  %v225 = vpop.f32.mrb[0].mxu0
  %v226 = vpop.f32.mrb[0].mxu0
  %v227 = vpop.f32.mrb[0].mxu0
  %228 = vdwg.mxu0
  %v229 = vld [vmem:[%s5] sm:$0xff]
  %v230 = vld [vmem:[%s6] sm:$0xff]
  %v231 = vsel %vm55, %v224, 0.0
  %232 = vadd.xlane.f32.xlu0 %v231
  %v233 = vpop.xlane.xlu0 %232
  %v234 = vmul.f32 %v233, %v62
  %v235 = vsub.f32 %v224, %v234
  %v236 = vmul.f32 %v235, %v235
  %v237 = vsel %vm55, %v236, 0.0
  %238 = vadd.xlane.f32.xlu0 %v237
  %v239 = vpop.xlane.xlu0 %238
  %v240 = vmul.f32 %v239, %v62
  %v241 = vadd.f32 %v240, 1e-05
  %v242 = vrsqrt.pop %v241
  %v243 = vmul.f32 %v235, %v242
  %245 = vset.pattern.permute.xlu0 0
  %246 = vperm.xlu0 %245, %v229
  %v247 = vpop.permute.xlu0 %246
  %v249 = vmul.f32 %v243, %v247
  %251 = vset.pattern.permute.xlu0 0
  %252 = vperm.xlu0 %251, %v230
  %v253 = vpop.permute.xlu0 %252
  %v255 = vadd.f32 %v249, %v253
  %v256 = vmax.f32 %v255, 0.0
  %v257 = vld [vmem:[%s2] sm:$0xff]
  %v258 = vld [vmem:[%s2 + $0x8] sm:$0xff]
  %v259 = vld [vmem:[%s2 + $0x10] sm:$0xff]
  %v260 = vld [vmem:[%s2 + $0x18] sm:$0xff]
  %v262 = vsel %vm55, %v256, 0
  %264 = vmatprep.subr.mxu0 0.0
  %265 = vmatpush1.msra.mxu0 %v257
  %266 = vmatprep.subr.mxu0 0.0
  %267 = vmatpush1.msra.mxu0 %v258
  %268 = vmatprep.subr.mxu0 0.0
  %269 = vmatpush1.msra.mxu0 %v259
  %270 = vmatprep.subr.mxu0 0.0
  %271 = vmatpush1.msra.mxu0 %v260
  %272 = vmatprep.subr.mxu0 0.0
  %273 = vmatpush1.msra.mxu0 0.0
  %274 = vmatprep.subr.mxu0 0.0
  %275 = vmatpush1.msra.mxu0 0.0
  %276 = vmatprep.subr.mxu0 0.0
  %277 = vmatpush1.msra.mxu0 0.0
  %278 = vmatprep.subr.mxu0 0.0
  %279 = vmatpush1.msra.mxu0 0.0
  %280 = vmatprep.subr.mxu0 0.0
  %281 = vmatpush1.msra.mxu0 0.0
  %282 = vmatprep.subr.mxu0 0.0
  %283 = vmatpush1.msra.mxu0 0.0
  %284 = vmatprep.subr.mxu0 0.0
  %285 = vmatpush1.msra.mxu0 0.0
  %286 = vmatprep.subr.mxu0 0.0
  %287 = vmatpush1.msra.mxu0 0.0
  %288 = vmatprep.subr.mxu0 0.0
  %289 = vmatpush1.msra.mxu0 0.0
  %290 = vmatprep.subr.mxu0 0.0
  %291 = vmatpush1.msra.mxu0 0.0
  %292 = vmatprep.subr.mxu0 0.0
  %293 = vmatpush1.msra.mxu0 0.0
  %294 = vmatprep.subr.mxu0 0.0
  %295 = vmatpush1.msra.mxu0 0.0
  %296 = vmatprep.subr.mxu0 0.0
  %297 = vmatpush1.msra.mxu0 0.0
  %298 = vmatprep.subr.mxu0 0.0
  %299 = vmatpush1.msra.mxu0 0.0
  %300 = vmatprep.subr.mxu0 0.0
  %301 = vmatpush1.msra.mxu0 0.0
  %302 = vmatprep.subr.mxu0 0.0
  %303 = vmatpush1.msra.mxu0 0.0
  %304 = vmatprep.subr.mxu0 0.0
  %305 = vmatpush1.msra.mxu0 0.0
  %306 = vmatprep.subr.mxu0 0.0
  %307 = vmatpush1.msra.mxu0 0.0
  %308 = vmatprep.subr.mxu0 0.0
  %309 = vmatpush1.msra.mxu0 0.0
  %310 = vmatprep.subr.mxu0 0.0
  %311 = vmatpush1.msra.mxu0 0.0
  %312 = vmatprep.subr.mxu0 0.0
  %313 = vmatpush1.msra.mxu0 0.0
  %314 = vmatprep.subr.mxu0 0.0
  %315 = vmatpush1.msra.mxu0 0.0
  %316 = vmatprep.subr.mxu0 0.0
  %317 = vmatpush1.msra.mxu0 0.0
  %318 = vmatprep.subr.mxu0 0.0
  %319 = vmatpush1.msra.mxu0 0.0
  %320 = vmatprep.subr.mxu0 0.0
  %321 = vmatpush1.msra.mxu0 0.0
  %322 = vmatprep.subr.mxu0 0.0
  %323 = vmatpush1.msra.mxu0 0.0
  %324 = vmatprep.subr.mxu0 0.0
  %325 = vmatpush1.msra.mxu0 0.0
  %326 = vmatprep.subr.mxu0 0.0
  %327 = vmatpush1.msra.mxu0 0.0
  %328 = vmatprep.mubr.f32.mxu0 0.0
  %329 = vmatmul.mubr.f32.gmra.mrb[0].mxu0 %v262
  %v330 = vpop.f32.mrb[0].mxu0
  %v331 = vadd.f32 0.0, %v330
  %v332 = vpop.f32.mrb[0].mxu0
  %333 = vdwg.mxu0
  %v334 = vld [vmem:[%s9] sm:$0xff]
  %v335 = vld [vmem:[%s10] sm:$0xff]
  %337 = vrot.lane.b32.xlu0 %v331, 1
  %v338 = vpop.permute.xlu0 %337
  %v340 = vsel %vm119, 0.0, %v338
  %vm341 = vcmask 269312
  %v342 = vsel %vm341, %v340, 0.0
  %343 = vrot.lane.b32.xlu0 %v331, 97
  %v344 = vpop.permute.xlu0 %343
  %v346 = vsel %vm119, 0.0, %v344
  %v347 = vsel %vm341, %v346, 0.0
  %349 = vrot.lane.b32.xlu0 %v347, 32
  %v350 = vpop.permute.xlu0 %349
  %v352 = vsel %vm55, %v342, %v350
  %354 = vrot.lane.b32.xlu0 %v342, 127
  %v355 = vpop.permute.xlu0 %354
  %357 = vrot.lane.b32.xlu0 %v347, 31
  %v358 = vpop.permute.xlu0 %357
  %v360 = vsel %vm55, %v355, %v358
  %361 = vrot.lane.b32.xlu0 %v342, 126
  %v362 = vpop.permute.xlu0 %361
  %364 = vrot.lane.b32.xlu0 %v347, 30
  %v365 = vpop.permute.xlu0 %364
  %v367 = vsel %vm55, %v362, %v365
  %v368 = vpack.c.bf16 %v334, %v334
  %v369 = vpack.c.bf16 %v360, %v352
  %v370 = vpack.c.bf16 %v367, %v367
  %372 = vset.pattern.permute.xlu0 0
  %373 = vperm.xlu0 %372, %v335
  %v374 = vpop.permute.xlu0 %373
  %vm376 = vcmask 195584
  %v378 = vsel %vm376, %v368, 0
  %vm380 = vcmask 1043456
  %v382 = vsel %vm380, %v370, 0
  %384 = vmatprep.subr.bf16.mxu0 0
  %385 = vmatpush1.bf16.msra.mxu0 %v369
  %386 = vmatprep.subr.bf16.mxu0 0
  %387 = vmatpush1.bf16.msra.mxu0 %v382
  %388 = vmatprep.subr.bf16.mxu0 0
  %389 = vmatpush1.bf16.msra.mxu0 0
  %390 = vmatprep.subr.bf16.mxu0 0
  %391 = vmatpush1.bf16.msra.mxu0 0
  %392 = vmatprep.subr.bf16.mxu0 0
  %393 = vmatpush1.bf16.msra.mxu0 0
  %394 = vmatprep.subr.bf16.mxu0 0
  %395 = vmatpush1.bf16.msra.mxu0 0
  %396 = vmatprep.subr.bf16.mxu0 0
  %397 = vmatpush1.bf16.msra.mxu0 0
  %398 = vmatprep.subr.bf16.mxu0 0
  %399 = vmatpush1.bf16.msra.mxu0 0
  %400 = vmatprep.subr.bf16.mxu0 0
  %401 = vmatpush1.bf16.msra.mxu0 0
  %402 = vmatprep.subr.bf16.mxu0 0
  %403 = vmatpush1.bf16.msra.mxu0 0
  %404 = vmatprep.subr.bf16.mxu0 0
  %405 = vmatpush1.bf16.msra.mxu0 0
  %406 = vmatprep.subr.bf16.mxu0 0
  %407 = vmatpush1.bf16.msra.mxu0 0
  %408 = vmatprep.subr.bf16.mxu0 0
  %409 = vmatpush1.bf16.msra.mxu0 0
  %410 = vmatprep.subr.bf16.mxu0 0
  %411 = vmatpush1.bf16.msra.mxu0 0
  %412 = vmatprep.subr.bf16.mxu0 0
  %413 = vmatpush1.bf16.msra.mxu0 0
  %414 = vmatprep.subr.bf16.mxu0 0
  %415 = vmatpush1.bf16.msra.mxu0 0
  %416 = vmatprep.mubr.bf16.mxu0 0
  %417 = vmatmul.mubr.bf16.gmra.mrb[0].mxu0 %v378
  %v418 = vpop.f32.mrb[0].mxu0
  %v419 = vadd.f32 %v374, %v418
  %v420 = vpop.f32.mrb[0].mxu0
  %v421 = vpop.f32.mrb[0].mxu0
  %v422 = vpop.f32.mrb[0].mxu0
  %423 = vdwg.mxu0
  %v425 = vsel %vm55, %v49, 0
  %v428 = vsel %vm55, %v50, 0
  %430 = vmatprep.subr.mxu0 0.0
  %431 = vmatpush1.msra.mxu0 %v257
  %432 = vmatprep.subr.mxu0 0.0
  %433 = vmatpush1.msra.mxu0 %v258
  %434 = vmatprep.subr.mxu0 0.0
  %435 = vmatpush1.msra.mxu0 %v259
  %436 = vmatprep.subr.mxu0 0.0
  %437 = vmatpush1.msra.mxu0 %v260
  %438 = vmatprep.subr.mxu0 0.0
  %439 = vmatpush1.msra.mxu0 0.0
  %440 = vmatprep.subr.mxu0 0.0
  %441 = vmatpush1.msra.mxu0 0.0
  %442 = vmatprep.subr.mxu0 0.0
  %443 = vmatpush1.msra.mxu0 0.0
  %444 = vmatprep.subr.mxu0 0.0
  %445 = vmatpush1.msra.mxu0 0.0
  %446 = vmatprep.subr.mxu0 0.0
  %447 = vmatpush1.msra.mxu0 0.0
  %448 = vmatprep.subr.mxu0 0.0
  %449 = vmatpush1.msra.mxu0 0.0
  %450 = vmatprep.subr.mxu0 0.0
  %451 = vmatpush1.msra.mxu0 0.0
  %452 = vmatprep.subr.mxu0 0.0
  %453 = vmatpush1.msra.mxu0 0.0
  %454 = vmatprep.subr.mxu0 0.0
  %455 = vmatpush1.msra.mxu0 0.0
  %456 = vmatprep.subr.mxu0 0.0
  %457 = vmatpush1.msra.mxu0 0.0
  %458 = vmatprep.subr.mxu0 0.0
  %459 = vmatpush1.msra.mxu0 0.0
  %460 = vmatprep.subr.mxu0 0.0
  %461 = vmatpush1.msra.mxu0 0.0
  %462 = vmatprep.subr.mxu0 0.0
  %463 = vmatpush1.msra.mxu0 0.0
  %464 = vmatprep.subr.mxu0 0.0
  %465 = vmatpush1.msra.mxu0 0.0
  %466 = vmatprep.subr.mxu0 0.0
  %467 = vmatpush1.msra.mxu0 0.0
  %468 = vmatprep.subr.mxu0 0.0
  %469 = vmatpush1.msra.mxu0 0.0
  %470 = vmatprep.subr.mxu0 0.0
  %471 = vmatpush1.msra.mxu0 0.0
  %472 = vmatprep.subr.mxu0 0.0
  %473 = vmatpush1.msra.mxu0 0.0
  %474 = vmatprep.subr.mxu0 0.0
  %475 = vmatpush1.msra.mxu0 0.0
  %476 = vmatprep.subr.mxu0 0.0
  %477 = vmatpush1.msra.mxu0 0.0
  %478 = vmatprep.subr.mxu0 0.0
  %479 = vmatpush1.msra.mxu0 0.0
  %480 = vmatprep.subr.mxu0 0.0
  %481 = vmatpush1.msra.mxu0 0.0
  %482 = vmatprep.subr.mxu0 0.0
  %483 = vmatpush1.msra.mxu0 0.0
  %484 = vmatprep.subr.mxu0 0.0
  %485 = vmatpush1.msra.mxu0 0.0
  %486 = vmatprep.subr.mxu0 0.0
  %487 = vmatpush1.msra.mxu0 0.0
  %488 = vmatprep.subr.mxu0 0.0
  %489 = vmatpush1.msra.mxu0 0.0
  %490 = vmatprep.subr.mxu0 0.0
  %491 = vmatpush1.msra.mxu0 0.0
  %492 = vmatprep.subr.mxu0 0.0
  %493 = vmatpush1.msra.mxu0 0.0
  %494 = vmatprep.mubr.f32.mxu0 0.0
  %495 = vmatmul.mubr.f32.gmra.mrb[0].mxu0 %v425
  %v496 = vpop.f32.mrb[0].mxu0
  %v497 = vadd.f32 0.0, %v496
  %v498 = vpop.f32.mrb[0].mxu0
  %499 = vmatprep.mubr.f32.mxu0 0.0
  %500 = vmatmul.mubr.f32.gmra.mrb[0].mxu0 %v428
  %v501 = vpop.f32.mrb[0].mxu0
  %v502 = vadd.f32 0.0, %v501
  %v503 = vpop.f32.mrb[0].mxu0
  %504 = vdwg.mxu0
  %v505 = vld [vmem:[%s11] sm:$0xff]
  %v506 = vld [vmem:[%s12] sm:$0xff]
  %509 = vrot.lane.b32.xlu0 %v497, 1
  %v510 = vpop.permute.xlu0 %509
  %511 = vrot.lane.b32.xlu0 %v502, 1
  %v512 = vpop.permute.xlu0 %511
  %v515 = vsel %vm119, 0.0, %v510
  %v516 = vsel %vm119, 0.0, %v512
  %v517 = vsel %vm341, %v515, 0.0
  %v518 = vsel %vm341, %v516, 0.0
  %519 = vrot.lane.b32.xlu0 %v497, 97
  %v520 = vpop.permute.xlu0 %519
  %521 = vrot.lane.b32.xlu0 %v502, 97
  %v522 = vpop.permute.xlu0 %521
  %v525 = vsel %vm119, 0.0, %v520
  %v526 = vsel %vm119, 0.0, %v522
  %v527 = vsel %vm341, %v525, 0.0
  %v528 = vsel %vm341, %v526, 0.0
  %531 = vrot.lane.b32.xlu0 %v527, 32
  %v532 = vpop.permute.xlu0 %531
  %533 = vrot.lane.b32.xlu0 %v528, 32
  %v534 = vpop.permute.xlu0 %533
  %v537 = vsel %vm55, %v517, %v532
  %v538 = vsel %vm55, %v518, %v534
  %541 = vrot.lane.b32.xlu0 %v517, 127
  %v542 = vpop.permute.xlu0 %541
  %543 = vrot.lane.b32.xlu0 %v518, 127
  %v544 = vpop.permute.xlu0 %543
  %547 = vrot.lane.b32.xlu0 %v527, 31
  %v548 = vpop.permute.xlu0 %547
  %549 = vrot.lane.b32.xlu0 %v528, 31
  %v550 = vpop.permute.xlu0 %549
  %v553 = vsel %vm55, %v542, %v548
  %v554 = vsel %vm55, %v544, %v550
  %555 = vrot.lane.b32.xlu0 %v517, 126
  %v556 = vpop.permute.xlu0 %555
  %557 = vrot.lane.b32.xlu0 %v518, 126
  %v558 = vpop.permute.xlu0 %557
  %561 = vrot.lane.b32.xlu0 %v527, 30
  %v562 = vpop.permute.xlu0 %561
  %563 = vrot.lane.b32.xlu0 %v528, 30
  %v564 = vpop.permute.xlu0 %563
  %v567 = vsel %vm55, %v556, %v562
  %v568 = vsel %vm55, %v558, %v564
  %v569 = vpack.c.bf16 %v505, %v505
  %v570 = vpack.c.bf16 %v538, %v537
  %v571 = vpack.c.bf16 %v554, %v553
  %v572 = vpack.c.bf16 %v568, %v567
  %574 = vset.pattern.permute.xlu0 0
  %575 = vperm.xlu0 %574, %v506
  %v576 = vpop.permute.xlu0 %575
  %v579 = vsel %vm185, %v569, 0
  %581 = vmatprep.subr.bf16.mxu0 0
  %582 = vmatpush1.bf16.msra.mxu0 %v570
  %583 = vmatprep.subr.bf16.mxu0 0
  %584 = vmatpush1.bf16.msra.mxu0 %v571
  %585 = vmatprep.subr.bf16.mxu0 0
  %586 = vmatpush1.bf16.msra.mxu0 %v572
  %587 = vmatprep.subr.bf16.mxu0 0
  %588 = vmatpush1.bf16.msra.mxu0 0
  %589 = vmatprep.subr.bf16.mxu0 0
  %590 = vmatpush1.bf16.msra.mxu0 0
  %591 = vmatprep.subr.bf16.mxu0 0
  %592 = vmatpush1.bf16.msra.mxu0 0
  %593 = vmatprep.subr.bf16.mxu0 0
  %594 = vmatpush1.bf16.msra.mxu0 0
  %595 = vmatprep.subr.bf16.mxu0 0
  %596 = vmatpush1.bf16.msra.mxu0 0
  %597 = vmatprep.subr.bf16.mxu0 0
  %598 = vmatpush1.bf16.msra.mxu0 0
  %599 = vmatprep.subr.bf16.mxu0 0
  %600 = vmatpush1.bf16.msra.mxu0 0
  %601 = vmatprep.subr.bf16.mxu0 0
  %602 = vmatpush1.bf16.msra.mxu0 0
  %603 = vmatprep.subr.bf16.mxu0 0
  %604 = vmatpush1.bf16.msra.mxu0 0
  %605 = vmatprep.subr.bf16.mxu0 0
  %606 = vmatpush1.bf16.msra.mxu0 0
  %607 = vmatprep.subr.bf16.mxu0 0
  %608 = vmatpush1.bf16.msra.mxu0 0
  %609 = vmatprep.subr.bf16.mxu0 0
  %610 = vmatpush1.bf16.msra.mxu0 0
  %611 = vmatprep.subr.bf16.mxu0 0
  %612 = vmatpush1.bf16.msra.mxu0 0
  %613 = vmatprep.mubr.bf16.mxu0 0
  %614 = vmatmul.mubr.bf16.gmra.mrb[0].mxu0 %v579
  %v615 = vpop.f32.mrb[0].mxu0
  %v616 = vadd.f32 %v576, %v615
  %v617 = vpop.f32.mrb[0].mxu0
  %v618 = vpop.f32.mrb[0].mxu0
  %v619 = vpop.f32.mrb[0].mxu0
  %620 = vdwg.mxu0
  %v621 = vadd.f32 %v419, %v616
  %vm622 = vcmask 523264
  %623 = vst.msk [vmem:[%s13] sm:$0xff] %vm622, %v621
  // Predicated region
  $region54: #{res_generator1_forward.13} parent=0 // pred_check
    _
  $region55: #{res_generator1_forward.13} parent=0 // pred_check_branch
    %625 = sbr.rel (0) target = $region57
  $region56: #{res_generator1_forward.13} parent=0 // pred_region
    _
  $region57: #{res_generator1_forward.13} parent=0 // pred_fallthru
    _
  // Predicated region
  $region58: #{res_generator1_forward.13} parent=0 // pred_check
    _
  $region59: #{res_generator1_forward.13} parent=0 // pred_check_branch
    %627 = sbr.rel (0) target = $region61
  $region60: #{res_generator1_forward.13} parent=0 // pred_region
    _
  $region61: #{res_generator1_forward.13} parent=0 // pred_fallthru
    _

// kernel: res_generator1_forward.15
$region0: #{res_generator1_forward.15}
  #allocation0 [shape = 'u32[]', space=smem, size = 0x4, offset = 0x4, fixed_abs, tag = 'smem constant byte address 0x4 - core index']
  #allocation1 [shape = 'u32[144,128]{1,0:T(1,128)}', space=vmem, size = 0x12000, scoped, tag = 'internal scratch']
  %s0 = inlined_call_operand.vmem [shape: f32[8,128], index: 0, kind: input, shape index: {}]
  %s1 = inlined_call_operand.vmem [shape: f32[8,24], index: 1, kind: input, shape index: {}]
  %s2 = inlined_call_operand.vmem [shape: f32[8,1], index: 2, kind: input, shape index: {}]
  %s3 = inlined_call_operand.vmem [shape: f32[8,128], index: 3, kind: output, shape index: {}]
  %s4 = sld [smem:[#allocation0]]
  $region22: #{res_generator1_forward.15} parent=0
    _
  %s6 = ssub.s32 1, %s4
  %s7 = scalar_select 0, %s6, %s4
  // Predicated region
  $region2: #{res_generator1_forward.15} parent=0 // pred_check
    _
  $region3: #{res_generator1_forward.15} parent=0 // pred_check_branch
    %9 = sbr.rel (0) target = $region5
  $region4: #{res_generator1_forward.15} parent=0 // pred_region
    _
  $region5: #{res_generator1_forward.15} parent=0 // pred_fallthru
    _
  // Predicated region
  $region6: #{res_generator1_forward.15} parent=0 // pred_check
    _
  $region7: #{res_generator1_forward.15} parent=0 // pred_check_branch
    %11 = sbr.rel (0) target = $region9
  $region8: #{res_generator1_forward.15} parent=0 // pred_region
    _
  $region9: #{res_generator1_forward.15} parent=0 // pred_fallthru
    _
  // Predicated region
  $region10: #{res_generator1_forward.15} parent=0 // pred_check
    _
  $region11: #{res_generator1_forward.15} parent=0 // pred_check_branch
    %13 = sbr.rel (0) target = $region13
  $region12: #{res_generator1_forward.15} parent=0 // pred_region
    _
  $region13: #{res_generator1_forward.15} parent=0 // pred_fallthru
    _
  %v15 = vld [vmem:[%s0] sm:$0xff]
  %v16 = vld [vmem:[%s1] sm:$0xff]
  %v17 = vld [vmem:[%s2] sm:$0xff]
  %v18 = vmax.f32 %v15, 0.0
  %20 = vrot.lane.b32.xlu0 %v18, 127
  %v21 = vpop.permute.xlu0 %20
  %23 = vrot.lane.b32.xlu0 %v18, 1
  %v24 = vpop.permute.xlu0 %23
  %26 = vrot.lane.b32.xlu0 %v18, 3
  %v27 = vpop.permute.xlu0 %26
  %vm29 = vcmask 7168
  %v30 = vsel %vm29, %v21, %v24
  %vm31 = vcmask 531456
  %v32 = vsel %vm31, %v30, %v27
  %33 = vrot.lane.b32.xlu0 %v18, 63
  %v34 = vpop.permute.xlu0 %33
  %36 = vrot.lane.b32.xlu0 %v18, 65
  %v37 = vpop.permute.xlu0 %36
  %39 = vrot.lane.b32.xlu0 %v18, 67
  %v40 = vpop.permute.xlu0 %39
  %v42 = vsel %vm29, %v34, %v37
  %v43 = vsel %vm31, %v42, %v40
  %45 = vrot.lane.b32.xlu0 %v43, 64
  %v46 = vpop.permute.xlu0 %45
  %vm48 = vcmask 523264
  %v49 = vsel %vm48, %v32, %v46
  %51 = vrot.lane.b32.xlu0 %v32, 127
  %v52 = vpop.permute.xlu0 %51
  %54 = vrot.lane.b32.xlu0 %v43, 63
  %v55 = vpop.permute.xlu0 %54
  %v57 = vsel %vm48, %v52, %v55
  %58 = vrot.lane.b32.xlu0 %v32, 126
  %v59 = vpop.permute.xlu0 %58
  %61 = vrot.lane.b32.xlu0 %v43, 62
  %v62 = vpop.permute.xlu0 %61
  %v64 = vsel %vm48, %v59, %v62
  %v65 = vpack.c.bf16 %v16, %v16
  %v66 = vpack.c.bf16 %v57, %v49
  %v67 = vpack.c.bf16 %v64, %v64
  %69 = vset.pattern.permute.xlu0 0
  %70 = vperm.xlu0 %69, %v17
  %v71 = vpop.permute.xlu0 %70
  %vm73 = vcmask 195584
  %v75 = vsel %vm73, %v65, 0
  %vm77 = vcmask 1043456
  %v79 = vsel %vm77, %v67, 0
  %81 = vmatprep.subr.bf16.mxu0 0
  %82 = vmatpush1.bf16.msra.mxu0 %v66
  %83 = vmatprep.subr.bf16.mxu0 0
  %84 = vmatpush1.bf16.msra.mxu0 %v79
  %85 = vmatprep.subr.bf16.mxu0 0
  %86 = vmatpush1.bf16.msra.mxu0 0
  %87 = vmatprep.subr.bf16.mxu0 0
  %88 = vmatpush1.bf16.msra.mxu0 0
  %89 = vmatprep.subr.bf16.mxu0 0
  %90 = vmatpush1.bf16.msra.mxu0 0
  %91 = vmatprep.subr.bf16.mxu0 0
  %92 = vmatpush1.bf16.msra.mxu0 0
  %93 = vmatprep.subr.bf16.mxu0 0
  %94 = vmatpush1.bf16.msra.mxu0 0
  %95 = vmatprep.subr.bf16.mxu0 0
  %96 = vmatpush1.bf16.msra.mxu0 0
  %97 = vmatprep.subr.bf16.mxu0 0
  %98 = vmatpush1.bf16.msra.mxu0 0
  %99 = vmatprep.subr.bf16.mxu0 0
  %100 = vmatpush1.bf16.msra.mxu0 0
  %101 = vmatprep.subr.bf16.mxu0 0
  %102 = vmatpush1.bf16.msra.mxu0 0
  %103 = vmatprep.subr.bf16.mxu0 0
  %104 = vmatpush1.bf16.msra.mxu0 0
  %105 = vmatprep.subr.bf16.mxu0 0
  %106 = vmatpush1.bf16.msra.mxu0 0
  %107 = vmatprep.subr.bf16.mxu0 0
  %108 = vmatpush1.bf16.msra.mxu0 0
  %109 = vmatprep.subr.bf16.mxu0 0
  %110 = vmatpush1.bf16.msra.mxu0 0
  %111 = vmatprep.subr.bf16.mxu0 0
  %112 = vmatpush1.bf16.msra.mxu0 0
  %113 = vmatprep.mubr.bf16.mxu0 0
  %114 = vmatmul.mubr.bf16.gmra.mrb[0].mxu0 %v75
  %v115 = vpop.f32.mrb[0].mxu0
  %v116 = vadd.f32 %v71, %v115
  %v117 = vpop.f32.mrb[0].mxu0
  %v118 = vpop.f32.mrb[0].mxu0
  %v119 = vpop.f32.mrb[0].mxu0
  %120 = vdwg.mxu0
  %v121 = vtanh.pop %v116
  %123 = vrot.lane.b32.xlu0 %v121, 126
  %v124 = vpop.permute.xlu0 %123
  %126 = vrot.lane.b32.xlu0 %v121, 2
  %v127 = vpop.permute.xlu0 %126
  %129 = vrot.lane.b32.xlu0 %v121, 4
  %v130 = vpop.permute.xlu0 %129
  %132 = vrot.lane.b32.xlu0 %v121, 6
  %v133 = vpop.permute.xlu0 %132
  %v135 = vsel %vm29, %v124, %v121
  %vm136 = vcmask 15360
  %v137 = vsel %vm136, %v135, %v127
  %vm138 = vcmask 539648
  %v139 = vsel %vm138, %v137, %v130
  %vm140 = vcmask 547840
  %v141 = vsel %vm140, %v139, %v133
  %143 = vrot.lane.b32.xlu0 %v141, 127
  %v144 = vpop.permute.xlu0 %143
  %v146 = vadd.f32 %v141, %v144
  %147 = vrot.lane.b32.xlu0 %v141, 126
  %v148 = vpop.permute.xlu0 %147
  %v150 = vadd.f32 %v146, %v148
  %151 = vrot.lane.b32.xlu0 %v141, 125
  %v152 = vpop.permute.xlu0 %151
  %v154 = vadd.f32 %v150, %v152
  %155 = vrot.lane.b32.xlu0 %v141, 124
  %v156 = vpop.permute.xlu0 %155
  %v158 = vadd.f32 %v154, %v156
  %v159 = vmul.f32 %v158, 0.2
  %160 = vrot.lane.b32.xlu0 %v121, 62
  %v161 = vpop.permute.xlu0 %160
  %163 = vrot.lane.b32.xlu0 %v121, 64
  %v164 = vpop.permute.xlu0 %163
  %166 = vrot.lane.b32.xlu0 %v121, 66
  %v167 = vpop.permute.xlu0 %166
  %169 = vrot.lane.b32.xlu0 %v121, 68
  %v170 = vpop.permute.xlu0 %169
  %172 = vrot.lane.b32.xlu0 %v121, 70
  %v173 = vpop.permute.xlu0 %172
  %v175 = vsel %vm29, %v161, %v164
  %v176 = vsel %vm136, %v175, %v167
  %v177 = vsel %vm138, %v176, %v170
  %v178 = vsel %vm140, %v177, %v173
  %180 = vrot.lane.b32.xlu0 %v178, 127
  %v181 = vpop.permute.xlu0 %180
  %v183 = vadd.f32 %v178, %v181
  %184 = vrot.lane.b32.xlu0 %v178, 126
  %v185 = vpop.permute.xlu0 %184
  %v187 = vadd.f32 %v183, %v185
  %188 = vrot.lane.b32.xlu0 %v178, 125
  %v189 = vpop.permute.xlu0 %188
  %v191 = vadd.f32 %v187, %v189
  %192 = vrot.lane.b32.xlu0 %v178, 124
  %v193 = vpop.permute.xlu0 %192
  %v195 = vadd.f32 %v191, %v193
  %v196 = vmul.f32 %v195, 0.2
  %198 = vrot.lane.b32.xlu0 %v196, 64
  %v199 = vpop.permute.xlu0 %198
  %v201 = vsel %vm48, %v159, %v199
  %202 = vst [vmem:[%s3] sm:$0xff] %v201
  // Predicated region
  $region14: #{res_generator1_forward.15} parent=0 // pred_check
    _
  $region15: #{res_generator1_forward.15} parent=0 // pred_check_branch
    %204 = sbr.rel (0) target = $region17
  $region16: #{res_generator1_forward.15} parent=0 // pred_region
    _
  $region17: #{res_generator1_forward.15} parent=0 // pred_fallthru
    _
  // Predicated region
  $region18: #{res_generator1_forward.15} parent=0 // pred_check
    _
  $region19: #{res_generator1_forward.15} parent=0 // pred_check_branch
    %206 = sbr.rel (0) target = $region21
  $region20: #{res_generator1_forward.15} parent=0 // pred_region
    _
  $region21: #{res_generator1_forward.15} parent=0 // pred_fallthru
    _

// kernel: res_generator1_forward.14
$region0: #{res_generator1_forward.14}
  #allocation0 [shape = 'u32[]', space=smem, size = 0x4, offset = 0x4, fixed_abs, tag = 'smem constant byte address 0x4 - core index']
  #allocation1 [shape = 'u32[144,128]{1,0:T(1,128)}', space=vmem, size = 0x12000, scoped, tag = 'internal scratch']
  %s0 = inlined_call_operand.vmem [shape: f32[8,64], index: 0, kind: input, shape index: {}]
  %s1 = inlined_call_operand.vmem [shape: f32[8,64], index: 1, kind: input, shape index: {}]
  %s2 = inlined_call_operand.vmem [shape: f32[64,128], index: 2, kind: input, shape index: {}]
  %s3 = inlined_call_operand.vmem [shape: f32[8,1], index: 3, kind: input, shape index: {}]
  %s4 = inlined_call_operand.vmem [shape: f32[8,1], index: 4, kind: input, shape index: {}]
  %s5 = inlined_call_operand.vmem [shape: f32[8,1], index: 5, kind: input, shape index: {}]
  %s6 = inlined_call_operand.vmem [shape: f32[8,1], index: 6, kind: input, shape index: {}]
  %s7 = inlined_call_operand.vmem [shape: f32[8,24], index: 7, kind: input, shape index: {}]
  %s8 = inlined_call_operand.vmem [shape: f32[8,1], index: 8, kind: input, shape index: {}]
  %s9 = inlined_call_operand.vmem [shape: f32[8,24], index: 9, kind: input, shape index: {}]
  %s10 = inlined_call_operand.vmem [shape: f32[8,1], index: 10, kind: input, shape index: {}]
  %s11 = inlined_call_operand.vmem [shape: f32[8,24], index: 11, kind: input, shape index: {}]
  %s12 = inlined_call_operand.vmem [shape: f32[8,1], index: 12, kind: input, shape index: {}]
  %s13 = inlined_call_operand.vmem [shape: f32[8,128], index: 13, kind: output, shape index: {}]
  %s14 = sld [smem:[#allocation0]]
  $region62: #{res_generator1_forward.14} parent=0
    _
  %s16 = ssub.s32 1, %s14
  %s17 = scalar_select 0, %s16, %s14
  // Predicated region
  $region2: #{res_generator1_forward.14} parent=0 // pred_check
    _
  $region3: #{res_generator1_forward.14} parent=0 // pred_check_branch
    %19 = sbr.rel (0) target = $region5
  $region4: #{res_generator1_forward.14} parent=0 // pred_region
    _
  $region5: #{res_generator1_forward.14} parent=0 // pred_fallthru
    _
  // Predicated region
  $region6: #{res_generator1_forward.14} parent=0 // pred_check
    _
  $region7: #{res_generator1_forward.14} parent=0 // pred_check_branch
    %21 = sbr.rel (0) target = $region9
  $region8: #{res_generator1_forward.14} parent=0 // pred_region
    _
  $region9: #{res_generator1_forward.14} parent=0 // pred_fallthru
    _
  // Predicated region
  $region10: #{res_generator1_forward.14} parent=0 // pred_check
    _
  $region11: #{res_generator1_forward.14} parent=0 // pred_check_branch
    %23 = sbr.rel (0) target = $region13
  $region12: #{res_generator1_forward.14} parent=0 // pred_region
    _
  $region13: #{res_generator1_forward.14} parent=0 // pred_fallthru
    _
  // Predicated region
  $region14: #{res_generator1_forward.14} parent=0 // pred_check
    _
  $region15: #{res_generator1_forward.14} parent=0 // pred_check_branch
    %25 = sbr.rel (0) target = $region17
  $region16: #{res_generator1_forward.14} parent=0 // pred_region
    _
  $region17: #{res_generator1_forward.14} parent=0 // pred_fallthru
    _
  // Predicated region
  $region18: #{res_generator1_forward.14} parent=0 // pred_check
    _
  $region19: #{res_generator1_forward.14} parent=0 // pred_check_branch
    %27 = sbr.rel (0) target = $region21
  $region20: #{res_generator1_forward.14} parent=0 // pred_region
    _
  $region21: #{res_generator1_forward.14} parent=0 // pred_fallthru
    _
  // Predicated region
  $region22: #{res_generator1_forward.14} parent=0 // pred_check
    _
  $region23: #{res_generator1_forward.14} parent=0 // pred_check_branch
    %29 = sbr.rel (0) target = $region25
  $region24: #{res_generator1_forward.14} parent=0 // pred_region
    _
  $region25: #{res_generator1_forward.14} parent=0 // pred_fallthru
    _
  // Predicated region
  $region26: #{res_generator1_forward.14} parent=0 // pred_check
    _
  $region27: #{res_generator1_forward.14} parent=0 // pred_check_branch
    %31 = sbr.rel (0) target = $region29
  $region28: #{res_generator1_forward.14} parent=0 // pred_region
    _
  $region29: #{res_generator1_forward.14} parent=0 // pred_fallthru
    _
  // Predicated region
  $region30: #{res_generator1_forward.14} parent=0 // pred_check
    _
  $region31: #{res_generator1_forward.14} parent=0 // pred_check_branch
    %33 = sbr.rel (0) target = $region33
  $region32: #{res_generator1_forward.14} parent=0 // pred_region
    _
  $region33: #{res_generator1_forward.14} parent=0 // pred_fallthru
    _
  // Predicated region
  $region34: #{res_generator1_forward.14} parent=0 // pred_check
    _
  $region35: #{res_generator1_forward.14} parent=0 // pred_check_branch
    %35 = sbr.rel (0) target = $region37
  $region36: #{res_generator1_forward.14} parent=0 // pred_region
    _
  $region37: #{res_generator1_forward.14} parent=0 // pred_fallthru
    _
  // Predicated region
  $region38: #{res_generator1_forward.14} parent=0 // pred_check
    _
  $region39: #{res_generator1_forward.14} parent=0 // pred_check_branch
    %37 = sbr.rel (0) target = $region41
  $region40: #{res_generator1_forward.14} parent=0 // pred_region
    _
  $region41: #{res_generator1_forward.14} parent=0 // pred_fallthru
    _
  // Predicated region
  $region42: #{res_generator1_forward.14} parent=0 // pred_check
    _
  $region43: #{res_generator1_forward.14} parent=0 // pred_check_branch
    %39 = sbr.rel (0) target = $region45
  $region44: #{res_generator1_forward.14} parent=0 // pred_region
    _
  $region45: #{res_generator1_forward.14} parent=0 // pred_fallthru
    _
  // Predicated region
  $region46: #{res_generator1_forward.14} parent=0 // pred_check
    _
  $region47: #{res_generator1_forward.14} parent=0 // pred_check_branch
    %41 = sbr.rel (0) target = $region49
  $region48: #{res_generator1_forward.14} parent=0 // pred_region
    _
  $region49: #{res_generator1_forward.14} parent=0 // pred_fallthru
    _
  // Predicated region
  $region50: #{res_generator1_forward.14} parent=0 // pred_check
    _
  $region51: #{res_generator1_forward.14} parent=0 // pred_check_branch
    %43 = sbr.rel (0) target = $region53
  $region52: #{res_generator1_forward.14} parent=0 // pred_region
    _
  $region53: #{res_generator1_forward.14} parent=0 // pred_fallthru
    _
  %v45 = vld [vmem:[%s0] sm:$0xff]
  %v46 = vld [vmem:[%s1] sm:$0xff]
  %v47 = vadd.f32 %v45, %v46
  %v48 = vld [vmem:[%s3] sm:$0xff]
  %v49 = vld [vmem:[%s4] sm:$0xff]
  %vm50 = vcmask 523264
  %v51 = vsel %vm50, %v47, 0.0
  %52 = vadd.xlane.f32.xlu0 %v51
  %v53 = vpop.xlane.xlu0 %52
  %v54 = vrcp.pop 64.0
  %v55 = vmul.f32 %v53, %v54
  %v56 = vsub.f32 %v47, %v55
  %v57 = vmul.f32 %v56, %v56
  %v58 = vsel %vm50, %v57, 0.0
  %59 = vadd.xlane.f32.xlu0 %v58
  %v60 = vpop.xlane.xlu0 %59
  %v61 = vmul.f32 %v60, %v54
  %v62 = vadd.f32 %v61, 1e-05
  %v63 = vrsqrt.pop %v62
  %v64 = vmul.f32 %v56, %v63
  %66 = vset.pattern.permute.xlu0 0
  %67 = vperm.xlu0 %66, %v48
  %v68 = vpop.permute.xlu0 %67
  %v70 = vmul.f32 %v64, %v68
  %72 = vset.pattern.permute.xlu0 0
  %73 = vperm.xlu0 %72, %v49
  %v74 = vpop.permute.xlu0 %73
  %v76 = vadd.f32 %v70, %v74
  %v77 = vld [vmem:[%s7] sm:$0xff]
  %v78 = vld [vmem:[%s8] sm:$0xff]
  %v79 = vmax.f32 %v76, 0.0
  %81 = vrot.lane.b32.xlu0 %v79, 1
  %v82 = vpop.permute.xlu0 %81
  %vm84 = vcmask 7168
  %v85 = vsel %vm84, 0.0, %v82
  %vm86 = vcmask 269312
  %v87 = vsel %vm86, %v85, 0.0
  %88 = vrot.lane.b32.xlu0 %v79, 97
  %v89 = vpop.permute.xlu0 %88
  %v91 = vsel %vm84, 0.0, %v89
  %v92 = vsel %vm86, %v91, 0.0
  %94 = vrot.lane.b32.xlu0 %v92, 32
  %v95 = vpop.permute.xlu0 %94
  %vm97 = vcmask 261120
  %v98 = vsel %vm97, %v87, %v95
  %100 = vrot.lane.b32.xlu0 %v87, 127
  %v101 = vpop.permute.xlu0 %100
  %103 = vrot.lane.b32.xlu0 %v92, 31
  %v104 = vpop.permute.xlu0 %103
  %v106 = vsel %vm97, %v101, %v104
  %107 = vrot.lane.b32.xlu0 %v87, 126
  %v108 = vpop.permute.xlu0 %107
  %110 = vrot.lane.b32.xlu0 %v92, 30
  %v111 = vpop.permute.xlu0 %110
  %v113 = vsel %vm97, %v108, %v111
  %v114 = vpack.c.bf16 %v77, %v77
  %v115 = vpack.c.bf16 %v106, %v98
  %v116 = vpack.c.bf16 %v113, %v113
  %118 = vset.pattern.permute.xlu0 0
  %119 = vperm.xlu0 %118, %v78
  %v120 = vpop.permute.xlu0 %119
  %vm122 = vcmask 195584
  %v124 = vsel %vm122, %v114, 0
  %vm126 = vcmask 1043456
  %v128 = vsel %vm126, %v116, 0
  %130 = vmatprep.subr.bf16.mxu0 0
  %131 = vmatpush1.bf16.msra.mxu0 %v115
  %132 = vmatprep.subr.bf16.mxu0 0
  %133 = vmatpush1.bf16.msra.mxu0 %v128
  %134 = vmatprep.subr.bf16.mxu0 0
  %135 = vmatpush1.bf16.msra.mxu0 0
  %136 = vmatprep.subr.bf16.mxu0 0
  %137 = vmatpush1.bf16.msra.mxu0 0
  %138 = vmatprep.subr.bf16.mxu0 0
  %139 = vmatpush1.bf16.msra.mxu0 0
  %140 = vmatprep.subr.bf16.mxu0 0
  %141 = vmatpush1.bf16.msra.mxu0 0
  %142 = vmatprep.subr.bf16.mxu0 0
  %143 = vmatpush1.bf16.msra.mxu0 0
  %144 = vmatprep.subr.bf16.mxu0 0
  %145 = vmatpush1.bf16.msra.mxu0 0
  %146 = vmatprep.subr.bf16.mxu0 0
  %147 = vmatpush1.bf16.msra.mxu0 0
  %148 = vmatprep.subr.bf16.mxu0 0
  %149 = vmatpush1.bf16.msra.mxu0 0
  %150 = vmatprep.subr.bf16.mxu0 0
  %151 = vmatpush1.bf16.msra.mxu0 0
  %152 = vmatprep.subr.bf16.mxu0 0
  %153 = vmatpush1.bf16.msra.mxu0 0
  %154 = vmatprep.subr.bf16.mxu0 0
  %155 = vmatpush1.bf16.msra.mxu0 0
  %156 = vmatprep.subr.bf16.mxu0 0
  %157 = vmatpush1.bf16.msra.mxu0 0
  %158 = vmatprep.subr.bf16.mxu0 0
  %159 = vmatpush1.bf16.msra.mxu0 0
  %160 = vmatprep.subr.bf16.mxu0 0
  %161 = vmatpush1.bf16.msra.mxu0 0
  %162 = vmatprep.mubr.bf16.mxu0 0
  %163 = vmatmul.mubr.bf16.gmra.mrb[0].mxu0 %v124
  %v164 = vpop.f32.mrb[0].mxu0
  %v165 = vadd.f32 %v120, %v164
  %v166 = vpop.f32.mrb[0].mxu0
  %v167 = vpop.f32.mrb[0].mxu0
  %v168 = vpop.f32.mrb[0].mxu0
  %169 = vdwg.mxu0
  %v170 = vld [vmem:[%s5] sm:$0xff]
  %v171 = vld [vmem:[%s6] sm:$0xff]
  %v172 = vsel %vm50, %v165, 0.0
  %173 = vadd.xlane.f32.xlu0 %v172
  %v174 = vpop.xlane.xlu0 %173
  %v175 = vmul.f32 %v174, %v54
  %v176 = vsub.f32 %v165, %v175
  %v177 = vmul.f32 %v176, %v176
  %v178 = vsel %vm50, %v177, 0.0
  %179 = vadd.xlane.f32.xlu0 %v178
  %v180 = vpop.xlane.xlu0 %179
  %v181 = vmul.f32 %v180, %v54
  %v182 = vadd.f32 %v181, 1e-05
  %v183 = vrsqrt.pop %v182
  %v184 = vmul.f32 %v176, %v183
  %186 = vset.pattern.permute.xlu0 0
  %187 = vperm.xlu0 %186, %v170
  %v188 = vpop.permute.xlu0 %187
  %v190 = vmul.f32 %v184, %v188
  %192 = vset.pattern.permute.xlu0 0
  %193 = vperm.xlu0 %192, %v171
  %v194 = vpop.permute.xlu0 %193
  %v196 = vadd.f32 %v190, %v194
  %v197 = vmax.f32 %v196, 0.0
  %v198 = vld [vmem:[%s2] sm:$0xff]
  %v199 = vld [vmem:[%s2 + $0x8] sm:$0xff]
  %v200 = vld [vmem:[%s2 + $0x10] sm:$0xff]
  %v201 = vld [vmem:[%s2 + $0x18] sm:$0xff]
  %v202 = vld [vmem:[%s2 + $0x20] sm:$0xff]
  %v203 = vld [vmem:[%s2 + $0x28] sm:$0xff]
  %v204 = vld [vmem:[%s2 + $0x30] sm:$0xff]
  %v205 = vld [vmem:[%s2 + $0x38] sm:$0xff]
  %v207 = vsel %vm50, %v197, 0
  %209 = vmatprep.subr.mxu0 0.0
  %210 = vmatpush1.msra.mxu0 %v198
  %211 = vmatprep.subr.mxu0 0.0
  %212 = vmatpush1.msra.mxu0 %v199
  %213 = vmatprep.subr.mxu0 0.0
  %214 = vmatpush1.msra.mxu0 %v200
  %215 = vmatprep.subr.mxu0 0.0
  %216 = vmatpush1.msra.mxu0 %v201
  %217 = vmatprep.subr.mxu0 0.0
  %218 = vmatpush1.msra.mxu0 %v202
  %219 = vmatprep.subr.mxu0 0.0
  %220 = vmatpush1.msra.mxu0 %v203
  %221 = vmatprep.subr.mxu0 0.0
  %222 = vmatpush1.msra.mxu0 %v204
  %223 = vmatprep.subr.mxu0 0.0
  %224 = vmatpush1.msra.mxu0 %v205
  %225 = vmatprep.subr.mxu0 0.0
  %226 = vmatpush1.msra.mxu0 0.0
  %227 = vmatprep.subr.mxu0 0.0
  %228 = vmatpush1.msra.mxu0 0.0
  %229 = vmatprep.subr.mxu0 0.0
  %230 = vmatpush1.msra.mxu0 0.0
  %231 = vmatprep.subr.mxu0 0.0
  %232 = vmatpush1.msra.mxu0 0.0
  %233 = vmatprep.subr.mxu0 0.0
  %234 = vmatpush1.msra.mxu0 0.0
  %235 = vmatprep.subr.mxu0 0.0
  %236 = vmatpush1.msra.mxu0 0.0
  %237 = vmatprep.subr.mxu0 0.0
  %238 = vmatpush1.msra.mxu0 0.0
  %239 = vmatprep.subr.mxu0 0.0
  %240 = vmatpush1.msra.mxu0 0.0
  %241 = vmatprep.subr.mxu0 0.0
  %242 = vmatpush1.msra.mxu0 0.0
  %243 = vmatprep.subr.mxu0 0.0
  %244 = vmatpush1.msra.mxu0 0.0
  %245 = vmatprep.subr.mxu0 0.0
  %246 = vmatpush1.msra.mxu0 0.0
  %247 = vmatprep.subr.mxu0 0.0
  %248 = vmatpush1.msra.mxu0 0.0
  %249 = vmatprep.subr.mxu0 0.0
  %250 = vmatpush1.msra.mxu0 0.0
  %251 = vmatprep.subr.mxu0 0.0
  %252 = vmatpush1.msra.mxu0 0.0
  %253 = vmatprep.subr.mxu0 0.0
  %254 = vmatpush1.msra.mxu0 0.0
  %255 = vmatprep.subr.mxu0 0.0
  %256 = vmatpush1.msra.mxu0 0.0
  %257 = vmatprep.subr.mxu0 0.0
  %258 = vmatpush1.msra.mxu0 0.0
  %259 = vmatprep.subr.mxu0 0.0
  %260 = vmatpush1.msra.mxu0 0.0
  %261 = vmatprep.subr.mxu0 0.0
  %262 = vmatpush1.msra.mxu0 0.0
  %263 = vmatprep.subr.mxu0 0.0
  %264 = vmatpush1.msra.mxu0 0.0
  %265 = vmatprep.subr.mxu0 0.0
  %266 = vmatpush1.msra.mxu0 0.0
  %267 = vmatprep.subr.mxu0 0.0
  %268 = vmatpush1.msra.mxu0 0.0
  %269 = vmatprep.subr.mxu0 0.0
  %270 = vmatpush1.msra.mxu0 0.0
  %271 = vmatprep.subr.mxu0 0.0
  %272 = vmatpush1.msra.mxu0 0.0
  %273 = vmatprep.mubr.f32.mxu0 0.0
  %274 = vmatmul.mubr.f32.gmra.mrb[0].mxu0 %v207
  %v275 = vpop.f32.mrb[0].mxu0
  %v276 = vadd.f32 0.0, %v275
  %v277 = vpop.f32.mrb[0].mxu0
  %278 = vdwg.mxu0
  %v279 = vld [vmem:[%s9] sm:$0xff]
  %v280 = vld [vmem:[%s10] sm:$0xff]
  %282 = vrot.lane.b32.xlu0 %v276, 1
  %v283 = vpop.permute.xlu0 %282
  %v285 = vsel %vm84, 0.0, %v283
  %vm286 = vcmask 531456
  %v287 = vsel %vm286, %v285, 0.0
  %288 = vrot.lane.b32.xlu0 %v276, 65
  %v289 = vpop.permute.xlu0 %288
  %v291 = vsel %vm84, 0.0, %v289
  %v292 = vsel %vm286, %v291, 0.0
  %294 = vrot.lane.b32.xlu0 %v292, 64
  %v295 = vpop.permute.xlu0 %294
  %v297 = vsel %vm50, %v287, %v295
  %299 = vrot.lane.b32.xlu0 %v287, 127
  %v300 = vpop.permute.xlu0 %299
  %302 = vrot.lane.b32.xlu0 %v292, 63
  %v303 = vpop.permute.xlu0 %302
  %v305 = vsel %vm50, %v300, %v303
  %306 = vrot.lane.b32.xlu0 %v287, 126
  %v307 = vpop.permute.xlu0 %306
  %309 = vrot.lane.b32.xlu0 %v292, 62
  %v310 = vpop.permute.xlu0 %309
  %v312 = vsel %vm50, %v307, %v310
  %v313 = vpack.c.bf16 %v279, %v279
  %v314 = vpack.c.bf16 %v305, %v297
  %v315 = vpack.c.bf16 %v312, %v312
  %317 = vset.pattern.permute.xlu0 0
  %318 = vperm.xlu0 %317, %v280
  %v319 = vpop.permute.xlu0 %318
  %v322 = vsel %vm122, %v313, 0
  %v325 = vsel %vm126, %v315, 0
  %327 = vmatprep.subr.bf16.mxu0 0
  %328 = vmatpush1.bf16.msra.mxu0 %v314
  %329 = vmatprep.subr.bf16.mxu0 0
  %330 = vmatpush1.bf16.msra.mxu0 %v325
  %331 = vmatprep.subr.bf16.mxu0 0
  %332 = vmatpush1.bf16.msra.mxu0 0
  %333 = vmatprep.subr.bf16.mxu0 0
  %334 = vmatpush1.bf16.msra.mxu0 0
  %335 = vmatprep.subr.bf16.mxu0 0
  %336 = vmatpush1.bf16.msra.mxu0 0
  %337 = vmatprep.subr.bf16.mxu0 0
  %338 = vmatpush1.bf16.msra.mxu0 0
  %339 = vmatprep.subr.bf16.mxu0 0
  %340 = vmatpush1.bf16.msra.mxu0 0
  %341 = vmatprep.subr.bf16.mxu0 0
  %342 = vmatpush1.bf16.msra.mxu0 0
  %343 = vmatprep.subr.bf16.mxu0 0
  %344 = vmatpush1.bf16.msra.mxu0 0
  %345 = vmatprep.subr.bf16.mxu0 0
  %346 = vmatpush1.bf16.msra.mxu0 0
  %347 = vmatprep.subr.bf16.mxu0 0
  %348 = vmatpush1.bf16.msra.mxu0 0
  %349 = vmatprep.subr.bf16.mxu0 0
  %350 = vmatpush1.bf16.msra.mxu0 0
  %351 = vmatprep.subr.bf16.mxu0 0
  %352 = vmatpush1.bf16.msra.mxu0 0
  %353 = vmatprep.subr.bf16.mxu0 0
  %354 = vmatpush1.bf16.msra.mxu0 0
  %355 = vmatprep.subr.bf16.mxu0 0
  %356 = vmatpush1.bf16.msra.mxu0 0
  %357 = vmatprep.subr.bf16.mxu0 0
  %358 = vmatpush1.bf16.msra.mxu0 0
  %359 = vmatprep.mubr.bf16.mxu0 0
  %360 = vmatmul.mubr.bf16.gmra.mrb[0].mxu0 %v322
  %v361 = vpop.f32.mrb[0].mxu0
  %v362 = vadd.f32 %v319, %v361
  %v363 = vpop.f32.mrb[0].mxu0
  %v364 = vpop.f32.mrb[0].mxu0
  %v365 = vpop.f32.mrb[0].mxu0
  %366 = vdwg.mxu0
  %v368 = vsel %vm50, %v47, 0
  %370 = vmatprep.subr.mxu0 0.0
  %371 = vmatpush1.msra.mxu0 %v198
  %372 = vmatprep.subr.mxu0 0.0
  %373 = vmatpush1.msra.mxu0 %v199
  %374 = vmatprep.subr.mxu0 0.0
  %375 = vmatpush1.msra.mxu0 %v200
  %376 = vmatprep.subr.mxu0 0.0
  %377 = vmatpush1.msra.mxu0 %v201
  %378 = vmatprep.subr.mxu0 0.0
  %379 = vmatpush1.msra.mxu0 %v202
  %380 = vmatprep.subr.mxu0 0.0
  %381 = vmatpush1.msra.mxu0 %v203
  %382 = vmatprep.subr.mxu0 0.0
  %383 = vmatpush1.msra.mxu0 %v204
  %384 = vmatprep.subr.mxu0 0.0
  %385 = vmatpush1.msra.mxu0 %v205
  %386 = vmatprep.subr.mxu0 0.0
  %387 = vmatpush1.msra.mxu0 0.0
  %388 = vmatprep.subr.mxu0 0.0
  %389 = vmatpush1.msra.mxu0 0.0
  %390 = vmatprep.subr.mxu0 0.0
  %391 = vmatpush1.msra.mxu0 0.0
  %392 = vmatprep.subr.mxu0 0.0
  %393 = vmatpush1.msra.mxu0 0.0
  %394 = vmatprep.subr.mxu0 0.0
  %395 = vmatpush1.msra.mxu0 0.0
  %396 = vmatprep.subr.mxu0 0.0
  %397 = vmatpush1.msra.mxu0 0.0
  %398 = vmatprep.subr.mxu0 0.0
  %399 = vmatpush1.msra.mxu0 0.0
  %400 = vmatprep.subr.mxu0 0.0
  %401 = vmatpush1.msra.mxu0 0.0
  %402 = vmatprep.subr.mxu0 0.0
  %403 = vmatpush1.msra.mxu0 0.0
  %404 = vmatprep.subr.mxu0 0.0
  %405 = vmatpush1.msra.mxu0 0.0
  %406 = vmatprep.subr.mxu0 0.0
  %407 = vmatpush1.msra.mxu0 0.0
  %408 = vmatprep.subr.mxu0 0.0
  %409 = vmatpush1.msra.mxu0 0.0
  %410 = vmatprep.subr.mxu0 0.0
  %411 = vmatpush1.msra.mxu0 0.0
  %412 = vmatprep.subr.mxu0 0.0
  %413 = vmatpush1.msra.mxu0 0.0
  %414 = vmatprep.subr.mxu0 0.0
  %415 = vmatpush1.msra.mxu0 0.0
  %416 = vmatprep.subr.mxu0 0.0
  %417 = vmatpush1.msra.mxu0 0.0
  %418 = vmatprep.subr.mxu0 0.0
  %419 = vmatpush1.msra.mxu0 0.0
  %420 = vmatprep.subr.mxu0 0.0
  %421 = vmatpush1.msra.mxu0 0.0
  %422 = vmatprep.subr.mxu0 0.0
  %423 = vmatpush1.msra.mxu0 0.0
  %424 = vmatprep.subr.mxu0 0.0
  %425 = vmatpush1.msra.mxu0 0.0
  %426 = vmatprep.subr.mxu0 0.0
  %427 = vmatpush1.msra.mxu0 0.0
  %428 = vmatprep.subr.mxu0 0.0
  %429 = vmatpush1.msra.mxu0 0.0
  %430 = vmatprep.subr.mxu0 0.0
  %431 = vmatpush1.msra.mxu0 0.0
  %432 = vmatprep.subr.mxu0 0.0
  %433 = vmatpush1.msra.mxu0 0.0
  %434 = vmatprep.mubr.f32.mxu0 0.0
  %435 = vmatmul.mubr.f32.gmra.mrb[0].mxu0 %v368
  %v436 = vpop.f32.mrb[0].mxu0
  %v437 = vadd.f32 0.0, %v436
  %v438 = vpop.f32.mrb[0].mxu0
  %439 = vdwg.mxu0
  %v440 = vld [vmem:[%s11] sm:$0xff]
  %v441 = vld [vmem:[%s12] sm:$0xff]
  %443 = vrot.lane.b32.xlu0 %v437, 1
  %v444 = vpop.permute.xlu0 %443
  %v446 = vsel %vm84, 0.0, %v444
  %v447 = vsel %vm286, %v446, 0.0
  %448 = vrot.lane.b32.xlu0 %v437, 65
  %v449 = vpop.permute.xlu0 %448
  %v451 = vsel %vm84, 0.0, %v449
  %v452 = vsel %vm286, %v451, 0.0
  %454 = vrot.lane.b32.xlu0 %v452, 64
  %v455 = vpop.permute.xlu0 %454
  %v457 = vsel %vm50, %v447, %v455
  %459 = vrot.lane.b32.xlu0 %v447, 127
  %v460 = vpop.permute.xlu0 %459
  %462 = vrot.lane.b32.xlu0 %v452, 63
  %v463 = vpop.permute.xlu0 %462
  %v465 = vsel %vm50, %v460, %v463
  %466 = vrot.lane.b32.xlu0 %v447, 126
  %v467 = vpop.permute.xlu0 %466
  %469 = vrot.lane.b32.xlu0 %v452, 62
  %v470 = vpop.permute.xlu0 %469
  %v472 = vsel %vm50, %v467, %v470
  %v473 = vpack.c.bf16 %v440, %v440
  %v474 = vpack.c.bf16 %v465, %v457
  %v475 = vpack.c.bf16 %v472, %v472
  %477 = vset.pattern.permute.xlu0 0
  %478 = vperm.xlu0 %477, %v441
  %v479 = vpop.permute.xlu0 %478
  %v482 = vsel %vm122, %v473, 0
  %v485 = vsel %vm126, %v475, 0
  %487 = vmatprep.subr.bf16.mxu0 0
  %488 = vmatpush1.bf16.msra.mxu0 %v474
  %489 = vmatprep.subr.bf16.mxu0 0
  %490 = vmatpush1.bf16.msra.mxu0 %v485
  %491 = vmatprep.subr.bf16.mxu0 0
  %492 = vmatpush1.bf16.msra.mxu0 0
  %493 = vmatprep.subr.bf16.mxu0 0
  %494 = vmatpush1.bf16.msra.mxu0 0
  %495 = vmatprep.subr.bf16.mxu0 0
  %496 = vmatpush1.bf16.msra.mxu0 0
  %497 = vmatprep.subr.bf16.mxu0 0
  %498 = vmatpush1.bf16.msra.mxu0 0
  %499 = vmatprep.subr.bf16.mxu0 0
  %500 = vmatpush1.bf16.msra.mxu0 0
  %501 = vmatprep.subr.bf16.mxu0 0
  %502 = vmatpush1.bf16.msra.mxu0 0
  %503 = vmatprep.subr.bf16.mxu0 0
  %504 = vmatpush1.bf16.msra.mxu0 0
  %505 = vmatprep.subr.bf16.mxu0 0
  %506 = vmatpush1.bf16.msra.mxu0 0
  %507 = vmatprep.subr.bf16.mxu0 0
  %508 = vmatpush1.bf16.msra.mxu0 0
  %509 = vmatprep.subr.bf16.mxu0 0
  %510 = vmatpush1.bf16.msra.mxu0 0
  %511 = vmatprep.subr.bf16.mxu0 0
  %512 = vmatpush1.bf16.msra.mxu0 0
  %513 = vmatprep.subr.bf16.mxu0 0
  %514 = vmatpush1.bf16.msra.mxu0 0
  %515 = vmatprep.subr.bf16.mxu0 0
  %516 = vmatpush1.bf16.msra.mxu0 0
  %517 = vmatprep.subr.bf16.mxu0 0
  %518 = vmatpush1.bf16.msra.mxu0 0
  %519 = vmatprep.mubr.bf16.mxu0 0
  %520 = vmatmul.mubr.bf16.gmra.mrb[0].mxu0 %v482
  %v521 = vpop.f32.mrb[0].mxu0
  %v522 = vadd.f32 %v479, %v521
  %v523 = vpop.f32.mrb[0].mxu0
  %v524 = vpop.f32.mrb[0].mxu0
  %v525 = vpop.f32.mrb[0].mxu0
  %526 = vdwg.mxu0
  %v527 = vadd.f32 %v362, %v522
  %528 = vst [vmem:[%s13] sm:$0xff] %v527
  // Predicated region
  $region54: #{res_generator1_forward.14} parent=0 // pred_check
    _
  $region55: #{res_generator1_forward.14} parent=0 // pred_check_branch
    %530 = sbr.rel (0) target = $region57
  $region56: #{res_generator1_forward.14} parent=0 // pred_region
    _
  $region57: #{res_generator1_forward.14} parent=0 // pred_fallthru
    _
  // Predicated region
  $region58: #{res_generator1_forward.14} parent=0 // pred_check
    _
  $region59: #{res_generator1_forward.14} parent=0 // pred_check_branch
    %532 = sbr.rel (0) target = $region61
  $region60: #{res_generator1_forward.14} parent=0 // pred_region
    _
  $region61: #{res_generator1_forward.14} parent=0 // pred_fallthru
    _

// kernel: res_generator1_forward.12
$region0: #{res_generator1_forward.12}
  #allocation0 [shape = 'u32[]', space=smem, size = 0x4, offset = 0x4, fixed_abs, tag = 'smem constant byte address 0x4 - core index']
  #allocation1 [shape = 'u32[144,128]{1,0:T(1,128)}', space=vmem, size = 0x12000, scoped, tag = 'internal scratch']
  %s0 = inlined_call_operand.vmem [shape: f32[35,16], index: 0, kind: input, shape index: {}]
  %s1 = inlined_call_operand.vmem [shape: f32[35,16], index: 1, kind: input, shape index: {}]
  %s2 = inlined_call_operand.vmem [shape: f32[16,32], index: 2, kind: input, shape index: {}]
  %s3 = inlined_call_operand.vmem [shape: f32[35,1], index: 3, kind: input, shape index: {}]
  %s4 = inlined_call_operand.vmem [shape: f32[35,1], index: 4, kind: input, shape index: {}]
  %s5 = inlined_call_operand.vmem [shape: f32[16,1], index: 5, kind: input, shape index: {}]
  %s6 = inlined_call_operand.vmem [shape: f32[16,1], index: 6, kind: input, shape index: {}]
  %s7 = inlined_call_operand.vmem [shape: f32[16,105], index: 7, kind: input, shape index: {}]
  %s8 = inlined_call_operand.vmem [shape: f32[16,1], index: 8, kind: input, shape index: {}]
  %s9 = inlined_call_operand.vmem [shape: f32[16,48], index: 9, kind: input, shape index: {}]
  %s10 = inlined_call_operand.vmem [shape: f32[16,1], index: 10, kind: input, shape index: {}]
  %s11 = inlined_call_operand.vmem [shape: f32[16,105], index: 11, kind: input, shape index: {}]
  %s12 = inlined_call_operand.vmem [shape: f32[16,1], index: 12, kind: input, shape index: {}]
  %s13 = inlined_call_operand.vmem [shape: f32[16,32], index: 13, kind: output, shape index: {}]
  %s14 = sld [smem:[#allocation0]]
  $region62: #{res_generator1_forward.12} parent=0
    _
  %s16 = ssub.s32 1, %s14
  %s17 = scalar_select 0, %s16, %s14
  // Predicated region
  $region2: #{res_generator1_forward.12} parent=0 // pred_check
    _
  $region3: #{res_generator1_forward.12} parent=0 // pred_check_branch
    %19 = sbr.rel (0) target = $region5
  $region4: #{res_generator1_forward.12} parent=0 // pred_region
    _
  $region5: #{res_generator1_forward.12} parent=0 // pred_fallthru
    _
  // Predicated region
  $region6: #{res_generator1_forward.12} parent=0 // pred_check
    _
  $region7: #{res_generator1_forward.12} parent=0 // pred_check_branch
    %21 = sbr.rel (0) target = $region9
  $region8: #{res_generator1_forward.12} parent=0 // pred_region
    _
  $region9: #{res_generator1_forward.12} parent=0 // pred_fallthru
    _
  // Predicated region
  $region10: #{res_generator1_forward.12} parent=0 // pred_check
    _
  $region11: #{res_generator1_forward.12} parent=0 // pred_check_branch
    %23 = sbr.rel (0) target = $region13
  $region12: #{res_generator1_forward.12} parent=0 // pred_region
    _
  $region13: #{res_generator1_forward.12} parent=0 // pred_fallthru
    _
  // Predicated region
  $region14: #{res_generator1_forward.12} parent=0 // pred_check
    _
  $region15: #{res_generator1_forward.12} parent=0 // pred_check_branch
    %25 = sbr.rel (0) target = $region17
  $region16: #{res_generator1_forward.12} parent=0 // pred_region
    _
  $region17: #{res_generator1_forward.12} parent=0 // pred_fallthru
    _
  // Predicated region
  $region18: #{res_generator1_forward.12} parent=0 // pred_check
    _
  $region19: #{res_generator1_forward.12} parent=0 // pred_check_branch
    %27 = sbr.rel (0) target = $region21
  $region20: #{res_generator1_forward.12} parent=0 // pred_region
    _
  $region21: #{res_generator1_forward.12} parent=0 // pred_fallthru
    _
  // Predicated region
  $region22: #{res_generator1_forward.12} parent=0 // pred_check
    _
  $region23: #{res_generator1_forward.12} parent=0 // pred_check_branch
    %29 = sbr.rel (0) target = $region25
  $region24: #{res_generator1_forward.12} parent=0 // pred_region
    _
  $region25: #{res_generator1_forward.12} parent=0 // pred_fallthru
    _
  // Predicated region
  $region26: #{res_generator1_forward.12} parent=0 // pred_check
    _
  $region27: #{res_generator1_forward.12} parent=0 // pred_check_branch
    %31 = sbr.rel (0) target = $region29
  $region28: #{res_generator1_forward.12} parent=0 // pred_region
    _
  $region29: #{res_generator1_forward.12} parent=0 // pred_fallthru
    _
  // Predicated region
  $region30: #{res_generator1_forward.12} parent=0 // pred_check
    _
  $region31: #{res_generator1_forward.12} parent=0 // pred_check_branch
    %33 = sbr.rel (0) target = $region33
  $region32: #{res_generator1_forward.12} parent=0 // pred_region
    _
  $region33: #{res_generator1_forward.12} parent=0 // pred_fallthru
    _
  // Predicated region
  $region34: #{res_generator1_forward.12} parent=0 // pred_check
    _
  $region35: #{res_generator1_forward.12} parent=0 // pred_check_branch
    %35 = sbr.rel (0) target = $region37
  $region36: #{res_generator1_forward.12} parent=0 // pred_region
    _
  $region37: #{res_generator1_forward.12} parent=0 // pred_fallthru
    _
  // Predicated region
  $region38: #{res_generator1_forward.12} parent=0 // pred_check
    _
  $region39: #{res_generator1_forward.12} parent=0 // pred_check_branch
    %37 = sbr.rel (0) target = $region41
  $region40: #{res_generator1_forward.12} parent=0 // pred_region
    _
  $region41: #{res_generator1_forward.12} parent=0 // pred_fallthru
    _
  // Predicated region
  $region42: #{res_generator1_forward.12} parent=0 // pred_check
    _
  $region43: #{res_generator1_forward.12} parent=0 // pred_check_branch
    %39 = sbr.rel (0) target = $region45
  $region44: #{res_generator1_forward.12} parent=0 // pred_region
    _
  $region45: #{res_generator1_forward.12} parent=0 // pred_fallthru
    _
  // Predicated region
  $region46: #{res_generator1_forward.12} parent=0 // pred_check
    _
  $region47: #{res_generator1_forward.12} parent=0 // pred_check_branch
    %41 = sbr.rel (0) target = $region49
  $region48: #{res_generator1_forward.12} parent=0 // pred_region
    _
  $region49: #{res_generator1_forward.12} parent=0 // pred_fallthru
    _
  // Predicated region
  $region50: #{res_generator1_forward.12} parent=0 // pred_check
    _
  $region51: #{res_generator1_forward.12} parent=0 // pred_check_branch
    %43 = sbr.rel (0) target = $region53
  $region52: #{res_generator1_forward.12} parent=0 // pred_region
    _
  $region53: #{res_generator1_forward.12} parent=0 // pred_fallthru
    _
  %v45 = vld [vmem:[%s0] sm:$0xff]
  %v46 = vld [vmem:[%s0 + $0x8] sm:$0xff]
  %v47 = vld [vmem:[%s0 + $0x10] sm:$0xff]
  %v48 = vld [vmem:[%s0 + $0x18] sm:$0xff]
  %v49 = vld [vmem:[%s0 + $0x20] sm:$0x7]
  %v50 = vld [vmem:[%s1] sm:$0xff]
  %v51 = vld [vmem:[%s1 + $0x8] sm:$0xff]
  %v52 = vld [vmem:[%s1 + $0x10] sm:$0xff]
  %v53 = vld [vmem:[%s1 + $0x18] sm:$0xff]
  %v54 = vld [vmem:[%s1 + $0x20] sm:$0x7]
  %v55 = vadd.f32 %v45, %v50
  %v56 = vadd.f32 %v46, %v51
  %v57 = vadd.f32 %v47, %v52
  %v58 = vadd.f32 %v48, %v53
  %v59 = vadd.f32 %v49, %v54
  %v60 = vld [vmem:[%s3] sm:$0xff]
  %v61 = vld [vmem:[%s3 + $0x8] sm:$0xff]
  %v62 = vld [vmem:[%s3 + $0x10] sm:$0xff]
  %v63 = vld [vmem:[%s3 + $0x18] sm:$0xff]
  %v64 = vld [vmem:[%s3 + $0x20] sm:$0x7]
  %v65 = vld [vmem:[%s4] sm:$0xff]
  %v66 = vld [vmem:[%s4 + $0x8] sm:$0xff]
  %v67 = vld [vmem:[%s4 + $0x10] sm:$0xff]
  %v68 = vld [vmem:[%s4 + $0x18] sm:$0xff]
  %v69 = vld [vmem:[%s4 + $0x20] sm:$0x7]
  %vm70 = vcmask 130048
  %v71 = vsel %vm70, %v55, 0.0
  %72 = vadd.xlane.f32.xlu0 %v71
  %v73 = vpop.xlane.xlu0 %72
  %v74 = vsel %vm70, %v56, 0.0
  %75 = vadd.xlane.f32.xlu0 %v74
  %v76 = vpop.xlane.xlu0 %75
  %v77 = vsel %vm70, %v57, 0.0
  %78 = vadd.xlane.f32.xlu0 %v77
  %v79 = vpop.xlane.xlu0 %78
  %v80 = vsel %vm70, %v58, 0.0
  %81 = vadd.xlane.f32.xlu0 %v80
  %v82 = vpop.xlane.xlu0 %81
  %vm83 = vcmask 124928
  %v84 = vsel %vm83, %v59, 0.0
  %85 = vadd.xlane.f32.xlu0 %v84
  %v86 = vpop.xlane.xlu0 %85
  %v87 = vrcp.pop 16.0
  %v88 = vmul.f32 %v73, %v87
  %v89 = vmul.f32 %v76, %v87
  %v90 = vmul.f32 %v79, %v87
  %v91 = vmul.f32 %v82, %v87
  %v92 = vmul.f32 %v86, %v87
  %v93 = vsub.f32 %v55, %v88
  %v94 = vsub.f32 %v56, %v89
  %v95 = vsub.f32 %v57, %v90
  %v96 = vsub.f32 %v58, %v91
  %v97 = vsub.f32 %v59, %v92
  %v98 = vmul.f32 %v93, %v93
  %v99 = vmul.f32 %v94, %v94
  %v100 = vmul.f32 %v95, %v95
  %v101 = vmul.f32 %v96, %v96
  %v102 = vmul.f32 %v97, %v97
  %v103 = vsel %vm70, %v98, 0.0
  %104 = vadd.xlane.f32.xlu0 %v103
  %v105 = vpop.xlane.xlu0 %104
  %v106 = vsel %vm70, %v99, 0.0
  %107 = vadd.xlane.f32.xlu0 %v106
  %v108 = vpop.xlane.xlu0 %107
  %v109 = vsel %vm70, %v100, 0.0
  %110 = vadd.xlane.f32.xlu0 %v109
  %v111 = vpop.xlane.xlu0 %110
  %v112 = vsel %vm70, %v101, 0.0
  %113 = vadd.xlane.f32.xlu0 %v112
  %v114 = vpop.xlane.xlu0 %113
  %v115 = vsel %vm83, %v102, 0.0
  %116 = vadd.xlane.f32.xlu0 %v115
  %v117 = vpop.xlane.xlu0 %116
  %v118 = vmul.f32 %v105, %v87
  %v119 = vmul.f32 %v108, %v87
  %v120 = vmul.f32 %v111, %v87
  %v121 = vmul.f32 %v114, %v87
  %v122 = vmul.f32 %v117, %v87
  %v123 = vadd.f32 %v118, 1e-05
  %v124 = vadd.f32 %v119, 1e-05
  %v125 = vadd.f32 %v120, 1e-05
  %v126 = vadd.f32 %v121, 1e-05
  %v127 = vadd.f32 %v122, 1e-05
  %v128 = vrsqrt.pop %v123
  %v129 = vrsqrt.pop %v124
  %v130 = vrsqrt.pop %v125
  %v131 = vrsqrt.pop %v126
  %v132 = vrsqrt.pop %v127
  %v133 = vmul.f32 %v93, %v128
  %v134 = vmul.f32 %v94, %v129
  %v135 = vmul.f32 %v95, %v130
  %v136 = vmul.f32 %v96, %v131
  %v137 = vmul.f32 %v97, %v132
  %139 = vset.pattern.permute.xlu0 0
  %140 = vperm.xlu0 %139, %v60
  %v141 = vpop.permute.xlu0 %140
  %144 = vset.pattern.permute.xlu0 0
  %145 = vperm.xlu0 %144, %v61
  %v146 = vpop.permute.xlu0 %145
  %149 = vset.pattern.permute.xlu0 0
  %150 = vperm.xlu0 %149, %v62
  %v151 = vpop.permute.xlu0 %150
  %154 = vset.pattern.permute.xlu0 0
  %155 = vperm.xlu0 %154, %v63
  %v156 = vpop.permute.xlu0 %155
  %159 = vset.pattern.permute.xlu0 0
  %160 = vperm.xlu0 %159, %v64
  %v161 = vpop.permute.xlu0 %160
  %v163 = vmul.f32 %v133, %v141
  %v164 = vmul.f32 %v134, %v146
  %v165 = vmul.f32 %v135, %v151
  %v166 = vmul.f32 %v136, %v156
  %v167 = vmul.f32 %v137, %v161
  %169 = vset.pattern.permute.xlu0 0
  %170 = vperm.xlu0 %169, %v65
  %v171 = vpop.permute.xlu0 %170
  %174 = vset.pattern.permute.xlu0 0
  %175 = vperm.xlu0 %174, %v66
  %v176 = vpop.permute.xlu0 %175
  %179 = vset.pattern.permute.xlu0 0
  %180 = vperm.xlu0 %179, %v67
  %v181 = vpop.permute.xlu0 %180
  %184 = vset.pattern.permute.xlu0 0
  %185 = vperm.xlu0 %184, %v68
  %v186 = vpop.permute.xlu0 %185
  %189 = vset.pattern.permute.xlu0 0
  %190 = vperm.xlu0 %189, %v69
  %v191 = vpop.permute.xlu0 %190
  %v193 = vadd.f32 %v163, %v171
  %v194 = vadd.f32 %v164, %v176
  %v195 = vadd.f32 %v165, %v181
  %v196 = vadd.f32 %v166, %v186
  %v197 = vadd.f32 %v167, %v191
  %v198 = vld [vmem:[%s7] sm:$0xff]
  %v199 = vld [vmem:[%s7 + $0x8] sm:$0xff]
  %v200 = vld [vmem:[%s8] sm:$0xff]
  %v201 = vld [vmem:[%s8 + $0x8] sm:$0xff]
  %v202 = vmax.f32 %v193, 0.0
  %v203 = vmax.f32 %v194, 0.0
  %v204 = vmax.f32 %v195, 0.0
  %v205 = vmax.f32 %v196, 0.0
  %v206 = vmax.f32 %v197, 0.0
  %212 = vrot.lane.b32.xlu0 %v202, 1
  %v213 = vpop.permute.xlu0 %212
  %214 = vrot.lane.b32.xlu0 %v203, 1
  %v215 = vpop.permute.xlu0 %214
  %216 = vrot.lane.b32.xlu0 %v204, 1
  %v217 = vpop.permute.xlu0 %216
  %218 = vrot.lane.b32.xlu0 %v205, 1
  %v219 = vpop.permute.xlu0 %218
  %220 = vrot.lane.b32.xlu0 %v206, 1
  %v221 = vpop.permute.xlu0 %220
  %vm227 = vcmask 7168
  %v228 = vsel %vm227, 0.0, %v213
  %v229 = vsel %vm227, 0.0, %v215
  %v230 = vsel %vm227, 0.0, %v217
  %v231 = vsel %vm227, 0.0, %v219
  %v232 = vsel %vm227, 0.0, %v221
  %vm233 = vcmask 72704
  %v234 = vsel %vm233, %v228, 0.0
  %v235 = vsel %vm233, %v229, 0.0
  %v236 = vsel %vm233, %v230, 0.0
  %v237 = vsel %vm233, %v231, 0.0
  %v238 = vsel %vm233, %v232, 0.0
  %239 = vrot.lane.b32.xlu0 %v202, 121
  %v240 = vpop.permute.xlu0 %239
  %241 = vrot.lane.b32.xlu0 %v203, 121
  %v242 = vpop.permute.xlu0 %241
  %243 = vrot.lane.b32.xlu0 %v204, 121
  %v244 = vpop.permute.xlu0 %243
  %245 = vrot.lane.b32.xlu0 %v205, 121
  %v246 = vpop.permute.xlu0 %245
  %247 = vrot.lane.b32.xlu0 %v206, 121
  %v248 = vpop.permute.xlu0 %247
  %v254 = vsel %vm227, 0.0, %v240
  %v255 = vsel %vm227, 0.0, %v242
  %v256 = vsel %vm227, 0.0, %v244
  %v257 = vsel %vm227, 0.0, %v246
  %v258 = vsel %vm227, 0.0, %v248
  %v259 = vsel %vm233, %v254, 0.0
  %v260 = vsel %vm233, %v255, 0.0
  %v261 = vsel %vm233, %v256, 0.0
  %v262 = vsel %vm233, %v257, 0.0
  %v263 = vsel %vm233, %v258, 0.0
  %269 = vrot.lane.b32.xlu0 %v259, 8
  %v270 = vpop.permute.xlu0 %269
  %271 = vrot.lane.b32.xlu0 %v260, 8
  %v272 = vpop.permute.xlu0 %271
  %273 = vrot.lane.b32.xlu0 %v261, 8
  %v274 = vpop.permute.xlu0 %273
  %275 = vrot.lane.b32.xlu0 %v262, 8
  %v276 = vpop.permute.xlu0 %275
  %277 = vrot.lane.b32.xlu0 %v263, 8
  %v278 = vpop.permute.xlu0 %277
  %vm284 = vcmask 64512
  %v285 = vsel %vm284, %v234, %v270
  %v286 = vsel %vm284, %v235, %v272
  %v287 = vsel %vm284, %v236, %v274
  %v288 = vsel %vm284, %v237, %v276
  %v289 = vsel %vm284, %v238, %v278
  %295 = vrot.lane.b32.xlu0 %v234, 127
  %v296 = vpop.permute.xlu0 %295
  %297 = vrot.lane.b32.xlu0 %v235, 127
  %v298 = vpop.permute.xlu0 %297
  %299 = vrot.lane.b32.xlu0 %v236, 127
  %v300 = vpop.permute.xlu0 %299
  %301 = vrot.lane.b32.xlu0 %v237, 127
  %v302 = vpop.permute.xlu0 %301
  %303 = vrot.lane.b32.xlu0 %v238, 127
  %v304 = vpop.permute.xlu0 %303
  %310 = vrot.lane.b32.xlu0 %v259, 7
  %v311 = vpop.permute.xlu0 %310
  %312 = vrot.lane.b32.xlu0 %v260, 7
  %v313 = vpop.permute.xlu0 %312
  %314 = vrot.lane.b32.xlu0 %v261, 7
  %v315 = vpop.permute.xlu0 %314
  %316 = vrot.lane.b32.xlu0 %v262, 7
  %v317 = vpop.permute.xlu0 %316
  %318 = vrot.lane.b32.xlu0 %v263, 7
  %v319 = vpop.permute.xlu0 %318
  %v325 = vsel %vm284, %v296, %v311
  %v326 = vsel %vm284, %v298, %v313
  %v327 = vsel %vm284, %v300, %v315
  %v328 = vsel %vm284, %v302, %v317
  %v329 = vsel %vm284, %v304, %v319
  %330 = vrot.lane.b32.xlu0 %v234, 126
  %v331 = vpop.permute.xlu0 %330
  %332 = vrot.lane.b32.xlu0 %v235, 126
  %v333 = vpop.permute.xlu0 %332
  %334 = vrot.lane.b32.xlu0 %v236, 126
  %v335 = vpop.permute.xlu0 %334
  %336 = vrot.lane.b32.xlu0 %v237, 126
  %v337 = vpop.permute.xlu0 %336
  %338 = vrot.lane.b32.xlu0 %v238, 126
  %v339 = vpop.permute.xlu0 %338
  %345 = vrot.lane.b32.xlu0 %v259, 6
  %v346 = vpop.permute.xlu0 %345
  %347 = vrot.lane.b32.xlu0 %v260, 6
  %v348 = vpop.permute.xlu0 %347
  %349 = vrot.lane.b32.xlu0 %v261, 6
  %v350 = vpop.permute.xlu0 %349
  %351 = vrot.lane.b32.xlu0 %v262, 6
  %v352 = vpop.permute.xlu0 %351
  %353 = vrot.lane.b32.xlu0 %v263, 6
  %v354 = vpop.permute.xlu0 %353
  %v360 = vsel %vm284, %v331, %v346
  %v361 = vsel %vm284, %v333, %v348
  %v362 = vsel %vm284, %v335, %v350
  %v363 = vsel %vm284, %v337, %v352
  %v364 = vsel %vm284, %v339, %v354
  %vm370 = vcmask 1042432
  %v371 = vrot.slane %v325, 5
  %v372 = vrot.slane %v326, 5
  %v373 = vsel %vm370, %v371, %v372
  %v374 = vrot.slane %v327, 5
  %v375 = vsel %vm370, %v372, %v374
  %v376 = vrot.slane %v328, 5
  %v377 = vsel %vm370, %v374, %v376
  %v378 = vrot.slane %v329, 5
  %v379 = vsel %vm370, %v376, %v378
  %vm390 = vcmask 1045504
  %v391 = vrot.slane %v360, 2
  %v392 = vrot.slane %v361, 2
  %v393 = vsel %vm390, %v391, %v392
  %v394 = vrot.slane %v362, 2
  %v395 = vsel %vm390, %v392, %v394
  %v396 = vrot.slane %v363, 2
  %v397 = vsel %vm390, %v394, %v396
  %v398 = vrot.slane %v364, 2
  %v399 = vsel %vm390, %v396, %v398
  %v406 = vsel %vm370, %v289, %v371
  %v407 = vsel %vm390, %v379, %v391
  %v408 = vpack.c.bf16 %v199, %v198
  %v409 = vpack.c.bf16 %v286, %v285
  %v410 = vpack.c.bf16 %v288, %v287
  %v411 = vpack.c.bf16 %v373, %v406
  %v412 = vpack.c.bf16 %v377, %v375
  %v413 = vpack.c.bf16 %v393, %v407
  %v414 = vpack.c.bf16 %v397, %v395
  %v415 = vpack.c.bf16 %v398, %v399
  %417 = vset.pattern.permute.xlu0 0
  %418 = vperm.xlu0 %417, %v200
  %v419 = vpop.permute.xlu0 %418
  %422 = vset.pattern.permute.xlu0 0
  %423 = vperm.xlu0 %422, %v201
  %v424 = vpop.permute.xlu0 %423
  %vm426 = vcmask 859136
  %v428 = vsel %vm426, %v408, 0
  %vm430 = vcmask 1043456
  %vm431 = vcmask 1044480
  %v432 = vsel %vm430, 4294967295, 65535
  %v433 = vsel %vm431, %v432, 0
  %v435 = vand.u32 %v415, %v433
  %437 = vmatprep.subr.bf16.mxu0 0
  %438 = vmatpush1.bf16.msra.mxu0 %v409
  %439 = vmatprep.subr.bf16.mxu0 0
  %440 = vmatpush1.bf16.msra.mxu0 %v410
  %441 = vmatprep.subr.bf16.mxu0 0
  %442 = vmatpush1.bf16.msra.mxu0 %v411
  %443 = vmatprep.subr.bf16.mxu0 0
  %444 = vmatpush1.bf16.msra.mxu0 %v412
  %445 = vmatprep.subr.bf16.mxu0 0
  %446 = vmatpush1.bf16.msra.mxu0 %v413
  %447 = vmatprep.subr.bf16.mxu0 0
  %448 = vmatpush1.bf16.msra.mxu0 %v414
  %449 = vmatprep.subr.bf16.mxu0 0
  %450 = vmatpush1.bf16.msra.mxu0 %v435
  %451 = vmatprep.subr.bf16.mxu0 0
  %452 = vmatpush1.bf16.msra.mxu0 0
  %453 = vmatprep.subr.bf16.mxu0 0
  %454 = vmatpush1.bf16.msra.mxu0 0
  %455 = vmatprep.subr.bf16.mxu0 0
  %456 = vmatpush1.bf16.msra.mxu0 0
  %457 = vmatprep.subr.bf16.mxu0 0
  %458 = vmatpush1.bf16.msra.mxu0 0
  %459 = vmatprep.subr.bf16.mxu0 0
  %460 = vmatpush1.bf16.msra.mxu0 0
  %461 = vmatprep.subr.bf16.mxu0 0
  %462 = vmatpush1.bf16.msra.mxu0 0
  %463 = vmatprep.subr.bf16.mxu0 0
  %464 = vmatpush1.bf16.msra.mxu0 0
  %465 = vmatprep.subr.bf16.mxu0 0
  %466 = vmatpush1.bf16.msra.mxu0 0
  %467 = vmatprep.subr.bf16.mxu0 0
  %468 = vmatpush1.bf16.msra.mxu0 0
  %469 = vmatprep.mubr.bf16.mxu0 0
  %470 = vmatmul.mubr.bf16.gmra.mrb[0].mxu0 %v428
  %v471 = vpop.f32.mrb[0].mxu0
  %v472 = vadd.f32 %v419, %v471
  %v473 = vpop.f32.mrb[0].mxu0
  %v474 = vpop.f32.mrb[0].mxu0
  %v475 = vadd.f32 %v424, %v474
  %v476 = vpop.f32.mrb[0].mxu0
  %477 = vdwg.mxu0
  %v478 = vld [vmem:[%s5] sm:$0xff]
  %v479 = vld [vmem:[%s5 + $0x8] sm:$0xff]
  %v480 = vld [vmem:[%s6] sm:$0xff]
  %v481 = vld [vmem:[%s6 + $0x8] sm:$0xff]
  %v482 = vsel %vm70, %v472, 0.0
  %483 = vadd.xlane.f32.xlu0 %v482
  %v484 = vpop.xlane.xlu0 %483
  %v485 = vsel %vm70, %v475, 0.0
  %486 = vadd.xlane.f32.xlu0 %v485
  %v487 = vpop.xlane.xlu0 %486
  %v488 = vmul.f32 %v484, %v87
  %v489 = vmul.f32 %v487, %v87
  %v490 = vsub.f32 %v472, %v488
  %v491 = vsub.f32 %v475, %v489
  %v492 = vmul.f32 %v490, %v490
  %v493 = vmul.f32 %v491, %v491
  %v494 = vsel %vm70, %v492, 0.0
  %495 = vadd.xlane.f32.xlu0 %v494
  %v496 = vpop.xlane.xlu0 %495
  %v497 = vsel %vm70, %v493, 0.0
  %498 = vadd.xlane.f32.xlu0 %v497
  %v499 = vpop.xlane.xlu0 %498
  %v500 = vmul.f32 %v496, %v87
  %v501 = vmul.f32 %v499, %v87
  %v502 = vadd.f32 %v500, 1e-05
  %v503 = vadd.f32 %v501, 1e-05
  %v504 = vrsqrt.pop %v502
  %v505 = vrsqrt.pop %v503
  %v506 = vmul.f32 %v490, %v504
  %v507 = vmul.f32 %v491, %v505
  %509 = vset.pattern.permute.xlu0 0
  %510 = vperm.xlu0 %509, %v478
  %v511 = vpop.permute.xlu0 %510
  %514 = vset.pattern.permute.xlu0 0
  %515 = vperm.xlu0 %514, %v479
  %v516 = vpop.permute.xlu0 %515
  %v518 = vmul.f32 %v506, %v511
  %v519 = vmul.f32 %v507, %v516
  %521 = vset.pattern.permute.xlu0 0
  %522 = vperm.xlu0 %521, %v480
  %v523 = vpop.permute.xlu0 %522
  %526 = vset.pattern.permute.xlu0 0
  %527 = vperm.xlu0 %526, %v481
  %v528 = vpop.permute.xlu0 %527
  %v530 = vadd.f32 %v518, %v523
  %v531 = vadd.f32 %v519, %v528
  %v532 = vmax.f32 %v530, 0.0
  %v533 = vmax.f32 %v531, 0.0
  %v534 = vld [vmem:[%s2] sm:$0xff]
  %v535 = vld [vmem:[%s2 + $0x8] sm:$0xff]
  %v537 = vsel %vm70, %v532, 0
  %v540 = vsel %vm70, %v533, 0
  %542 = vmatprep.subr.mxu0 0.0
  %543 = vmatpush1.msra.mxu0 %v534
  %544 = vmatprep.subr.mxu0 0.0
  %545 = vmatpush1.msra.mxu0 %v535
  %546 = vmatprep.subr.mxu0 0.0
  %547 = vmatpush1.msra.mxu0 0.0
  %548 = vmatprep.subr.mxu0 0.0
  %549 = vmatpush1.msra.mxu0 0.0
  %550 = vmatprep.subr.mxu0 0.0
  %551 = vmatpush1.msra.mxu0 0.0
  %552 = vmatprep.subr.mxu0 0.0
  %553 = vmatpush1.msra.mxu0 0.0
  %554 = vmatprep.subr.mxu0 0.0
  %555 = vmatpush1.msra.mxu0 0.0
  %556 = vmatprep.subr.mxu0 0.0
  %557 = vmatpush1.msra.mxu0 0.0
  %558 = vmatprep.subr.mxu0 0.0
  %559 = vmatpush1.msra.mxu0 0.0
  %560 = vmatprep.subr.mxu0 0.0
  %561 = vmatpush1.msra.mxu0 0.0
  %562 = vmatprep.subr.mxu0 0.0
  %563 = vmatpush1.msra.mxu0 0.0
  %564 = vmatprep.subr.mxu0 0.0
  %565 = vmatpush1.msra.mxu0 0.0
  %566 = vmatprep.subr.mxu0 0.0
  %567 = vmatpush1.msra.mxu0 0.0
  %568 = vmatprep.subr.mxu0 0.0
  %569 = vmatpush1.msra.mxu0 0.0
  %570 = vmatprep.subr.mxu0 0.0
  %571 = vmatpush1.msra.mxu0 0.0
  %572 = vmatprep.subr.mxu0 0.0
  %573 = vmatpush1.msra.mxu0 0.0
  %574 = vmatprep.subr.mxu0 0.0
  %575 = vmatpush1.msra.mxu0 0.0
  %576 = vmatprep.subr.mxu0 0.0
  %577 = vmatpush1.msra.mxu0 0.0
  %578 = vmatprep.subr.mxu0 0.0
  %579 = vmatpush1.msra.mxu0 0.0
  %580 = vmatprep.subr.mxu0 0.0
  %581 = vmatpush1.msra.mxu0 0.0
  %582 = vmatprep.subr.mxu0 0.0
  %583 = vmatpush1.msra.mxu0 0.0
  %584 = vmatprep.subr.mxu0 0.0
  %585 = vmatpush1.msra.mxu0 0.0
  %586 = vmatprep.subr.mxu0 0.0
  %587 = vmatpush1.msra.mxu0 0.0
  %588 = vmatprep.subr.mxu0 0.0
  %589 = vmatpush1.msra.mxu0 0.0
  %590 = vmatprep.subr.mxu0 0.0
  %591 = vmatpush1.msra.mxu0 0.0
  %592 = vmatprep.subr.mxu0 0.0
  %593 = vmatpush1.msra.mxu0 0.0
  %594 = vmatprep.subr.mxu0 0.0
  %595 = vmatpush1.msra.mxu0 0.0
  %596 = vmatprep.subr.mxu0 0.0
  %597 = vmatpush1.msra.mxu0 0.0
  %598 = vmatprep.subr.mxu0 0.0
  %599 = vmatpush1.msra.mxu0 0.0
  %600 = vmatprep.subr.mxu0 0.0
  %601 = vmatpush1.msra.mxu0 0.0
  %602 = vmatprep.subr.mxu0 0.0
  %603 = vmatpush1.msra.mxu0 0.0
  %604 = vmatprep.subr.mxu0 0.0
  %605 = vmatpush1.msra.mxu0 0.0
  %606 = vmatprep.mubr.f32.mxu0 0.0
  %607 = vmatmul.mubr.f32.gmra.mrb[0].mxu0 %v537
  %v608 = vpop.f32.mrb[0].mxu0
  %v609 = vadd.f32 0.0, %v608
  %v610 = vpop.f32.mrb[0].mxu0
  %611 = vmatprep.mubr.f32.mxu0 0.0
  %612 = vmatmul.mubr.f32.gmra.mrb[0].mxu0 %v540
  %v613 = vpop.f32.mrb[0].mxu0
  %v614 = vadd.f32 0.0, %v613
  %v615 = vpop.f32.mrb[0].mxu0
  %616 = vdwg.mxu0
  %v617 = vld [vmem:[%s9] sm:$0xff]
  %v618 = vld [vmem:[%s9 + $0x8] sm:$0xff]
  %v619 = vld [vmem:[%s10] sm:$0xff]
  %v620 = vld [vmem:[%s10 + $0x8] sm:$0xff]
  %623 = vrot.lane.b32.xlu0 %v609, 1
  %v624 = vpop.permute.xlu0 %623
  %625 = vrot.lane.b32.xlu0 %v614, 1
  %v626 = vpop.permute.xlu0 %625
  %v629 = vsel %vm227, 0.0, %v624
  %v630 = vsel %vm227, 0.0, %v626
  %vm631 = vcmask 138240
  %v632 = vsel %vm631, %v629, 0.0
  %v633 = vsel %vm631, %v630, 0.0
  %634 = vrot.lane.b32.xlu0 %v609, 113
  %v635 = vpop.permute.xlu0 %634
  %636 = vrot.lane.b32.xlu0 %v614, 113
  %v637 = vpop.permute.xlu0 %636
  %v640 = vsel %vm227, 0.0, %v635
  %v641 = vsel %vm227, 0.0, %v637
  %v642 = vsel %vm631, %v640, 0.0
  %v643 = vsel %vm631, %v641, 0.0
  %646 = vrot.lane.b32.xlu0 %v642, 16
  %v647 = vpop.permute.xlu0 %646
  %648 = vrot.lane.b32.xlu0 %v643, 16
  %v649 = vpop.permute.xlu0 %648
  %v652 = vsel %vm70, %v632, %v647
  %v653 = vsel %vm70, %v633, %v649
  %656 = vrot.lane.b32.xlu0 %v632, 127
  %v657 = vpop.permute.xlu0 %656
  %658 = vrot.lane.b32.xlu0 %v633, 127
  %v659 = vpop.permute.xlu0 %658
  %662 = vrot.lane.b32.xlu0 %v642, 15
  %v663 = vpop.permute.xlu0 %662
  %664 = vrot.lane.b32.xlu0 %v643, 15
  %v665 = vpop.permute.xlu0 %664
  %v668 = vsel %vm70, %v657, %v663
  %v669 = vsel %vm70, %v659, %v665
  %670 = vrot.lane.b32.xlu0 %v632, 126
  %v671 = vpop.permute.xlu0 %670
  %672 = vrot.lane.b32.xlu0 %v633, 126
  %v673 = vpop.permute.xlu0 %672
  %676 = vrot.lane.b32.xlu0 %v642, 14
  %v677 = vpop.permute.xlu0 %676
  %678 = vrot.lane.b32.xlu0 %v643, 14
  %v679 = vpop.permute.xlu0 %678
  %v682 = vsel %vm70, %v671, %v677
  %v683 = vsel %vm70, %v673, %v679
  %v684 = vpack.c.bf16 %v618, %v617
  %v685 = vpack.c.bf16 %v653, %v652
  %v686 = vpack.c.bf16 %v669, %v668
  %v687 = vpack.c.bf16 %v683, %v682
  %689 = vset.pattern.permute.xlu0 0
  %690 = vperm.xlu0 %689, %v619
  %v691 = vpop.permute.xlu0 %690
  %694 = vset.pattern.permute.xlu0 0
  %695 = vperm.xlu0 %694, %v620
  %v696 = vpop.permute.xlu0 %695
  %vm698 = vcmask 392192
  %v700 = vsel %vm698, %v684, 0
  %702 = vmatprep.subr.bf16.mxu0 0
  %703 = vmatpush1.bf16.msra.mxu0 %v685
  %704 = vmatprep.subr.bf16.mxu0 0
  %705 = vmatpush1.bf16.msra.mxu0 %v686
  %706 = vmatprep.subr.bf16.mxu0 0
  %707 = vmatpush1.bf16.msra.mxu0 %v687
  %708 = vmatprep.subr.bf16.mxu0 0
  %709 = vmatpush1.bf16.msra.mxu0 0
  %710 = vmatprep.subr.bf16.mxu0 0
  %711 = vmatpush1.bf16.msra.mxu0 0
  %712 = vmatprep.subr.bf16.mxu0 0
  %713 = vmatpush1.bf16.msra.mxu0 0
  %714 = vmatprep.subr.bf16.mxu0 0
  %715 = vmatpush1.bf16.msra.mxu0 0
  %716 = vmatprep.subr.bf16.mxu0 0
  %717 = vmatpush1.bf16.msra.mxu0 0
  %718 = vmatprep.subr.bf16.mxu0 0
  %719 = vmatpush1.bf16.msra.mxu0 0
  %720 = vmatprep.subr.bf16.mxu0 0
  %721 = vmatpush1.bf16.msra.mxu0 0
  %722 = vmatprep.subr.bf16.mxu0 0
  %723 = vmatpush1.bf16.msra.mxu0 0
  %724 = vmatprep.subr.bf16.mxu0 0
  %725 = vmatpush1.bf16.msra.mxu0 0
  %726 = vmatprep.subr.bf16.mxu0 0
  %727 = vmatpush1.bf16.msra.mxu0 0
  %728 = vmatprep.subr.bf16.mxu0 0
  %729 = vmatpush1.bf16.msra.mxu0 0
  %730 = vmatprep.subr.bf16.mxu0 0
  %731 = vmatpush1.bf16.msra.mxu0 0
  %732 = vmatprep.subr.bf16.mxu0 0
  %733 = vmatpush1.bf16.msra.mxu0 0
  %734 = vmatprep.mubr.bf16.mxu0 0
  %735 = vmatmul.mubr.bf16.gmra.mrb[0].mxu0 %v700
  %v736 = vpop.f32.mrb[0].mxu0
  %v737 = vadd.f32 %v691, %v736
  %v738 = vpop.f32.mrb[0].mxu0
  %v739 = vpop.f32.mrb[0].mxu0
  %v740 = vadd.f32 %v696, %v739
  %v741 = vpop.f32.mrb[0].mxu0
  %742 = vdwg.mxu0
  %v744 = vsel %vm70, %v55, 0
  %v747 = vsel %vm70, %v56, 0
  %v750 = vsel %vm70, %v57, 0
  %v753 = vsel %vm70, %v58, 0
  %v756 = vsel %vm70, %v59, 0
  %758 = vmatprep.subr.mxu0 0.0
  %759 = vmatpush1.msra.mxu0 %v534
  %760 = vmatprep.subr.mxu0 0.0
  %761 = vmatpush1.msra.mxu0 %v535
  %762 = vmatprep.subr.mxu0 0.0
  %763 = vmatpush1.msra.mxu0 0.0
  %764 = vmatprep.subr.mxu0 0.0
  %765 = vmatpush1.msra.mxu0 0.0
  %766 = vmatprep.subr.mxu0 0.0
  %767 = vmatpush1.msra.mxu0 0.0
  %768 = vmatprep.subr.mxu0 0.0
  %769 = vmatpush1.msra.mxu0 0.0
  %770 = vmatprep.subr.mxu0 0.0
  %771 = vmatpush1.msra.mxu0 0.0
  %772 = vmatprep.subr.mxu0 0.0
  %773 = vmatpush1.msra.mxu0 0.0
  %774 = vmatprep.subr.mxu0 0.0
  %775 = vmatpush1.msra.mxu0 0.0
  %776 = vmatprep.subr.mxu0 0.0
  %777 = vmatpush1.msra.mxu0 0.0
  %778 = vmatprep.subr.mxu0 0.0
  %779 = vmatpush1.msra.mxu0 0.0
  %780 = vmatprep.subr.mxu0 0.0
  %781 = vmatpush1.msra.mxu0 0.0
  %782 = vmatprep.subr.mxu0 0.0
  %783 = vmatpush1.msra.mxu0 0.0
  %784 = vmatprep.subr.mxu0 0.0
  %785 = vmatpush1.msra.mxu0 0.0
  %786 = vmatprep.subr.mxu0 0.0
  %787 = vmatpush1.msra.mxu0 0.0
  %788 = vmatprep.subr.mxu0 0.0
  %789 = vmatpush1.msra.mxu0 0.0
  %790 = vmatprep.subr.mxu0 0.0
  %791 = vmatpush1.msra.mxu0 0.0
  %792 = vmatprep.subr.mxu0 0.0
  %793 = vmatpush1.msra.mxu0 0.0
  %794 = vmatprep.subr.mxu0 0.0
  %795 = vmatpush1.msra.mxu0 0.0
  %796 = vmatprep.subr.mxu0 0.0
  %797 = vmatpush1.msra.mxu0 0.0
  %798 = vmatprep.subr.mxu0 0.0
  %799 = vmatpush1.msra.mxu0 0.0
  %800 = vmatprep.subr.mxu0 0.0
  %801 = vmatpush1.msra.mxu0 0.0
  %802 = vmatprep.subr.mxu0 0.0
  %803 = vmatpush1.msra.mxu0 0.0
  %804 = vmatprep.subr.mxu0 0.0
  %805 = vmatpush1.msra.mxu0 0.0
  %806 = vmatprep.subr.mxu0 0.0
  %807 = vmatpush1.msra.mxu0 0.0
  %808 = vmatprep.subr.mxu0 0.0
  %809 = vmatpush1.msra.mxu0 0.0
  %810 = vmatprep.subr.mxu0 0.0
  %811 = vmatpush1.msra.mxu0 0.0
  %812 = vmatprep.subr.mxu0 0.0
  %813 = vmatpush1.msra.mxu0 0.0
  %814 = vmatprep.subr.mxu0 0.0
  %815 = vmatpush1.msra.mxu0 0.0
  %816 = vmatprep.subr.mxu0 0.0
  %817 = vmatpush1.msra.mxu0 0.0
  %818 = vmatprep.subr.mxu0 0.0
  %819 = vmatpush1.msra.mxu0 0.0
  %820 = vmatprep.subr.mxu0 0.0
  %821 = vmatpush1.msra.mxu0 0.0
  %822 = vmatprep.mubr.f32.mxu0 0.0
  %823 = vmatmul.mubr.f32.gmra.mrb[0].mxu0 %v744
  %v824 = vpop.f32.mrb[0].mxu0
  %v825 = vadd.f32 0.0, %v824
  %v826 = vpop.f32.mrb[0].mxu0
  %827 = vmatprep.mubr.f32.mxu0 0.0
  %828 = vmatmul.mubr.f32.gmra.mrb[0].mxu0 %v747
  %v829 = vpop.f32.mrb[0].mxu0
  %v830 = vadd.f32 0.0, %v829
  %v831 = vpop.f32.mrb[0].mxu0
  %832 = vmatprep.mubr.f32.mxu0 0.0
  %833 = vmatmul.mubr.f32.gmra.mrb[0].mxu0 %v750
  %v834 = vpop.f32.mrb[0].mxu0
  %v835 = vadd.f32 0.0, %v834
  %v836 = vpop.f32.mrb[0].mxu0
  %837 = vmatprep.mubr.f32.mxu0 0.0
  %838 = vmatmul.mubr.f32.gmra.mrb[0].mxu0 %v753
  %v839 = vpop.f32.mrb[0].mxu0
  %v840 = vadd.f32 0.0, %v839
  %v841 = vpop.f32.mrb[0].mxu0
  %842 = vmatprep.mubr.f32.mxu0 0.0
  %843 = vmatmul.mubr.f32.gmra.mrb[0].mxu0 %v756
  %v844 = vpop.f32.mrb[0].mxu0
  %v845 = vadd.f32 0.0, %v844
  %v846 = vpop.f32.mrb[0].mxu0
  %847 = vdwg.mxu0
  %v848 = vld [vmem:[%s11] sm:$0xff]
  %v849 = vld [vmem:[%s11 + $0x8] sm:$0xff]
  %v850 = vld [vmem:[%s12] sm:$0xff]
  %v851 = vld [vmem:[%s12 + $0x8] sm:$0xff]
  %857 = vrot.lane.b32.xlu0 %v825, 1
  %v858 = vpop.permute.xlu0 %857
  %859 = vrot.lane.b32.xlu0 %v830, 1
  %v860 = vpop.permute.xlu0 %859
  %861 = vrot.lane.b32.xlu0 %v835, 1
  %v862 = vpop.permute.xlu0 %861
  %863 = vrot.lane.b32.xlu0 %v840, 1
  %v864 = vpop.permute.xlu0 %863
  %865 = vrot.lane.b32.xlu0 %v845, 1
  %v866 = vpop.permute.xlu0 %865
  %v872 = vsel %vm227, 0.0, %v858
  %v873 = vsel %vm227, 0.0, %v860
  %v874 = vsel %vm227, 0.0, %v862
  %v875 = vsel %vm227, 0.0, %v864
  %v876 = vsel %vm227, 0.0, %v866
  %v877 = vsel %vm631, %v872, 0.0
  %v878 = vsel %vm631, %v873, 0.0
  %v879 = vsel %vm631, %v874, 0.0
  %v880 = vsel %vm631, %v875, 0.0
  %v881 = vsel %vm631, %v876, 0.0
  %882 = vrot.lane.b32.xlu0 %v825, 113
  %v883 = vpop.permute.xlu0 %882
  %884 = vrot.lane.b32.xlu0 %v830, 113
  %v885 = vpop.permute.xlu0 %884
  %886 = vrot.lane.b32.xlu0 %v835, 113
  %v887 = vpop.permute.xlu0 %886
  %888 = vrot.lane.b32.xlu0 %v840, 113
  %v889 = vpop.permute.xlu0 %888
  %890 = vrot.lane.b32.xlu0 %v845, 113
  %v891 = vpop.permute.xlu0 %890
  %v897 = vsel %vm227, 0.0, %v883
  %v898 = vsel %vm227, 0.0, %v885
  %v899 = vsel %vm227, 0.0, %v887
  %v900 = vsel %vm227, 0.0, %v889
  %v901 = vsel %vm227, 0.0, %v891
  %v902 = vsel %vm631, %v897, 0.0
  %v903 = vsel %vm631, %v898, 0.0
  %v904 = vsel %vm631, %v899, 0.0
  %v905 = vsel %vm631, %v900, 0.0
  %v906 = vsel %vm631, %v901, 0.0
  %912 = vrot.lane.b32.xlu0 %v902, 16
  %v913 = vpop.permute.xlu0 %912
  %914 = vrot.lane.b32.xlu0 %v903, 16
  %v915 = vpop.permute.xlu0 %914
  %916 = vrot.lane.b32.xlu0 %v904, 16
  %v917 = vpop.permute.xlu0 %916
  %918 = vrot.lane.b32.xlu0 %v905, 16
  %v919 = vpop.permute.xlu0 %918
  %920 = vrot.lane.b32.xlu0 %v906, 16
  %v921 = vpop.permute.xlu0 %920
  %v927 = vsel %vm70, %v877, %v913
  %v928 = vsel %vm70, %v878, %v915
  %v929 = vsel %vm70, %v879, %v917
  %v930 = vsel %vm70, %v880, %v919
  %v931 = vsel %vm70, %v881, %v921
  %937 = vrot.lane.b32.xlu0 %v877, 127
  %v938 = vpop.permute.xlu0 %937
  %939 = vrot.lane.b32.xlu0 %v878, 127
  %v940 = vpop.permute.xlu0 %939
  %941 = vrot.lane.b32.xlu0 %v879, 127
  %v942 = vpop.permute.xlu0 %941
  %943 = vrot.lane.b32.xlu0 %v880, 127
  %v944 = vpop.permute.xlu0 %943
  %945 = vrot.lane.b32.xlu0 %v881, 127
  %v946 = vpop.permute.xlu0 %945
  %952 = vrot.lane.b32.xlu0 %v902, 15
  %v953 = vpop.permute.xlu0 %952
  %954 = vrot.lane.b32.xlu0 %v903, 15
  %v955 = vpop.permute.xlu0 %954
  %956 = vrot.lane.b32.xlu0 %v904, 15
  %v957 = vpop.permute.xlu0 %956
  %958 = vrot.lane.b32.xlu0 %v905, 15
  %v959 = vpop.permute.xlu0 %958
  %960 = vrot.lane.b32.xlu0 %v906, 15
  %v961 = vpop.permute.xlu0 %960
  %v967 = vsel %vm70, %v938, %v953
  %v968 = vsel %vm70, %v940, %v955
  %v969 = vsel %vm70, %v942, %v957
  %v970 = vsel %vm70, %v944, %v959
  %v971 = vsel %vm70, %v946, %v961
  %972 = vrot.lane.b32.xlu0 %v877, 126
  %v973 = vpop.permute.xlu0 %972
  %974 = vrot.lane.b32.xlu0 %v878, 126
  %v975 = vpop.permute.xlu0 %974
  %976 = vrot.lane.b32.xlu0 %v879, 126
  %v977 = vpop.permute.xlu0 %976
  %978 = vrot.lane.b32.xlu0 %v880, 126
  %v979 = vpop.permute.xlu0 %978
  %980 = vrot.lane.b32.xlu0 %v881, 126
  %v981 = vpop.permute.xlu0 %980
  %987 = vrot.lane.b32.xlu0 %v902, 14
  %v988 = vpop.permute.xlu0 %987
  %989 = vrot.lane.b32.xlu0 %v903, 14
  %v990 = vpop.permute.xlu0 %989
  %991 = vrot.lane.b32.xlu0 %v904, 14
  %v992 = vpop.permute.xlu0 %991
  %993 = vrot.lane.b32.xlu0 %v905, 14
  %v994 = vpop.permute.xlu0 %993
  %995 = vrot.lane.b32.xlu0 %v906, 14
  %v996 = vpop.permute.xlu0 %995
  %v1002 = vsel %vm70, %v973, %v988
  %v1003 = vsel %vm70, %v975, %v990
  %v1004 = vsel %vm70, %v977, %v992
  %v1005 = vsel %vm70, %v979, %v994
  %v1006 = vsel %vm70, %v981, %v996
  %v1012 = vrot.slane %v967, 5
  %v1013 = vrot.slane %v968, 5
  %v1014 = vsel %vm370, %v1012, %v1013
  %v1015 = vrot.slane %v969, 5
  %v1016 = vsel %vm370, %v1013, %v1015
  %v1017 = vrot.slane %v970, 5
  %v1018 = vsel %vm370, %v1015, %v1017
  %v1019 = vrot.slane %v971, 5
  %v1020 = vsel %vm370, %v1017, %v1019
  %v1031 = vrot.slane %v1002, 2
  %v1032 = vrot.slane %v1003, 2
  %v1033 = vsel %vm390, %v1031, %v1032
  %v1034 = vrot.slane %v1004, 2
  %v1035 = vsel %vm390, %v1032, %v1034
  %v1036 = vrot.slane %v1005, 2
  %v1037 = vsel %vm390, %v1034, %v1036
  %v1038 = vrot.slane %v1006, 2
  %v1039 = vsel %vm390, %v1036, %v1038
  %v1046 = vsel %vm370, %v931, %v1012
  %v1047 = vsel %vm390, %v1020, %v1031
  %v1048 = vpack.c.bf16 %v849, %v848
  %v1049 = vpack.c.bf16 %v928, %v927
  %v1050 = vpack.c.bf16 %v930, %v929
  %v1051 = vpack.c.bf16 %v1014, %v1046
  %v1052 = vpack.c.bf16 %v1018, %v1016
  %v1053 = vpack.c.bf16 %v1033, %v1047
  %v1054 = vpack.c.bf16 %v1037, %v1035
  %v1055 = vpack.c.bf16 %v1038, %v1039
  %1057 = vset.pattern.permute.xlu0 0
  %1058 = vperm.xlu0 %1057, %v850
  %v1059 = vpop.permute.xlu0 %1058
  %1062 = vset.pattern.permute.xlu0 0
  %1063 = vperm.xlu0 %1062, %v851
  %v1064 = vpop.permute.xlu0 %1063
  %v1067 = vsel %vm426, %v1048, 0
  %v1070 = vand.u32 %v1055, %v433
  %1072 = vmatprep.subr.bf16.mxu0 0
  %1073 = vmatpush1.bf16.msra.mxu0 %v1049
  %1074 = vmatprep.subr.bf16.mxu0 0
  %1075 = vmatpush1.bf16.msra.mxu0 %v1050
  %1076 = vmatprep.subr.bf16.mxu0 0
  %1077 = vmatpush1.bf16.msra.mxu0 %v1051
  %1078 = vmatprep.subr.bf16.mxu0 0
  %1079 = vmatpush1.bf16.msra.mxu0 %v1052
  %1080 = vmatprep.subr.bf16.mxu0 0
  %1081 = vmatpush1.bf16.msra.mxu0 %v1053
  %1082 = vmatprep.subr.bf16.mxu0 0
  %1083 = vmatpush1.bf16.msra.mxu0 %v1054
  %1084 = vmatprep.subr.bf16.mxu0 0
  %1085 = vmatpush1.bf16.msra.mxu0 %v1070
  %1086 = vmatprep.subr.bf16.mxu0 0
  %1087 = vmatpush1.bf16.msra.mxu0 0
  %1088 = vmatprep.subr.bf16.mxu0 0
  %1089 = vmatpush1.bf16.msra.mxu0 0
  %1090 = vmatprep.subr.bf16.mxu0 0
  %1091 = vmatpush1.bf16.msra.mxu0 0
  %1092 = vmatprep.subr.bf16.mxu0 0
  %1093 = vmatpush1.bf16.msra.mxu0 0
  %1094 = vmatprep.subr.bf16.mxu0 0
  %1095 = vmatpush1.bf16.msra.mxu0 0
  %1096 = vmatprep.subr.bf16.mxu0 0
  %1097 = vmatpush1.bf16.msra.mxu0 0
  %1098 = vmatprep.subr.bf16.mxu0 0
  %1099 = vmatpush1.bf16.msra.mxu0 0
  %1100 = vmatprep.subr.bf16.mxu0 0
  %1101 = vmatpush1.bf16.msra.mxu0 0
  %1102 = vmatprep.subr.bf16.mxu0 0
  %1103 = vmatpush1.bf16.msra.mxu0 0
  %1104 = vmatprep.mubr.bf16.mxu0 0
  %1105 = vmatmul.mubr.bf16.gmra.mrb[0].mxu0 %v1067
  %v1106 = vpop.f32.mrb[0].mxu0
  %v1107 = vadd.f32 %v1059, %v1106
  %v1108 = vpop.f32.mrb[0].mxu0
  %v1109 = vpop.f32.mrb[0].mxu0
  %v1110 = vadd.f32 %v1064, %v1109
  %v1111 = vpop.f32.mrb[0].mxu0
  %1112 = vdwg.mxu0
  %v1113 = vadd.f32 %v737, %v1107
  %v1114 = vadd.f32 %v740, %v1110
  %vm1115 = vcmask 261120
  %1116 = vst.msk [vmem:[%s13] sm:$0xff] %vm1115, %v1113
  %1117 = vst.msk [vmem:[%s13 + $0x8] sm:$0xff] %vm1115, %v1114
  // Predicated region
  $region54: #{res_generator1_forward.12} parent=0 // pred_check
    _
  $region55: #{res_generator1_forward.12} parent=0 // pred_check_branch
    %1119 = sbr.rel (0) target = $region57
  $region56: #{res_generator1_forward.12} parent=0 // pred_region
    _
  $region57: #{res_generator1_forward.12} parent=0 // pred_fallthru
    _
  // Predicated region
  $region58: #{res_generator1_forward.12} parent=0 // pred_check
    _
  $region59: #{res_generator1_forward.12} parent=0 // pred_check_branch
    %1121 = sbr.rel (0) target = $region61
  $region60: #{res_generator1_forward.12} parent=0 // pred_region
    _
  $region61: #{res_generator1_forward.12} parent=0 // pred_fallthru
    _

</llo_original>
